<compile_context>
chip_gen: v6e
topology: v6e:2x2x1
jax: 0.10.0
libtpu: 0.0.40
codegen_flags: <defaults>
</compile_context>

<pallas_src>
import functools
import math

import jax
import jax.numpy as jnp
from jax.experimental import pallas as pl
from jax.experimental.pallas import tpu as pltpu


def _round_up(x, m):
    return ((x + m - 1) // m) * m


def _ae_kernel(layer_plan, n_bins, x_ref, *rest):
    """Whole autoencoder forward for one batch tile.

    x_ref : (tile_b, Dp) bf16 activations (feature dim padded to 128).
    rest  : n_bins stacked weight refs (cnt_g, Kp_g, Np_g) bf16,
            then b_ref (L, 1, Dp) f32, then o_ref (tile_b, Dp) f32.
    layer_plan[i] = (bin_idx, slot_in_bin, padded_fan_out_i)  -- static.
    """
    w_refs = rest[:n_bins]
    b_ref = rest[n_bins]
    o_ref = rest[n_bins + 1]
    n_layers = len(layer_plan)
    enc_layers = n_layers // 2

    h = x_ref[...]                                    # bf16 (tile_b, Kp_0)
    for i, (g, slot, np_i) in enumerate(layer_plan):  # static unroll
        w = w_refs[g][slot]                           # (Kp_i, Np_i) bf16, live block only
        b = b_ref[i, :, :np_i]                        # (1, Np_i) f32
        acc = jnp.dot(h, w, preferred_element_type=jnp.float32) + b
        if i == n_layers - 1:
            o_ref[...] = jax.nn.sigmoid(acc).astype(o_ref.dtype)   # final decoder layer
        elif i == enc_layers - 1:
            h = acc.astype(jnp.bfloat16)              # bottleneck: no activation
        else:
            h = jnp.maximum(acc, 0.0).astype(jnp.bfloat16)         # ReLU


def make_ae_params(input_dim, key):
    """nn.Linear-style init: U(+-1/sqrt(fan_in)) for weight and bias."""
    dims = [input_dim // (2 ** i) for i in range(7)]          # D, D/2, ..., D/64
    layer_dims = (list(zip(dims[:-1], dims[1:]))
                  + list(zip(dims[::-1][:-1], dims[::-1][1:])))
    weights, biases = [], []
    for fan_in, fan_out in layer_dims:
        key, kw, kb = jax.random.split(key, 3)
        bound = 1.0 / math.sqrt(fan_in)
        weights.append(jax.random.uniform(kw, (fan_in, fan_out), jnp.float32,
                                          minval=-bound, maxval=bound))
        biases.append(jax.random.uniform(kb, (1, fan_out), jnp.float32,
                                         minval=-bound, maxval=bound))
    return weights, biases


def pack_ae_params(weights, biases, input_dim):
    """Ragged packing: group layers by 128-rounded (fan_in, fan_out) shape.

    Returns (w_bins, b_packed, layer_plan).  Each layer is padded only to the
    next multiple of 128 of its real fan_in / fan_out (zero padding, so the
    forward pass is unchanged).  Weights -> bf16 (MXU inputs), biases -> f32.
    """
    dp = _round_up(input_dim, 128)
    padded_shapes = [(_round_up(w.shape[0], 128), _round_up(w.shape[1], 128))
                     for w in weights]

    bin_order, bin_layers = [], {}
    for i, s in enumerate(padded_shapes):
        if s not in bin_layers:
            bin_layers[s] = []
            bin_order.append(s)
        bin_layers[s].append(i)

    w_bins = []
    layer_plan = [None] * len(weights)
    for g, s in enumerate(bin_order):
        kp, np_ = s
        idxs = bin_layers[s]
        arr = jnp.zeros((len(idxs), kp, np_), jnp.bfloat16)
        for slot, li in enumerate(idxs):
            w = weights[li]
            arr = arr.at[slot, :w.shape[0], :w.shape[1]].set(w.astype(jnp.bfloat16))
            layer_plan[li] = (g, slot, np_)
        w_bins.append(arr)

    b_packed = jnp.zeros((len(weights), 1, dp), jnp.float32)
    for i, b in enumerate(biases):
        b_packed = b_packed.at[i, :, :b.shape[1]].set(b.astype(jnp.float32))

    return w_bins, b_packed, tuple(layer_plan)


def ae_forward(x, w_bins, b_packed, layer_plan, *, tile_b=256):
    """Full autoencoder forward pass in one Pallas kernel with a batch grid."""
    batch, d = x.shape
    n_layers, _, dp = b_packed.shape
    n_bins = len(w_bins)

    # bf16 activations into the kernel; sigmoid output is emitted in f32.
    x = x.astype(jnp.bfloat16)
    if d != dp:
        x = jnp.pad(x, ((0, 0), (0, dp - d)))

    # Fill the MXU M dimension, but keep >= 2 grid steps when the batch
    # allows it so both v7x TensorCores get work under "parallel".
    tile_b = min(tile_b, _round_up(batch, 16))
    if batch >= 32:
        tile_b = min(tile_b, _round_up(batch // 2, 16))
    tile_b = max(16, _round_up(tile_b, 16))           # bf16 sublane packing
    padded_batch = _round_up(batch, tile_b)
    if padded_batch != batch:
        x = jnp.pad(x, ((0, padded_batch - batch), (0, 0)))
    grid = (padded_batch // tile_b,)

    # Real (128-rounded, not D-padded) cost for the scheduler.
    macs_per_row = sum(int(w_bins[g].shape[1]) * int(np_i)
                       for (g, _slot, np_i) in layer_plan)
    param_bytes = (sum(int(w.size) * w.dtype.itemsize for w in w_bins)
                   + int(b_packed.size) * b_packed.dtype.itemsize)
    flops = 2 * padded_batch * macs_per_row
    bytes_accessed = padded_batch * dp * (2 + 4) + param_bytes   # bf16 in + f32 out
    transcendentals = padded_batch * dp                          # final-layer sigmoid

    # Scoped-VMEM budget: double-buffered activation blocks + resident params
    # (sized for the double-buffered fallback) + 25% headroom; capped at the
    # v7x per-TC physical 64 MiB.
    act_block_bytes = tile_b * dp * (2 + 4)
    vmem_need = int((2 * act_block_bytes + 2 * param_bytes) * 1.25)
    vmem_limit = int(min(max(vmem_need, 32 * 1024 * 1024), 64 * 1024 * 1024))

    kernel = functools.partial(_ae_kernel, layer_plan, n_bins)
    out_shape = jax.ShapeDtypeStruct((padded_batch, dp), jnp.float32)

    def build_call(single_buffer_params):
        def const_spec(shape):
            zeros = (0,) * len(shape)
            if single_buffer_params:
                # Block index never changes -> one resident buffer is enough.
                return pl.BlockSpec(shape, lambda i, _z=zeros: _z,
                                    pipeline_mode=pl.Buffered(1))
            return pl.BlockSpec(shape, lambda i, _z=zeros: _z)

        in_specs = [pl.BlockSpec((tile_b, dp), lambda i: (i, 0))]   # x: batch-tiled
        in_specs += [const_spec(w.shape) for w in w_bins]           # resident weights
        in_specs.append(const_spec(b_packed.shape))                 # resident biases

        return pl.pallas_call(
            kernel,
            out_shape=out_shape,
            grid_spec=pltpu.PrefetchScalarGridSpec(
                num_scalar_prefetch=0,
                grid=grid,
                in_specs=in_specs,
                out_specs=pl.BlockSpec((tile_b, dp), lambda i: (i, 0)),
            ),
            compiler_params=pltpu.CompilerParams(
                dimension_semantics=("parallel",),
                vmem_limit_bytes=vmem_limit,
            ),
            cost_estimate=pl.CostEstimate(
                flops=flops,
                transcendentals=transcendentals,
                bytes_accessed=bytes_accessed,
            ),
        )

    try:
        out = build_call(single_buffer_params=True)(x, *w_bins, b_packed)
    except Exception:
        # Fallback if this JAX version rejects single-buffered pipeline_mode.
        out = build_call(single_buffer_params=False)(x, *w_bins, b_packed)

    return out[:batch, :d]


def ae_forward_ref(x, weights, biases):
    """Pure-JAX reference with matching numerics (bf16 matmuls, f32 epilogue)."""
    n_layers = len(weights)
    enc_layers = n_layers // 2
    h = x
    for i, (w, b) in enumerate(zip(weights, biases)):
        h = jnp.dot(h.astype(jnp.bfloat16), w.astype(jnp.bfloat16),
                    preferred_element_type=jnp.float32) + b
        if i == n_layers - 1:
            h = jax.nn.sigmoid(h)
        elif i != enc_layers - 1:
            h = jnp.maximum(h, 0.0)
    return h


if __name__ == "__main__":
    key = jax.random.PRNGKey(0)
    input_dim = 128    # smallest size with a non-degenerate input_dim//64 bottleneck
    batch = 256        # exercises a 2-step batch grid (tile_b clamps to 128)

    key, kx, kp = jax.random.split(key, 3)
    x = jax.random.normal(kx, (batch, input_dim), jnp.float32)
    weights, biases = make_ae_params(input_dim, kp)
    w_bins, b_packed, layer_plan = pack_ae_params(weights, biases, input_dim)

    out = ae_forward(x, w_bins, b_packed, layer_plan, tile_b=256)
    out = jax.block_until_ready(out)

    ref = ae_forward_ref(x, weights, biases)
    assert out.shape == (batch, input_dim)
    # bf16 MXU inputs on both sides; an f32 torch nn.Linear AE would deviate
    # slightly more than this tolerance.
    assert jnp.allclose(out, ref, atol=2e-3, rtol=2e-3), "mismatch vs reference"

    print("KERNEL_OK")
</pallas_src>

<mosaic_0001>
module attributes {stable_mosaic.version = 11 : i64} {
  func.func @_ae_kernel(%arg0: i32, %arg1: memref<128x128xbf16, #tpu.memory_space<vmem>>, %arg2: memref<12x128x128xbf16, #tpu.memory_space<vmem>>, %arg3: memref<12x1x128xf32, #tpu.memory_space<vmem>>, %arg4: memref<128x128xf32, #tpu.memory_space<vmem>>) attributes {dimension_semantics = [#tpu.dimension_semantics<parallel>], iteration_bounds = array<i64: 2>, scalar_prefetch = 0 : i64, scratch_operands = 0 : i64, tpu.core_type = #tpu.core_type<tc>, window_params = [{transform_indices = @transform_0, window_bounds = array<i64: 128, 128>}, {pipeline_mode = #tpu.pipeline_mode<synchronous>, transform_indices = @transform_1, window_bounds = array<i64: 12, 128, 128>}, {pipeline_mode = #tpu.pipeline_mode<synchronous>, transform_indices = @transform_2, window_bounds = array<i64: 12, 1, 128>}, {transform_indices = @transform_3, window_bounds = array<i64: 128, 128>}]} {
    %c0 = arith.constant 0 : index
    %c0_0 = arith.constant 0 : index
    %0 = vector.load %arg1[%c0, %c0_0] : memref<128x128xbf16, #tpu.memory_space<vmem>>, vector<128x128xbf16>
    %c0_1 = arith.constant 0 : index
    %c0_2 = arith.constant 0 : index
    %c0_3 = arith.constant 0 : index
    %1 = vector.load %arg2[%c0_1, %c0_2, %c0_3] : memref<12x128x128xbf16, #tpu.memory_space<vmem>>, vector<1x128x128xbf16>
    %2 = vector.shape_cast %1 : vector<1x128x128xbf16> to vector<128x128xbf16>
    %c0_4 = arith.constant 0 : index
    %c0_5 = arith.constant 0 : index
    %c0_6 = arith.constant 0 : index
    %3 = vector.load %arg3[%c0_4, %c0_5, %c0_6] : memref<12x1x128xf32, #tpu.memory_space<vmem>>, vector<1x1x128xf32>
    %4 = vector.shape_cast %3 : vector<1x1x128xf32> to vector<1x128xf32>
    %cst = arith.constant dense<0.000000e+00> : vector<128x128xf32>
    %5 = tpu.matmul %0, %2, %cst {dimension_numbers = #tpu.dot_dimension_numbers<[1], [0], [0], [1], [0, 0, 1, 1], [], []>} : vector<128x128xbf16>, vector<128x128xbf16>, vector<128x128xf32> -> vector<128x128xf32>
    %6 = vector.broadcast %4 : vector<1x128xf32> to vector<128x128xf32>
    %7 = arith.addf %5, %6 : vector<128x128xf32>
    %cst_7 = arith.constant 0.000000e+00 : f32
    %8 = vector.broadcast %cst_7 : f32 to vector<128x128xf32>
    %9 = arith.maximumf %7, %8 : vector<128x128xf32>
    %10 = arith.truncf %9 : vector<128x128xf32> to vector<128x128xbf16>
    %c1 = arith.constant 1 : index
    %c0_8 = arith.constant 0 : index
    %c0_9 = arith.constant 0 : index
    %11 = vector.load %arg2[%c1, %c0_8, %c0_9] : memref<12x128x128xbf16, #tpu.memory_space<vmem>>, vector<1x128x128xbf16>
    %12 = vector.shape_cast %11 : vector<1x128x128xbf16> to vector<128x128xbf16>
    %c1_10 = arith.constant 1 : index
    %c0_11 = arith.constant 0 : index
    %c0_12 = arith.constant 0 : index
    %13 = vector.load %arg3[%c1_10, %c0_11, %c0_12] : memref<12x1x128xf32, #tpu.memory_space<vmem>>, vector<1x1x128xf32>
    %14 = vector.shape_cast %13 : vector<1x1x128xf32> to vector<1x128xf32>
    %cst_13 = arith.constant dense<0.000000e+00> : vector<128x128xf32>
    %15 = tpu.matmul %10, %12, %cst_13 {dimension_numbers = #tpu.dot_dimension_numbers<[1], [0], [0], [1], [0, 0, 1, 1], [], []>} : vector<128x128xbf16>, vector<128x128xbf16>, vector<128x128xf32> -> vector<128x128xf32>
    %16 = vector.broadcast %14 : vector<1x128xf32> to vector<128x128xf32>
    %17 = arith.addf %15, %16 : vector<128x128xf32>
    %cst_14 = arith.constant 0.000000e+00 : f32
    %18 = vector.broadcast %cst_14 : f32 to vector<128x128xf32>
    %19 = arith.maximumf %17, %18 : vector<128x128xf32>
    %20 = arith.truncf %19 : vector<128x128xf32> to vector<128x128xbf16>
    %c2 = arith.constant 2 : index
    %c0_15 = arith.constant 0 : index
    %c0_16 = arith.constant 0 : index
    %21 = vector.load %arg2[%c2, %c0_15, %c0_16] : memref<12x128x128xbf16, #tpu.memory_space<vmem>>, vector<1x128x128xbf16>
    %22 = vector.shape_cast %21 : vector<1x128x128xbf16> to vector<128x128xbf16>
    %c2_17 = arith.constant 2 : index
    %c0_18 = arith.constant 0 : index
    %c0_19 = arith.constant 0 : index
    %23 = vector.load %arg3[%c2_17, %c0_18, %c0_19] : memref<12x1x128xf32, #tpu.memory_space<vmem>>, vector<1x1x128xf32>
    %24 = vector.shape_cast %23 : vector<1x1x128xf32> to vector<1x128xf32>
    %cst_20 = arith.constant dense<0.000000e+00> : vector<128x128xf32>
    %25 = tpu.matmul %20, %22, %cst_20 {dimension_numbers = #tpu.dot_dimension_numbers<[1], [0], [0], [1], [0, 0, 1, 1], [], []>} : vector<128x128xbf16>, vector<128x128xbf16>, vector<128x128xf32> -> vector<128x128xf32>
    %26 = vector.broadcast %24 : vector<1x128xf32> to vector<128x128xf32>
    %27 = arith.addf %25, %26 : vector<128x128xf32>
    %cst_21 = arith.constant 0.000000e+00 : f32
    %28 = vector.broadcast %cst_21 : f32 to vector<128x128xf32>
    %29 = arith.maximumf %27, %28 : vector<128x128xf32>
    %30 = arith.truncf %29 : vector<128x128xf32> to vector<128x128xbf16>
    %c3 = arith.constant 3 : index
    %c0_22 = arith.constant 0 : index
    %c0_23 = arith.constant 0 : index
    %31 = vector.load %arg2[%c3, %c0_22, %c0_23] : memref<12x128x128xbf16, #tpu.memory_space<vmem>>, vector<1x128x128xbf16>
    %32 = vector.shape_cast %31 : vector<1x128x128xbf16> to vector<128x128xbf16>
    %c3_24 = arith.constant 3 : index
    %c0_25 = arith.constant 0 : index
    %c0_26 = arith.constant 0 : index
    %33 = vector.load %arg3[%c3_24, %c0_25, %c0_26] : memref<12x1x128xf32, #tpu.memory_space<vmem>>, vector<1x1x128xf32>
    %34 = vector.shape_cast %33 : vector<1x1x128xf32> to vector<1x128xf32>
    %cst_27 = arith.constant dense<0.000000e+00> : vector<128x128xf32>
    %35 = tpu.matmul %30, %32, %cst_27 {dimension_numbers = #tpu.dot_dimension_numbers<[1], [0], [0], [1], [0, 0, 1, 1], [], []>} : vector<128x128xbf16>, vector<128x128xbf16>, vector<128x128xf32> -> vector<128x128xf32>
    %36 = vector.broadcast %34 : vector<1x128xf32> to vector<128x128xf32>
    %37 = arith.addf %35, %36 : vector<128x128xf32>
    %cst_28 = arith.constant 0.000000e+00 : f32
    %38 = vector.broadcast %cst_28 : f32 to vector<128x128xf32>
    %39 = arith.maximumf %37, %38 : vector<128x128xf32>
    %40 = arith.truncf %39 : vector<128x128xf32> to vector<128x128xbf16>
    %c4 = arith.constant 4 : index
    %c0_29 = arith.constant 0 : index
    %c0_30 = arith.constant 0 : index
    %41 = vector.load %arg2[%c4, %c0_29, %c0_30] : memref<12x128x128xbf16, #tpu.memory_space<vmem>>, vector<1x128x128xbf16>
    %42 = vector.shape_cast %41 : vector<1x128x128xbf16> to vector<128x128xbf16>
    %c4_31 = arith.constant 4 : index
    %c0_32 = arith.constant 0 : index
    %c0_33 = arith.constant 0 : index
    %43 = vector.load %arg3[%c4_31, %c0_32, %c0_33] : memref<12x1x128xf32, #tpu.memory_space<vmem>>, vector<1x1x128xf32>
    %44 = vector.shape_cast %43 : vector<1x1x128xf32> to vector<1x128xf32>
    %cst_34 = arith.constant dense<0.000000e+00> : vector<128x128xf32>
    %45 = tpu.matmul %40, %42, %cst_34 {dimension_numbers = #tpu.dot_dimension_numbers<[1], [0], [0], [1], [0, 0, 1, 1], [], []>} : vector<128x128xbf16>, vector<128x128xbf16>, vector<128x128xf32> -> vector<128x128xf32>
    %46 = vector.broadcast %44 : vector<1x128xf32> to vector<128x128xf32>
    %47 = arith.addf %45, %46 : vector<128x128xf32>
    %cst_35 = arith.constant 0.000000e+00 : f32
    %48 = vector.broadcast %cst_35 : f32 to vector<128x128xf32>
    %49 = arith.maximumf %47, %48 : vector<128x128xf32>
    %50 = arith.truncf %49 : vector<128x128xf32> to vector<128x128xbf16>
    %c5 = arith.constant 5 : index
    %c0_36 = arith.constant 0 : index
    %c0_37 = arith.constant 0 : index
    %51 = vector.load %arg2[%c5, %c0_36, %c0_37] : memref<12x128x128xbf16, #tpu.memory_space<vmem>>, vector<1x128x128xbf16>
    %52 = vector.shape_cast %51 : vector<1x128x128xbf16> to vector<128x128xbf16>
    %c5_38 = arith.constant 5 : index
    %c0_39 = arith.constant 0 : index
    %c0_40 = arith.constant 0 : index
    %53 = vector.load %arg3[%c5_38, %c0_39, %c0_40] : memref<12x1x128xf32, #tpu.memory_space<vmem>>, vector<1x1x128xf32>
    %54 = vector.shape_cast %53 : vector<1x1x128xf32> to vector<1x128xf32>
    %cst_41 = arith.constant dense<0.000000e+00> : vector<128x128xf32>
    %55 = tpu.matmul %50, %52, %cst_41 {dimension_numbers = #tpu.dot_dimension_numbers<[1], [0], [0], [1], [0, 0, 1, 1], [], []>} : vector<128x128xbf16>, vector<128x128xbf16>, vector<128x128xf32> -> vector<128x128xf32>
    %56 = vector.broadcast %54 : vector<1x128xf32> to vector<128x128xf32>
    %57 = arith.addf %55, %56 : vector<128x128xf32>
    %58 = arith.truncf %57 : vector<128x128xf32> to vector<128x128xbf16>
    %c6 = arith.constant 6 : index
    %c0_42 = arith.constant 0 : index
    %c0_43 = arith.constant 0 : index
    %59 = vector.load %arg2[%c6, %c0_42, %c0_43] : memref<12x128x128xbf16, #tpu.memory_space<vmem>>, vector<1x128x128xbf16>
    %60 = vector.shape_cast %59 : vector<1x128x128xbf16> to vector<128x128xbf16>
    %c6_44 = arith.constant 6 : index
    %c0_45 = arith.constant 0 : index
    %c0_46 = arith.constant 0 : index
    %61 = vector.load %arg3[%c6_44, %c0_45, %c0_46] : memref<12x1x128xf32, #tpu.memory_space<vmem>>, vector<1x1x128xf32>
    %62 = vector.shape_cast %61 : vector<1x1x128xf32> to vector<1x128xf32>
    %cst_47 = arith.constant dense<0.000000e+00> : vector<128x128xf32>
    %63 = tpu.matmul %58, %60, %cst_47 {dimension_numbers = #tpu.dot_dimension_numbers<[1], [0], [0], [1], [0, 0, 1, 1], [], []>} : vector<128x128xbf16>, vector<128x128xbf16>, vector<128x128xf32> -> vector<128x128xf32>
    %64 = vector.broadcast %62 : vector<1x128xf32> to vector<128x128xf32>
    %65 = arith.addf %63, %64 : vector<128x128xf32>
    %cst_48 = arith.constant 0.000000e+00 : f32
    %66 = vector.broadcast %cst_48 : f32 to vector<128x128xf32>
    %67 = arith.maximumf %65, %66 : vector<128x128xf32>
    %68 = arith.truncf %67 : vector<128x128xf32> to vector<128x128xbf16>
    %c7 = arith.constant 7 : index
    %c0_49 = arith.constant 0 : index
    %c0_50 = arith.constant 0 : index
    %69 = vector.load %arg2[%c7, %c0_49, %c0_50] : memref<12x128x128xbf16, #tpu.memory_space<vmem>>, vector<1x128x128xbf16>
    %70 = vector.shape_cast %69 : vector<1x128x128xbf16> to vector<128x128xbf16>
    %c7_51 = arith.constant 7 : index
    %c0_52 = arith.constant 0 : index
    %c0_53 = arith.constant 0 : index
    %71 = vector.load %arg3[%c7_51, %c0_52, %c0_53] : memref<12x1x128xf32, #tpu.memory_space<vmem>>, vector<1x1x128xf32>
    %72 = vector.shape_cast %71 : vector<1x1x128xf32> to vector<1x128xf32>
    %cst_54 = arith.constant dense<0.000000e+00> : vector<128x128xf32>
    %73 = tpu.matmul %68, %70, %cst_54 {dimension_numbers = #tpu.dot_dimension_numbers<[1], [0], [0], [1], [0, 0, 1, 1], [], []>} : vector<128x128xbf16>, vector<128x128xbf16>, vector<128x128xf32> -> vector<128x128xf32>
    %74 = vector.broadcast %72 : vector<1x128xf32> to vector<128x128xf32>
    %75 = arith.addf %73, %74 : vector<128x128xf32>
    %cst_55 = arith.constant 0.000000e+00 : f32
    %76 = vector.broadcast %cst_55 : f32 to vector<128x128xf32>
    %77 = arith.maximumf %75, %76 : vector<128x128xf32>
    %78 = arith.truncf %77 : vector<128x128xf32> to vector<128x128xbf16>
    %c8 = arith.constant 8 : index
    %c0_56 = arith.constant 0 : index
    %c0_57 = arith.constant 0 : index
    %79 = vector.load %arg2[%c8, %c0_56, %c0_57] : memref<12x128x128xbf16, #tpu.memory_space<vmem>>, vector<1x128x128xbf16>
    %80 = vector.shape_cast %79 : vector<1x128x128xbf16> to vector<128x128xbf16>
    %c8_58 = arith.constant 8 : index
    %c0_59 = arith.constant 0 : index
    %c0_60 = arith.constant 0 : index
    %81 = vector.load %arg3[%c8_58, %c0_59, %c0_60] : memref<12x1x128xf32, #tpu.memory_space<vmem>>, vector<1x1x128xf32>
    %82 = vector.shape_cast %81 : vector<1x1x128xf32> to vector<1x128xf32>
    %cst_61 = arith.constant dense<0.000000e+00> : vector<128x128xf32>
    %83 = tpu.matmul %78, %80, %cst_61 {dimension_numbers = #tpu.dot_dimension_numbers<[1], [0], [0], [1], [0, 0, 1, 1], [], []>} : vector<128x128xbf16>, vector<128x128xbf16>, vector<128x128xf32> -> vector<128x128xf32>
    %84 = vector.broadcast %82 : vector<1x128xf32> to vector<128x128xf32>
    %85 = arith.addf %83, %84 : vector<128x128xf32>
    %cst_62 = arith.constant 0.000000e+00 : f32
    %86 = vector.broadcast %cst_62 : f32 to vector<128x128xf32>
    %87 = arith.maximumf %85, %86 : vector<128x128xf32>
    %88 = arith.truncf %87 : vector<128x128xf32> to vector<128x128xbf16>
    %c9 = arith.constant 9 : index
    %c0_63 = arith.constant 0 : index
    %c0_64 = arith.constant 0 : index
    %89 = vector.load %arg2[%c9, %c0_63, %c0_64] : memref<12x128x128xbf16, #tpu.memory_space<vmem>>, vector<1x128x128xbf16>
    %90 = vector.shape_cast %89 : vector<1x128x128xbf16> to vector<128x128xbf16>
    %c9_65 = arith.constant 9 : index
    %c0_66 = arith.constant 0 : index
    %c0_67 = arith.constant 0 : index
    %91 = vector.load %arg3[%c9_65, %c0_66, %c0_67] : memref<12x1x128xf32, #tpu.memory_space<vmem>>, vector<1x1x128xf32>
    %92 = vector.shape_cast %91 : vector<1x1x128xf32> to vector<1x128xf32>
    %cst_68 = arith.constant dense<0.000000e+00> : vector<128x128xf32>
    %93 = tpu.matmul %88, %90, %cst_68 {dimension_numbers = #tpu.dot_dimension_numbers<[1], [0], [0], [1], [0, 0, 1, 1], [], []>} : vector<128x128xbf16>, vector<128x128xbf16>, vector<128x128xf32> -> vector<128x128xf32>
    %94 = vector.broadcast %92 : vector<1x128xf32> to vector<128x128xf32>
    %95 = arith.addf %93, %94 : vector<128x128xf32>
    %cst_69 = arith.constant 0.000000e+00 : f32
    %96 = vector.broadcast %cst_69 : f32 to vector<128x128xf32>
    %97 = arith.maximumf %95, %96 : vector<128x128xf32>
    %98 = arith.truncf %97 : vector<128x128xf32> to vector<128x128xbf16>
    %c10 = arith.constant 10 : index
    %c0_70 = arith.constant 0 : index
    %c0_71 = arith.constant 0 : index
    %99 = vector.load %arg2[%c10, %c0_70, %c0_71] : memref<12x128x128xbf16, #tpu.memory_space<vmem>>, vector<1x128x128xbf16>
    %100 = vector.shape_cast %99 : vector<1x128x128xbf16> to vector<128x128xbf16>
    %c10_72 = arith.constant 10 : index
    %c0_73 = arith.constant 0 : index
    %c0_74 = arith.constant 0 : index
    %101 = vector.load %arg3[%c10_72, %c0_73, %c0_74] : memref<12x1x128xf32, #tpu.memory_space<vmem>>, vector<1x1x128xf32>
    %102 = vector.shape_cast %101 : vector<1x1x128xf32> to vector<1x128xf32>
    %cst_75 = arith.constant dense<0.000000e+00> : vector<128x128xf32>
    %103 = tpu.matmul %98, %100, %cst_75 {dimension_numbers = #tpu.dot_dimension_numbers<[1], [0], [0], [1], [0, 0, 1, 1], [], []>} : vector<128x128xbf16>, vector<128x128xbf16>, vector<128x128xf32> -> vector<128x128xf32>
    %104 = vector.broadcast %102 : vector<1x128xf32> to vector<128x128xf32>
    %105 = arith.addf %103, %104 : vector<128x128xf32>
    %cst_76 = arith.constant 0.000000e+00 : f32
    %106 = vector.broadcast %cst_76 : f32 to vector<128x128xf32>
    %107 = arith.maximumf %105, %106 : vector<128x128xf32>
    %108 = arith.truncf %107 : vector<128x128xf32> to vector<128x128xbf16>
    %c11 = arith.constant 11 : index
    %c0_77 = arith.constant 0 : index
    %c0_78 = arith.constant 0 : index
    %109 = vector.load %arg2[%c11, %c0_77, %c0_78] : memref<12x128x128xbf16, #tpu.memory_space<vmem>>, vector<1x128x128xbf16>
    %110 = vector.shape_cast %109 : vector<1x128x128xbf16> to vector<128x128xbf16>
    %c11_79 = arith.constant 11 : index
    %c0_80 = arith.constant 0 : index
    %c0_81 = arith.constant 0 : index
    %111 = vector.load %arg3[%c11_79, %c0_80, %c0_81] : memref<12x1x128xf32, #tpu.memory_space<vmem>>, vector<1x1x128xf32>
    %112 = vector.shape_cast %111 : vector<1x1x128xf32> to vector<1x128xf32>
    %cst_82 = arith.constant dense<0.000000e+00> : vector<128x128xf32>
    %113 = tpu.matmul %108, %110, %cst_82 {dimension_numbers = #tpu.dot_dimension_numbers<[1], [0], [0], [1], [0, 0, 1, 1], [], []>} : vector<128x128xbf16>, vector<128x128xbf16>, vector<128x128xf32> -> vector<128x128xf32>
    %114 = vector.broadcast %112 : vector<1x128xf32> to vector<128x128xf32>
    %115 = arith.addf %113, %114 : vector<128x128xf32>
    %116 = arith.negf %115 : vector<128x128xf32>
    %117 = math.exp %116 : vector<128x128xf32>
    %cst_83 = arith.constant 1.000000e+00 : f32
    %118 = vector.broadcast %cst_83 : f32 to vector<128x128xf32>
    %119 = arith.addf %118, %117 : vector<128x128xf32>
    %120 = arith.divf %118, %119 : vector<128x128xf32>
    %c0_84 = arith.constant 0 : index
    %c0_85 = arith.constant 0 : index
    %121 = vector.load %arg4[%c0_84, %c0_85] : memref<128x128xf32, #tpu.memory_space<vmem>>, vector<128x128xf32>
    tpu.vector_store %arg4[%c0_84, %c0_85], %120 {strides = array<i32>} : memref<128x128xf32, #tpu.memory_space<vmem>>, vector<128x128xf32>,
    return
  }
  func.func @transform_0(%arg0: i32) -> (i32, i32) {
    %c0_i32 = arith.constant 0 : i32
    %c0_i32_0 = arith.constant 0 : i32
    return %arg0, %c0_i32 : i32, i32
  }
  func.func @transform_1(%arg0: i32) -> (i32, i32, i32) {
    %c0_i32 = arith.constant 0 : i32
    %c0_i32_0 = arith.constant 0 : i32
    %c0_i32_1 = arith.constant 0 : i32
    %c0_i32_2 = arith.constant 0 : i32
    return %c0_i32, %c0_i32_0, %c0_i32_1 : i32, i32, i32
  }
  func.func @transform_2(%arg0: i32) -> (i32, i32, i32) {
    %c0_i32 = arith.constant 0 : i32
    %c0_i32_0 = arith.constant 0 : i32
    %c0_i32_1 = arith.constant 0 : i32
    %c0_i32_2 = arith.constant 0 : i32
    return %c0_i32, %c0_i32_0, %c0_i32_1 : i32, i32, i32
  }
  func.func @transform_3(%arg0: i32) -> (i32, i32) {
    %c0_i32 = arith.constant 0 : i32
    %c0_i32_0 = arith.constant 0 : i32
    return %arg0, %c0_i32 : i32, i32
  }
}

module attributes {stable_mosaic.version = 11 : i64} {
  func.func @_ae_kernel(%arg0: i32, %arg1: memref<128x128xbf16, #tpu.memory_space<vmem>>, %arg2: memref<12x128x128xbf16, #tpu.memory_space<vmem>>, %arg3: memref<12x1x128xf32, #tpu.memory_space<vmem>>, %arg4: memref<128x128xf32, #tpu.memory_space<vmem>>) attributes {dimension_semantics = [#tpu.dimension_semantics<parallel>], iteration_bounds = array<i64: 2>, scalar_prefetch = 0 : i64, scratch_operands = 0 : i64, tpu.core_type = #tpu.core_type<tc>, window_params = [{transform_indices = @transform_0, window_bounds = array<i64: 128, 128>}, {pipeline_mode = #tpu.pipeline_mode<synchronous>, transform_indices = @transform_1, window_bounds = array<i64: 12, 128, 128>}, {pipeline_mode = #tpu.pipeline_mode<synchronous>, transform_indices = @transform_2, window_bounds = array<i64: 12, 1, 128>}, {transform_indices = @transform_3, window_bounds = array<i64: 128, 128>}]} {
    %c0 = arith.constant 0 : index
    %c0_0 = arith.constant 0 : index
    %0 = vector.load %arg1[%c0, %c0_0] : memref<128x128xbf16, #tpu.memory_space<vmem>>, vector<128x128xbf16>
    %c0_1 = arith.constant 0 : index
    %c0_2 = arith.constant 0 : index
    %c0_3 = arith.constant 0 : index
    %1 = vector.load %arg2[%c0_1, %c0_2, %c0_3] : memref<12x128x128xbf16, #tpu.memory_space<vmem>>, vector<1x128x128xbf16>
    %2 = vector.shape_cast %1 : vector<1x128x128xbf16> to vector<128x128xbf16>
    %c0_4 = arith.constant 0 : index
    %c0_5 = arith.constant 0 : index
    %c0_6 = arith.constant 0 : index
    %3 = vector.load %arg3[%c0_4, %c0_5, %c0_6] : memref<12x1x128xf32, #tpu.memory_space<vmem>>, vector<1x1x128xf32>
    %4 = vector.shape_cast %3 : vector<1x1x128xf32> to vector<1x128xf32>
    %cst = arith.constant dense<0.000000e+00> : vector<128x128xf32>
    %5 = tpu.matmul %0, %2, %cst {dimension_numbers = #tpu.dot_dimension_numbers<[1], [0], [0], [1], [0, 0, 1, 1], [], []>} : vector<128x128xbf16>, vector<128x128xbf16>, vector<128x128xf32> -> vector<128x128xf32>
    %6 = vector.broadcast %4 : vector<1x128xf32> to vector<128x128xf32>
    %7 = arith.addf %5, %6 : vector<128x128xf32>
    %cst_7 = arith.constant 0.000000e+00 : f32
    %8 = vector.broadcast %cst_7 : f32 to vector<128x128xf32>
    %9 = arith.maximumf %7, %8 : vector<128x128xf32>
    %10 = arith.truncf %9 : vector<128x128xf32> to vector<128x128xbf16>
    %c1 = arith.constant 1 : index
    %c0_8 = arith.constant 0 : index
    %c0_9 = arith.constant 0 : index
    %11 = vector.load %arg2[%c1, %c0_8, %c0_9] : memref<12x128x128xbf16, #tpu.memory_space<vmem>>, vector<1x128x128xbf16>
    %12 = vector.shape_cast %11 : vector<1x128x128xbf16> to vector<128x128xbf16>
    %c1_10 = arith.constant 1 : index
    %c0_11 = arith.constant 0 : index
    %c0_12 = arith.constant 0 : index
    %13 = vector.load %arg3[%c1_10, %c0_11, %c0_12] : memref<12x1x128xf32, #tpu.memory_space<vmem>>, vector<1x1x128xf32>
    %14 = vector.shape_cast %13 : vector<1x1x128xf32> to vector<1x128xf32>
    %cst_13 = arith.constant dense<0.000000e+00> : vector<128x128xf32>
    %15 = tpu.matmul %10, %12, %cst_13 {dimension_numbers = #tpu.dot_dimension_numbers<[1], [0], [0], [1], [0, 0, 1, 1], [], []>} : vector<128x128xbf16>, vector<128x128xbf16>, vector<128x128xf32> -> vector<128x128xf32>
    %16 = vector.broadcast %14 : vector<1x128xf32> to vector<128x128xf32>
    %17 = arith.addf %15, %16 : vector<128x128xf32>
    %cst_14 = arith.constant 0.000000e+00 : f32
    %18 = vector.broadcast %cst_14 : f32 to vector<128x128xf32>
    %19 = arith.maximumf %17, %18 : vector<128x128xf32>
    %20 = arith.truncf %19 : vector<128x128xf32> to vector<128x128xbf16>
    %c2 = arith.constant 2 : index
    %c0_15 = arith.constant 0 : index
    %c0_16 = arith.constant 0 : index
    %21 = vector.load %arg2[%c2, %c0_15, %c0_16] : memref<12x128x128xbf16, #tpu.memory_space<vmem>>, vector<1x128x128xbf16>
    %22 = vector.shape_cast %21 : vector<1x128x128xbf16> to vector<128x128xbf16>
    %c2_17 = arith.constant 2 : index
    %c0_18 = arith.constant 0 : index
    %c0_19 = arith.constant 0 : index
    %23 = vector.load %arg3[%c2_17, %c0_18, %c0_19] : memref<12x1x128xf32, #tpu.memory_space<vmem>>, vector<1x1x128xf32>
    %24 = vector.shape_cast %23 : vector<1x1x128xf32> to vector<1x128xf32>
    %cst_20 = arith.constant dense<0.000000e+00> : vector<128x128xf32>
    %25 = tpu.matmul %20, %22, %cst_20 {dimension_numbers = #tpu.dot_dimension_numbers<[1], [0], [0], [1], [0, 0, 1, 1], [], []>} : vector<128x128xbf16>, vector<128x128xbf16>, vector<128x128xf32> -> vector<128x128xf32>
    %26 = vector.broadcast %24 : vector<1x128xf32> to vector<128x128xf32>
    %27 = arith.addf %25, %26 : vector<128x128xf32>
    %cst_21 = arith.constant 0.000000e+00 : f32
    %28 = vector.broadcast %cst_21 : f32 to vector<128x128xf32>
    %29 = arith.maximumf %27, %28 : vector<128x128xf32>
    %30 = arith.truncf %29 : vector<128x128xf32> to vector<128x128xbf16>
    %c3 = arith.constant 3 : index
    %c0_22 = arith.constant 0 : index
    %c0_23 = arith.constant 0 : index
    %31 = vector.load %arg2[%c3, %c0_22, %c0_23] : memref<12x128x128xbf16, #tpu.memory_space<vmem>>, vector<1x128x128xbf16>
    %32 = vector.shape_cast %31 : vector<1x128x128xbf16> to vector<128x128xbf16>
    %c3_24 = arith.constant 3 : index
    %c0_25 = arith.constant 0 : index
    %c0_26 = arith.constant 0 : index
    %33 = vector.load %arg3[%c3_24, %c0_25, %c0_26] : memref<12x1x128xf32, #tpu.memory_space<vmem>>, vector<1x1x128xf32>
    %34 = vector.shape_cast %33 : vector<1x1x128xf32> to vector<1x128xf32>
    %cst_27 = arith.constant dense<0.000000e+00> : vector<128x128xf32>
    %35 = tpu.matmul %30, %32, %cst_27 {dimension_numbers = #tpu.dot_dimension_numbers<[1], [0], [0], [1], [0, 0, 1, 1], [], []>} : vector<128x128xbf16>, vector<128x128xbf16>, vector<128x128xf32> -> vector<128x128xf32>
    %36 = vector.broadcast %34 : vector<1x128xf32> to vector<128x128xf32>
    %37 = arith.addf %35, %36 : vector<128x128xf32>
    %cst_28 = arith.constant 0.000000e+00 : f32
    %38 = vector.broadcast %cst_28 : f32 to vector<128x128xf32>
    %39 = arith.maximumf %37, %38 : vector<128x128xf32>
    %40 = arith.truncf %39 : vector<128x128xf32> to vector<128x128xbf16>
    %c4 = arith.constant 4 : index
    %c0_29 = arith.constant 0 : index
    %c0_30 = arith.constant 0 : index
    %41 = vector.load %arg2[%c4, %c0_29, %c0_30] : memref<12x128x128xbf16, #tpu.memory_space<vmem>>, vector<1x128x128xbf16>
    %42 = vector.shape_cast %41 : vector<1x128x128xbf16> to vector<128x128xbf16>
    %c4_31 = arith.constant 4 : index
    %c0_32 = arith.constant 0 : index
    %c0_33 = arith.constant 0 : index
    %43 = vector.load %arg3[%c4_31, %c0_32, %c0_33] : memref<12x1x128xf32, #tpu.memory_space<vmem>>, vector<1x1x128xf32>
    %44 = vector.shape_cast %43 : vector<1x1x128xf32> to vector<1x128xf32>
    %cst_34 = arith.constant dense<0.000000e+00> : vector<128x128xf32>
    %45 = tpu.matmul %40, %42, %cst_34 {dimension_numbers = #tpu.dot_dimension_numbers<[1], [0], [0], [1], [0, 0, 1, 1], [], []>} : vector<128x128xbf16>, vector<128x128xbf16>, vector<128x128xf32> -> vector<128x128xf32>
    %46 = vector.broadcast %44 : vector<1x128xf32> to vector<128x128xf32>
    %47 = arith.addf %45, %46 : vector<128x128xf32>
    %cst_35 = arith.constant 0.000000e+00 : f32
    %48 = vector.broadcast %cst_35 : f32 to vector<128x128xf32>
    %49 = arith.maximumf %47, %48 : vector<128x128xf32>
    %50 = arith.truncf %49 : vector<128x128xf32> to vector<128x128xbf16>
    %c5 = arith.constant 5 : index
    %c0_36 = arith.constant 0 : index
    %c0_37 = arith.constant 0 : index
    %51 = vector.load %arg2[%c5, %c0_36, %c0_37] : memref<12x128x128xbf16, #tpu.memory_space<vmem>>, vector<1x128x128xbf16>
    %52 = vector.shape_cast %51 : vector<1x128x128xbf16> to vector<128x128xbf16>
    %c5_38 = arith.constant 5 : index
    %c0_39 = arith.constant 0 : index
    %c0_40 = arith.constant 0 : index
    %53 = vector.load %arg3[%c5_38, %c0_39, %c0_40] : memref<12x1x128xf32, #tpu.memory_space<vmem>>, vector<1x1x128xf32>
    %54 = vector.shape_cast %53 : vector<1x1x128xf32> to vector<1x128xf32>
    %cst_41 = arith.constant dense<0.000000e+00> : vector<128x128xf32>
    %55 = tpu.matmul %50, %52, %cst_41 {dimension_numbers = #tpu.dot_dimension_numbers<[1], [0], [0], [1], [0, 0, 1, 1], [], []>} : vector<128x128xbf16>, vector<128x128xbf16>, vector<128x128xf32> -> vector<128x128xf32>
    %56 = vector.broadcast %54 : vector<1x128xf32> to vector<128x128xf32>
    %57 = arith.addf %55, %56 : vector<128x128xf32>
    %58 = arith.truncf %57 : vector<128x128xf32> to vector<128x128xbf16>
    %c6 = arith.constant 6 : index
    %c0_42 = arith.constant 0 : index
    %c0_43 = arith.constant 0 : index
    %59 = vector.load %arg2[%c6, %c0_42, %c0_43] : memref<12x128x128xbf16, #tpu.memory_space<vmem>>, vector<1x128x128xbf16>
    %60 = vector.shape_cast %59 : vector<1x128x128xbf16> to vector<128x128xbf16>
    %c6_44 = arith.constant 6 : index
    %c0_45 = arith.constant 0 : index
    %c0_46 = arith.constant 0 : index
    %61 = vector.load %arg3[%c6_44, %c0_45, %c0_46] : memref<12x1x128xf32, #tpu.memory_space<vmem>>, vector<1x1x128xf32>
    %62 = vector.shape_cast %61 : vector<1x1x128xf32> to vector<1x128xf32>
    %cst_47 = arith.constant dense<0.000000e+00> : vector<128x128xf32>
    %63 = tpu.matmul %58, %60, %cst_47 {dimension_numbers = #tpu.dot_dimension_numbers<[1], [0], [0], [1], [0, 0, 1, 1], [], []>} : vector<128x128xbf16>, vector<128x128xbf16>, vector<128x128xf32> -> vector<128x128xf32>
    %64 = vector.broadcast %62 : vector<1x128xf32> to vector<128x128xf32>
    %65 = arith.addf %63, %64 : vector<128x128xf32>
    %cst_48 = arith.constant 0.000000e+00 : f32
    %66 = vector.broadcast %cst_48 : f32 to vector<128x128xf32>
    %67 = arith.maximumf %65, %66 : vector<128x128xf32>
    %68 = arith.truncf %67 : vector<128x128xf32> to vector<128x128xbf16>
    %c7 = arith.constant 7 : index
    %c0_49 = arith.constant 0 : index
    %c0_50 = arith.constant 0 : index
    %69 = vector.load %arg2[%c7, %c0_49, %c0_50] : memref<12x128x128xbf16, #tpu.memory_space<vmem>>, vector<1x128x128xbf16>
    %70 = vector.shape_cast %69 : vector<1x128x128xbf16> to vector<128x128xbf16>
    %c7_51 = arith.constant 7 : index
    %c0_52 = arith.constant 0 : index
    %c0_53 = arith.constant 0 : index
    %71 = vector.load %arg3[%c7_51, %c0_52, %c0_53] : memref<12x1x128xf32, #tpu.memory_space<vmem>>, vector<1x1x128xf32>
    %72 = vector.shape_cast %71 : vector<1x1x128xf32> to vector<1x128xf32>
    %cst_54 = arith.constant dense<0.000000e+00> : vector<128x128xf32>
    %73 = tpu.matmul %68, %70, %cst_54 {dimension_numbers = #tpu.dot_dimension_numbers<[1], [0], [0], [1], [0, 0, 1, 1], [], []>} : vector<128x128xbf16>, vector<128x128xbf16>, vector<128x128xf32> -> vector<128x128xf32>
    %74 = vector.broadcast %72 : vector<1x128xf32> to vector<128x128xf32>
    %75 = arith.addf %73, %74 : vector<128x128xf32>
    %cst_55 = arith.constant 0.000000e+00 : f32
    %76 = vector.broadcast %cst_55 : f32 to vector<128x128xf32>
    %77 = arith.maximumf %75, %76 : vector<128x128xf32>
    %78 = arith.truncf %77 : vector<128x128xf32> to vector<128x128xbf16>
    %c8 = arith.constant 8 : index
    %c0_56 = arith.constant 0 : index
    %c0_57 = arith.constant 0 : index
    %79 = vector.load %arg2[%c8, %c0_56, %c0_57] : memref<12x128x128xbf16, #tpu.memory_space<vmem>>, vector<1x128x128xbf16>
    %80 = vector.shape_cast %79 : vector<1x128x128xbf16> to vector<128x128xbf16>
    %c8_58 = arith.constant 8 : index
    %c0_59 = arith.constant 0 : index
    %c0_60 = arith.constant 0 : index
    %81 = vector.load %arg3[%c8_58, %c0_59, %c0_60] : memref<12x1x128xf32, #tpu.memory_space<vmem>>, vector<1x1x128xf32>
    %82 = vector.shape_cast %81 : vector<1x1x128xf32> to vector<1x128xf32>
    %cst_61 = arith.constant dense<0.000000e+00> : vector<128x128xf32>
    %83 = tpu.matmul %78, %80, %cst_61 {dimension_numbers = #tpu.dot_dimension_numbers<[1], [0], [0], [1], [0, 0, 1, 1], [], []>} : vector<128x128xbf16>, vector<128x128xbf16>, vector<128x128xf32> -> vector<128x128xf32>
    %84 = vector.broadcast %82 : vector<1x128xf32> to vector<128x128xf32>
    %85 = arith.addf %83, %84 : vector<128x128xf32>
    %cst_62 = arith.constant 0.000000e+00 : f32
    %86 = vector.broadcast %cst_62 : f32 to vector<128x128xf32>
    %87 = arith.maximumf %85, %86 : vector<128x128xf32>
    %88 = arith.truncf %87 : vector<128x128xf32> to vector<128x128xbf16>
    %c9 = arith.constant 9 : index
    %c0_63 = arith.constant 0 : index
    %c0_64 = arith.constant 0 : index
    %89 = vector.load %arg2[%c9, %c0_63, %c0_64] : memref<12x128x128xbf16, #tpu.memory_space<vmem>>, vector<1x128x128xbf16>
    %90 = vector.shape_cast %89 : vector<1x128x128xbf16> to vector<128x128xbf16>
    %c9_65 = arith.constant 9 : index
    %c0_66 = arith.constant 0 : index
    %c0_67 = arith.constant 0 : index
    %91 = vector.load %arg3[%c9_65, %c0_66, %c0_67] : memref<12x1x128xf32, #tpu.memory_space<vmem>>, vector<1x1x128xf32>
    %92 = vector.shape_cast %91 : vector<1x1x128xf32> to vector<1x128xf32>
    %cst_68 = arith.constant dense<0.000000e+00> : vector<128x128xf32>
    %93 = tpu.matmul %88, %90, %cst_68 {dimension_numbers = #tpu.dot_dimension_numbers<[1], [0], [0], [1], [0, 0, 1, 1], [], []>} : vector<128x128xbf16>, vector<128x128xbf16>, vector<128x128xf32> -> vector<128x128xf32>
    %94 = vector.broadcast %92 : vector<1x128xf32> to vector<128x128xf32>
    %95 = arith.addf %93, %94 : vector<128x128xf32>
    %cst_69 = arith.constant 0.000000e+00 : f32
    %96 = vector.broadcast %cst_69 : f32 to vector<128x128xf32>
    %97 = arith.maximumf %95, %96 : vector<128x128xf32>
    %98 = arith.truncf %97 : vector<128x128xf32> to vector<128x128xbf16>
    %c10 = arith.constant 10 : index
    %c0_70 = arith.constant 0 : index
    %c0_71 = arith.constant 0 : index
    %99 = vector.load %arg2[%c10, %c0_70, %c0_71] : memref<12x128x128xbf16, #tpu.memory_space<vmem>>, vector<1x128x128xbf16>
    %100 = vector.shape_cast %99 : vector<1x128x128xbf16> to vector<128x128xbf16>
    %c10_72 = arith.constant 10 : index
    %c0_73 = arith.constant 0 : index
    %c0_74 = arith.constant 0 : index
    %101 = vector.load %arg3[%c10_72, %c0_73, %c0_74] : memref<12x1x128xf32, #tpu.memory_space<vmem>>, vector<1x1x128xf32>
    %102 = vector.shape_cast %101 : vector<1x1x128xf32> to vector<1x128xf32>
    %cst_75 = arith.constant dense<0.000000e+00> : vector<128x128xf32>
    %103 = tpu.matmul %98, %100, %cst_75 {dimension_numbers = #tpu.dot_dimension_numbers<[1], [0], [0], [1], [0, 0, 1, 1], [], []>} : vector<128x128xbf16>, vector<128x128xbf16>, vector<128x128xf32> -> vector<128x128xf32>
    %104 = vector.broadcast %102 : vector<1x128xf32> to vector<128x128xf32>
    %105 = arith.addf %103, %104 : vector<128x128xf32>
    %cst_76 = arith.constant 0.000000e+00 : f32
    %106 = vector.broadcast %cst_76 : f32 to vector<128x128xf32>
    %107 = arith.maximumf %105, %106 : vector<128x128xf32>
    %108 = arith.truncf %107 : vector<128x128xf32> to vector<128x128xbf16>
    %c11 = arith.constant 11 : index
    %c0_77 = arith.constant 0 : index
    %c0_78 = arith.constant 0 : index
    %109 = vector.load %arg2[%c11, %c0_77, %c0_78] : memref<12x128x128xbf16, #tpu.memory_space<vmem>>, vector<1x128x128xbf16>
    %110 = vector.shape_cast %109 : vector<1x128x128xbf16> to vector<128x128xbf16>
    %c11_79 = arith.constant 11 : index
    %c0_80 = arith.constant 0 : index
    %c0_81 = arith.constant 0 : index
    %111 = vector.load %arg3[%c11_79, %c0_80, %c0_81] : memref<12x1x128xf32, #tpu.memory_space<vmem>>, vector<1x1x128xf32>
    %112 = vector.shape_cast %111 : vector<1x1x128xf32> to vector<1x128xf32>
    %cst_82 = arith.constant dense<0.000000e+00> : vector<128x128xf32>
    %113 = tpu.matmul %108, %110, %cst_82 {dimension_numbers = #tpu.dot_dimension_numbers<[1], [0], [0], [1], [0, 0, 1, 1], [], []>} : vector<128x128xbf16>, vector<128x128xbf16>, vector<128x128xf32> -> vector<128x128xf32>
    %114 = vector.broadcast %112 : vector<1x128xf32> to vector<128x128xf32>
    %115 = arith.addf %113, %114 : vector<128x128xf32>
    %116 = arith.negf %115 : vector<128x128xf32>
    %117 = math.exp %116 : vector<128x128xf32>
    %cst_83 = arith.constant 1.000000e+00 : f32
    %118 = vector.broadcast %cst_83 : f32 to vector<128x128xf32>
    %119 = arith.addf %118, %117 : vector<128x128xf32>
    %120 = arith.divf %118, %119 : vector<128x128xf32>
    %c0_84 = arith.constant 0 : index
    %c0_85 = arith.constant 0 : index
    %121 = vector.load %arg4[%c0_84, %c0_85] : memref<128x128xf32, #tpu.memory_space<vmem>>, vector<128x128xf32>
    tpu.vector_store %arg4[%c0_84, %c0_85], %120 {strides = array<i32>} : memref<128x128xf32, #tpu.memory_space<vmem>>, vector<128x128xf32>,
    return
  }
  func.func @transform_0(%arg0: i32) -> (i32, i32) {
    %c0_i32 = arith.constant 0 : i32
    %c0_i32_0 = arith.constant 0 : i32
    return %arg0, %c0_i32 : i32, i32
  }
  func.func @transform_1(%arg0: i32) -> (i32, i32, i32) {
    %c0_i32 = arith.constant 0 : i32
    %c0_i32_0 = arith.constant 0 : i32
    %c0_i32_1 = arith.constant 0 : i32
    %c0_i32_2 = arith.constant 0 : i32
    return %c0_i32, %c0_i32_0, %c0_i32_1 : i32, i32, i32
  }
  func.func @transform_2(%arg0: i32) -> (i32, i32, i32) {
    %c0_i32 = arith.constant 0 : i32
    %c0_i32_0 = arith.constant 0 : i32
    %c0_i32_1 = arith.constant 0 : i32
    %c0_i32_2 = arith.constant 0 : i32
    return %c0_i32, %c0_i32_0, %c0_i32_1 : i32, i32, i32
  }
  func.func @transform_3(%arg0: i32) -> (i32, i32) {
    %c0_i32 = arith.constant 0 : i32
    %c0_i32_0 = arith.constant 0 : i32
    return %arg0, %c0_i32 : i32, i32
  }
}

</mosaic_0001>

<llo_original>
// kernel: tpu_custom_call.1
$region0: #{tpu_custom_call.1}
  #allocation0 [shape = 'u32[]', space=smem, size = 0x4, offset = 0x4, fixed_abs, tag = 'smem constant byte address 0x4 - core index']
  #allocation1 [shape = 'u32[144,128]{1,0:T(1,128)}', space=vmem, size = 0x12000, scoped, tag = 'internal scratch']
  %s0 = inlined_call_operand.hbm [shape: bf16[256,128], index: 0, kind: input, shape index: {}]
  %s1 = inlined_call_operand.hbm [shape: bf16[12,128,128], index: 1, kind: input, shape index: {}]
  %s2 = inlined_call_operand.hbm [shape: f32[12,1,128], index: 2, kind: input, shape index: {}]
  %s3 = inlined_call_operand.hbm [shape: f32[256,128], index: 3, kind: output, shape index: {}]
  %s4 = sld [smem:[#allocation0]]
  $region57: #{tpu_custom_call.1} parent=0
    _
  %s6 = ssub.s32 1, %s4
  %s7 = scalar_select 0, %s6, %s4
  $region1: #{tpu_custom_call.1} parent=0
    #allocation2 [shape = 'u8[65536]{0}', space=vmem, size = 0x10000, scoped, tag = 'input window, operand 0']
    #allocation3 [shape = 's32[2]{0}', space=sflag, size = 0x8, scoped, tag = 'scoped memory for tpu_custom_call.1']
    #allocation4 [shape = 's32[2]{0}', space=sflag, size = 0x8, scoped, tag = 'scoped memory for tpu_custom_call.1']
    #allocation5 [shape = 'u8[393216]{0}', space=vmem, size = 0x60000, scoped, tag = 'input window, operand 1, single buffered']
    #allocation6 [shape = 's32[1]{0}', space=sflag, size = 0x4, scoped, tag = 'scoped memory for tpu_custom_call.1']
    #allocation7 [shape = 'u8[6144]{0}', space=vmem, size = 0x1800, scoped, tag = 'input window, operand 2, single buffered']
    #allocation8 [shape = 'u8[131072]{0}', space=vmem, size = 0x20000, scoped, tag = 'output window, operand 0']
    %8 = vsyncpa [#allocation3], 0
    %s9 = scalar_lea.sflag [#allocation3], 1
    %10 = vsyncpa %s9, 0
    %11 = vsyncpa [#allocation6], 0
    %12 = vsyncpa [#allocation4], 0
    %s13 = scalar_lea.sflag [#allocation4], 1
    %14 = vsyncpa %s13, 0
    loop: start=0, step=1, limit=4
    $region2: #{tpu_custom_call.1} parent=1 // loop_pre_header
      _
    $region3: #{tpu_custom_call.1} parent=1 // loop_header
      %s16 = sphi 0, %s20
      %p17 = scmp.ge.s32.totalorder %s16, 4
      %s26 = sphi 0, %s28
      %s29 = sphi 0, %s26
      %s30 = sphi 0, %s29
      %s46 = sphi 0, %s30
      %s50 = sphi 0, %s50
      %s52 = sphi 0, %s50
      %s53 = sphi 0, %s52
      %s67 = sphi 0, %s53
      %s71 = sphi 0, %s71
      %s73 = sphi 0, %s71
      %s74 = sphi 0, %s73
      %s88 = sphi 0, %s74
      %s94 = sphi 0, %s96
      %s97 = sphi 0, %s94
      %s98 = sphi 0, %s97
      %s114 = sphi 0, %s98
    $region4: #{tpu_custom_call.1} parent=1 // loop_header_branch
      %19 = sbr.rel (%p17) target = $region8
    $region5: #{tpu_custom_call.1} parent=1 // loop_body
      %s21 = ssub.s32 %s16, 1
      %s22 = ssub.s32 %s16, 2
      %s23 = sadd.s32 %s16, 1
      %s24 = ssub.s32 %s16, %s23
      %p25 = scmp.eq.s32.totalorder %s24, 0
      %s27 = sadd.s32 %s26, 1
      %s28 = scalar_select %p25, %s26, %s27
      %p31 = pneg %p25
      %p32 = scmp.eq.s32.totalorder %s16, 1
      %p33 = por %p31, %p32
      %p34 = scmp.ne.s32.totalorder %s26, %s29
      %p35 = scmp.eq.s32.totalorder %s16, 0
      %p36 = por %p34, %p35
      %p37 = scmp.ne.s32.totalorder %s26, %s29
      %p38 = scmp.eq.s32.totalorder %s21, 1
      %p39 = por %p37, %p38
      %p40 = scmp.ne.s32.totalorder %s29, %s30
      %p41 = scmp.eq.s32.totalorder %s21, 0
      %p42 = por %p40, %p41
      %p43 = scmp.ne.s32.totalorder %s29, %s30
      %p44 = scmp.eq.s32.totalorder %s22, 1
      %p45 = por %p43, %p44
      %p47 = scmp.ne.s32.totalorder %s30, %s46
      %p48 = scmp.eq.s32.totalorder %s22, 0
      %p49 = por %p47, %p48
      %s51 = sadd.s32 %s50, 1
      %p54 = scmp.eq.s32.totalorder %s16, 1
      %p55 = scmp.ne.s32.totalorder %s50, %s52
      %p56 = scmp.eq.s32.totalorder %s16, 0
      %p57 = por %p55, %p56
      %p58 = scmp.ne.s32.totalorder %s50, %s52
      %p59 = scmp.eq.s32.totalorder %s21, 1
      %p60 = por %p58, %p59
      %p61 = scmp.ne.s32.totalorder %s52, %s53
      %p62 = scmp.eq.s32.totalorder %s21, 0
      %p63 = por %p61, %p62
      %p64 = scmp.ne.s32.totalorder %s52, %s53
      %p65 = scmp.eq.s32.totalorder %s22, 1
      %p66 = por %p64, %p65
      %p68 = scmp.ne.s32.totalorder %s53, %s67
      %p69 = scmp.eq.s32.totalorder %s22, 0
      %p70 = por %p68, %p69
      %s72 = sadd.s32 %s71, 1
      %p75 = scmp.eq.s32.totalorder %s16, 1
      %p76 = scmp.ne.s32.totalorder %s71, %s73
      %p77 = scmp.eq.s32.totalorder %s16, 0
      %p78 = por %p76, %p77
      %p79 = scmp.ne.s32.totalorder %s71, %s73
      %p80 = scmp.eq.s32.totalorder %s21, 1
      %p81 = por %p79, %p80
      %p82 = scmp.ne.s32.totalorder %s73, %s74
      %p83 = scmp.eq.s32.totalorder %s21, 0
      %p84 = por %p82, %p83
      %p85 = scmp.ne.s32.totalorder %s73, %s74
      %p86 = scmp.eq.s32.totalorder %s22, 1
      %p87 = por %p85, %p86
      %p89 = scmp.ne.s32.totalorder %s74, %s88
      %p90 = scmp.eq.s32.totalorder %s22, 0
      %p91 = por %p89, %p90
      %s92 = ssub.s32 %s16, %s23
      %p93 = scmp.eq.s32.totalorder %s92, 0
      %s95 = sadd.s32 %s94, 1
      %s96 = scalar_select %p93, %s94, %s95
      %p99 = pneg %p93
      %p100 = scmp.eq.s32.totalorder %s16, 1
      %p101 = por %p99, %p100
      %p102 = scmp.ne.s32.totalorder %s94, %s97
      %p103 = scmp.eq.s32.totalorder %s16, 0
      %p104 = por %p102, %p103
      %p105 = scmp.ne.s32.totalorder %s94, %s97
      %p106 = scmp.eq.s32.totalorder %s21, 1
      %p107 = por %p105, %p106
      %p108 = scmp.ne.s32.totalorder %s97, %s98
      %p109 = scmp.eq.s32.totalorder %s21, 0
      %p110 = por %p108, %p109
      %p111 = scmp.ne.s32.totalorder %s97, %s98
      %p112 = scmp.eq.s32.totalorder %s22, 1
      %p113 = por %p111, %p112
      %p115 = scmp.ne.s32.totalorder %s98, %s114
      %p116 = scmp.eq.s32.totalorder %s22, 0
      %p117 = por %p115, %p116
      %p118 = scmp.le.s32.totalorder 1, %s16
      %p119 = scmp.lt.s32.totalorder %s16, 3
      %p120 = pnand %p118, %p119
      %p121 = pneg %p120
      // Predicated region
      $region9: #{tpu_custom_call.1} parent=5 // pred_check
        _
      $region10: #{tpu_custom_call.1} parent=5 // pred_check_branch
        %123 = sbr.rel (%p120) target = $region12
      $region11: #{tpu_custom_call.1} parent=5 // pred_region
        %s124 = ssub.s32 %s16, 1
        // Predicated region
        $region13: #{tpu_custom_call.1} parent=11 // pred_check
          %p125 = pneg %p63
        $region14: #{tpu_custom_call.1} parent=11 // pred_check_branch
          %127 = sbr.rel (%p125) target = $region16
        $region15: #{tpu_custom_call.1} parent=11 // pred_region
          %s129 = ssub.s32 12288, 12288
          %130 = vsyncadd [#allocation6], %s129
          %s131 = sshll.u32 [#allocation5], 4
          %s132 = int_to_ptr.vmem [resolvable:$true] %s131
          %137 = dma.hbm_to_vmem [thread:$0]  %s1, 12288, %s132, [#allocation6], 64, 64, 4
        $region16: #{tpu_custom_call.1} parent=11 // pred_fallthru
          _
        // Predicated region
        $region17: #{tpu_custom_call.1} parent=11 // pred_check
          %p138 = pneg %p84
        $region18: #{tpu_custom_call.1} parent=11 // pred_check_branch
          %140 = sbr.rel (%p138) target = $region20
        $region19: #{tpu_custom_call.1} parent=11 // pred_region
          %s142 = ssub.s32 192, 192
          %143 = vsyncadd [#allocation6], %s142
          %s144 = sshll.u32 [#allocation7], 4
          %s145 = int_to_ptr.vmem [resolvable:$true] %s144
          %150 = dma.hbm_to_vmem [thread:$0]  %s2, 192, %s145, [#allocation6], 16, 16, 1
        $region20: #{tpu_custom_call.1} parent=11 // pred_fallthru
          _
      $region12: #{tpu_custom_call.1} parent=5 // pred_fallthru
        _
      %p151 = scmp.lt.s32.totalorder %s16, 2
      // Predicated region
      $region21: #{tpu_custom_call.1} parent=5 // pred_check
        %p152 = pneg %p151
      $region22: #{tpu_custom_call.1} parent=5 // pred_check_branch
        %154 = sbr.rel (%p152) target = $region24
      $region23: #{tpu_custom_call.1} parent=5 // pred_region
        // Predicated region
        $region25: #{tpu_custom_call.1} parent=23 // pred_check
          %p155 = pneg %p36
        $region26: #{tpu_custom_call.1} parent=23 // pred_check_branch
          %157 = sbr.rel (%p155) target = $region28
        $region27: #{tpu_custom_call.1} parent=23 // pred_region
          %s158 = sand.u32 %s26, 1
          %s159 = scalar_lea.sflag [#allocation3], %s158
          %s160 = sand.u32 %s26, 1
          %s161 = smul.addr %s160, 64
          %s162 = scalar_lea.vmem [#allocation2], %s161
          %s163 = smul.u32 16, %s16
          %s165 = ssub.s32 1024, 1024
          %166 = vsyncadd %s159, %s165
          %s167 = smul.addr %s163, 64
          %s168 = scalar_lea.hbm %s0, %s167
          %s169 = sshll.u32 %s162, 4
          %s170 = int_to_ptr.vmem [resolvable:$true] %s169
          %175 = dma.hbm_to_vmem [thread:$0]  %s168, 1024, %s170, %s159, 64, 64, 4
        $region28: #{tpu_custom_call.1} parent=23 // pred_fallthru
          _
      $region24: #{tpu_custom_call.1} parent=5 // pred_fallthru
        _
      %p176 = scmp.le.s32.totalorder 1, %s16
      %p177 = scmp.lt.s32.totalorder %s16, 3
      %p178 = pnand %p176, %p177
      %p179 = pneg %p178
      // Predicated region
      $region29: #{tpu_custom_call.1} parent=5 // pred_check
        _
      $region30: #{tpu_custom_call.1} parent=5 // pred_check_branch
        %181 = sbr.rel (%p178) target = $region32
      $region31: #{tpu_custom_call.1} parent=5 // pred_region
        %s182 = ssub.s32 %s16, 1
        %s183 = sand.u32 %s29, 1
        %s184 = scalar_lea.sflag [#allocation3], %s183
        %s185 = sand.u32 %s29, 1
        %s186 = smul.addr %s185, 64
        %s187 = scalar_lea.vmem [#allocation2], %s186
        // Predicated region
        $region33: #{tpu_custom_call.1} parent=31 // pred_check
          %p188 = pneg %p42
        $region34: #{tpu_custom_call.1} parent=31 // pred_check_branch
          %190 = sbr.rel (%p188) target = $region36
        $region35: #{tpu_custom_call.1} parent=31 // pred_region
          %191 = dma.done %s184, 1024
        $region36: #{tpu_custom_call.1} parent=31 // pred_fallthru
          _
        // Predicated region
        $region37: #{tpu_custom_call.1} parent=31 // pred_check
          %p192 = pneg %p63
        $region38: #{tpu_custom_call.1} parent=31 // pred_check_branch
          %194 = sbr.rel (%p192) target = $region40
        $region39: #{tpu_custom_call.1} parent=31 // pred_region
          %195 = dma.done [#allocation6], 12288
        $region40: #{tpu_custom_call.1} parent=31 // pred_fallthru
          _
        // Predicated region
        $region41: #{tpu_custom_call.1} parent=31 // pred_check
          %p196 = pneg %p84
        $region42: #{tpu_custom_call.1} parent=31 // pred_check_branch
          %198 = sbr.rel (%p196) target = $region44
        $region43: #{tpu_custom_call.1} parent=31 // pred_region
          %199 = dma.done [#allocation6], 192
        $region44: #{tpu_custom_call.1} parent=31 // pred_fallthru
          _
        %s200 = sand.u32 %s29, 1
        %s201 = scalar_lea.sflag [#allocation3], %s200
        %s202 = sand.u32 %s29, 1
        %s203 = smul.addr %s202, 64
        %s204 = scalar_lea.vmem [#allocation2], %s203
        %p205 = pneg %p42
        %p206 = pneg %p39
        %p207 = pneg %p63
        %p208 = pneg %p60
        %p209 = pneg %p84
        %p210 = pneg %p81
        %p211 = pneg %p110
        %p212 = pneg %p107
        %s213 = sand.u32 %s97, 1
        %s214 = scalar_lea.sflag [#allocation4], %s213
        %s215 = sand.u32 %s97, 1
        %s216 = smul.addr %s215, 128
        %s217 = scalar_lea.vmem [#allocation8], %s216
        %s218 = smul.u32 16, %s21
        %s219 = smul.u32 16, %s21
        %v221 = vld [vmem:[%s187] sm:$0xf]
        %v222 = vld [vmem:[%s187 + $0x4] sm:$0xf]
        %v223 = vld [vmem:[%s187 + $0x8] sm:$0xf]
        %v224 = vld [vmem:[%s187 + $0xc] sm:$0xf]
        %v225 = vld [vmem:[%s187 + $0x10] sm:$0xf]
        %v226 = vld [vmem:[%s187 + $0x14] sm:$0xf]
        %v227 = vld [vmem:[%s187 + $0x18] sm:$0xf]
        %v228 = vld [vmem:[%s187 + $0x1c] sm:$0xf]
        %v229 = vld [vmem:[%s187 + $0x20] sm:$0xf]
        %v230 = vld [vmem:[%s187 + $0x24] sm:$0xf]
        %v231 = vld [vmem:[%s187 + $0x28] sm:$0xf]
        %v232 = vld [vmem:[%s187 + $0x2c] sm:$0xf]
        %v233 = vld [vmem:[%s187 + $0x30] sm:$0xf]
        %v234 = vld [vmem:[%s187 + $0x34] sm:$0xf]
        %v235 = vld [vmem:[%s187 + $0x38] sm:$0xf]
        %v236 = vld [vmem:[%s187 + $0x3c] sm:$0xf]
        %v237 = vld [vmem:[#allocation5] sm:$0xf]
        %v238 = vld [vmem:[#allocation5 + $0x4] sm:$0xf]
        %v239 = vld [vmem:[#allocation5 + $0x8] sm:$0xf]
        %v240 = vld [vmem:[#allocation5 + $0xc] sm:$0xf]
        %v241 = vld [vmem:[#allocation5 + $0x10] sm:$0xf]
        %v242 = vld [vmem:[#allocation5 + $0x14] sm:$0xf]
        %v243 = vld [vmem:[#allocation5 + $0x18] sm:$0xf]
        %v244 = vld [vmem:[#allocation5 + $0x1c] sm:$0xf]
        %v245 = vld [vmem:[#allocation5 + $0x20] sm:$0xf]
        %v246 = vld [vmem:[#allocation5 + $0x24] sm:$0xf]
        %v247 = vld [vmem:[#allocation5 + $0x28] sm:$0xf]
        %v248 = vld [vmem:[#allocation5 + $0x2c] sm:$0xf]
        %v249 = vld [vmem:[#allocation5 + $0x30] sm:$0xf]
        %v250 = vld [vmem:[#allocation5 + $0x34] sm:$0xf]
        %v251 = vld [vmem:[#allocation5 + $0x38] sm:$0xf]
        %v252 = vld [vmem:[#allocation5 + $0x3c] sm:$0xf]
        %v253 = vld [vmem:[#allocation7] sm:$0x1]
        %v255 = vlaneseq
        %v256 = vshrl.u32 %v255, 7
        %v257 = vsub.s32 0, %v256
        %v258 = vrot.slane %v253, %v257
        %v276 = vunpack.c.l.b16 %v221
        %v277 = vunpack.c.l.b16 %v222
        %v278 = vunpack.c.l.b16 %v223
        %v279 = vunpack.c.l.b16 %v224
        %v280 = vunpack.c.l.b16 %v225
        %v281 = vunpack.c.l.b16 %v226
        %v282 = vunpack.c.l.b16 %v227
        %v283 = vunpack.c.l.b16 %v228
        %v284 = vunpack.c.l.b16 %v229
        %v285 = vunpack.c.l.b16 %v230
        %v286 = vunpack.c.l.b16 %v231
        %v287 = vunpack.c.l.b16 %v232
        %v288 = vunpack.c.l.b16 %v233
        %v289 = vunpack.c.l.b16 %v234
        %v290 = vunpack.c.l.b16 %v235
        %v291 = vunpack.c.l.b16 %v236
        %v292 = vpack.c.b16 %v277, %v276
        %v293 = vpack.c.b16 %v279, %v278
        %v294 = vpack.c.b16 %v281, %v280
        %v295 = vpack.c.b16 %v283, %v282
        %v296 = vpack.c.b16 %v285, %v284
        %v297 = vpack.c.b16 %v287, %v286
        %v298 = vpack.c.b16 %v289, %v288
        %v299 = vpack.c.b16 %v291, %v290
        %v324 = vunpack.c.l.b16 %v237
        %v325 = vunpack.c.l.b16 %v238
        %v326 = vunpack.c.l.b16 %v239
        %v327 = vunpack.c.l.b16 %v240
        %v328 = vunpack.c.l.b16 %v241
        %v329 = vunpack.c.l.b16 %v242
        %v330 = vunpack.c.l.b16 %v243
        %v331 = vunpack.c.l.b16 %v244
        %v332 = vunpack.c.l.b16 %v245
        %v333 = vunpack.c.l.b16 %v246
        %v334 = vunpack.c.l.b16 %v247
        %v335 = vunpack.c.l.b16 %v248
        %v336 = vunpack.c.l.b16 %v249
        %v337 = vunpack.c.l.b16 %v250
        %v338 = vunpack.c.l.b16 %v251
        %v339 = vunpack.c.l.b16 %v252
        %v340 = vpack.c.b16 %v325, %v324
        %v341 = vpack.c.b16 %v327, %v326
        %v342 = vpack.c.b16 %v329, %v328
        %v343 = vpack.c.b16 %v331, %v330
        %v344 = vpack.c.b16 %v333, %v332
        %v345 = vpack.c.b16 %v335, %v334
        %v346 = vpack.c.b16 %v337, %v336
        %v347 = vpack.c.b16 %v339, %v338
        %356 = vmatprep.subr.bf16.mxu0 0
        %357 = vmatpush1.bf16.msra.mxu0 %v347
        %358 = vmatprep.subr.bf16.mxu0 0
        %359 = vmatpush1.bf16.msra.mxu0 %v346
        %360 = vmatprep.subr.bf16.mxu0 0
        %361 = vmatpush1.bf16.msra.mxu0 %v345
        %362 = vmatprep.subr.bf16.mxu0 0
        %363 = vmatpush1.bf16.msra.mxu0 %v344
        %364 = vmatprep.subr.bf16.mxu0 0
        %365 = vmatpush1.bf16.msra.mxu0 %v343
        %366 = vmatprep.subr.bf16.mxu0 0
        %367 = vmatpush1.bf16.msra.mxu0 %v342
        %368 = vmatprep.subr.bf16.mxu0 0
        %369 = vmatpush1.bf16.msra.mxu0 %v341
        %370 = vmatprep.subr.bf16.mxu0 0
        %371 = vmatpush1.bf16.msra.mxu0 %v340
        %372 = vmatprep.subr.bf16.mxu0 0
        %373 = vmatpush2.bf16.msra.mxu0 0
        %374 = vmatprep.subr.bf16.mxu0 0
        %375 = vmatpush2.bf16.msra.mxu0 0
        %376 = vmatprep.subr.bf16.mxu0 0
        %377 = vmatpush2.bf16.msra.mxu0 0
        %378 = vmatprep.subr.bf16.mxu0 0
        %379 = vmatpush2.bf16.msra.mxu0 0
        %380 = vmatprep.subr.bf16.mxu0 0
        %381 = vmatpush2.bf16.msra.mxu0 0
        %382 = vmatprep.subr.bf16.mxu0 0
        %383 = vmatpush2.bf16.msra.mxu0 0
        %384 = vmatprep.subr.bf16.mxu0 0
        %385 = vmatpush2.bf16.msra.mxu0 0
        %386 = vmatprep.subr.bf16.mxu0 0
        %387 = vmatpush2.bf16.msra.mxu0 0
        %388 = vmatprep.mubr.bf16.mxu0 0
        %389 = vmatmul.mubr.bf16.gmra.mxu0 %v292
        %v390 = vpop.f32.mrf.mxu0
        %v391 = vadd.f32 %v258, %v390
        %v392 = vpop.f32.mrf.mxu0
        %v393 = vpop.f32.mrf.mxu0
        %v394 = vadd.f32 %v258, %v393
        %v395 = vpop.f32.mrf.mxu0
        %396 = vmatprep.mubr.bf16.mxu0 0
        %397 = vmatmul.mubr.bf16.gmra.mxu0 %v293
        %v398 = vpop.f32.mrf.mxu0
        %v399 = vadd.f32 %v258, %v398
        %v400 = vpop.f32.mrf.mxu0
        %v401 = vpop.f32.mrf.mxu0
        %v402 = vadd.f32 %v258, %v401
        %v403 = vpop.f32.mrf.mxu0
        %404 = vmatprep.mubr.bf16.mxu0 0
        %405 = vmatmul.mubr.bf16.gmra.mxu0 %v294
        %v406 = vpop.f32.mrf.mxu0
        %v407 = vadd.f32 %v258, %v406
        %v408 = vpop.f32.mrf.mxu0
        %v409 = vpop.f32.mrf.mxu0
        %v410 = vadd.f32 %v258, %v409
        %v411 = vpop.f32.mrf.mxu0
        %412 = vmatprep.mubr.bf16.mxu0 0
        %413 = vmatmul.mubr.bf16.gmra.mxu0 %v295
        %v414 = vpop.f32.mrf.mxu0
        %v415 = vadd.f32 %v258, %v414
        %v416 = vpop.f32.mrf.mxu0
        %v417 = vpop.f32.mrf.mxu0
        %v418 = vadd.f32 %v258, %v417
        %v419 = vpop.f32.mrf.mxu0
        %420 = vmatprep.mubr.bf16.mxu0 0
        %421 = vmatmul.mubr.bf16.gmra.mxu0 %v296
        %v422 = vpop.f32.mrf.mxu0
        %v423 = vadd.f32 %v258, %v422
        %v424 = vpop.f32.mrf.mxu0
        %v425 = vpop.f32.mrf.mxu0
        %v426 = vadd.f32 %v258, %v425
        %v427 = vpop.f32.mrf.mxu0
        %428 = vmatprep.mubr.bf16.mxu0 0
        %429 = vmatmul.mubr.bf16.gmra.mxu0 %v297
        %v430 = vpop.f32.mrf.mxu0
        %v431 = vadd.f32 %v258, %v430
        %v432 = vpop.f32.mrf.mxu0
        %v433 = vpop.f32.mrf.mxu0
        %v434 = vadd.f32 %v258, %v433
        %v435 = vpop.f32.mrf.mxu0
        %436 = vmatprep.mubr.bf16.mxu0 0
        %437 = vmatmul.mubr.bf16.gmra.mxu0 %v298
        %v438 = vpop.f32.mrf.mxu0
        %v439 = vadd.f32 %v258, %v438
        %v440 = vpop.f32.mrf.mxu0
        %v441 = vpop.f32.mrf.mxu0
        %v442 = vadd.f32 %v258, %v441
        %v443 = vpop.f32.mrf.mxu0
        %444 = vmatprep.mubr.bf16.mxu0 0
        %445 = vmatmul.mubr.bf16.gmra.mxu0 %v299
        %v446 = vpop.f32.mrf.mxu0
        %v447 = vadd.f32 %v258, %v446
        %v448 = vpop.f32.mrf.mxu0
        %v449 = vpop.f32.mrf.mxu0
        %v450 = vadd.f32 %v258, %v449
        %v451 = vpop.f32.mrf.mxu0
        %452 = vdwg.mxu0
        %v453 = vmax.f32 %v391, 0.0
        %v454 = vmax.f32 %v394, 0.0
        %v455 = vmax.f32 %v399, 0.0
        %v456 = vmax.f32 %v402, 0.0
        %v457 = vmax.f32 %v407, 0.0
        %v458 = vmax.f32 %v410, 0.0
        %v459 = vmax.f32 %v415, 0.0
        %v460 = vmax.f32 %v418, 0.0
        %v461 = vmax.f32 %v423, 0.0
        %v462 = vmax.f32 %v426, 0.0
        %v463 = vmax.f32 %v431, 0.0
        %v464 = vmax.f32 %v434, 0.0
        %v465 = vmax.f32 %v439, 0.0
        %v466 = vmax.f32 %v442, 0.0
        %v467 = vmax.f32 %v447, 0.0
        %v468 = vmax.f32 %v450, 0.0
        %v469 = vpack.c.bf16 %v454, %v453
        %v470 = vpack.c.bf16 %v456, %v455
        %v471 = vpack.c.bf16 %v458, %v457
        %v472 = vpack.c.bf16 %v460, %v459
        %v473 = vpack.c.bf16 %v462, %v461
        %v474 = vpack.c.bf16 %v464, %v463
        %v475 = vpack.c.bf16 %v466, %v465
        %v476 = vpack.c.bf16 %v468, %v467
        %s477 = scalar_lea.vmem [#allocation5], 64
        %v478 = vld [vmem:[%s477] sm:$0xf]
        %v479 = vld [vmem:[%s477 + $0x4] sm:$0xf]
        %v480 = vld [vmem:[%s477 + $0x8] sm:$0xf]
        %v481 = vld [vmem:[%s477 + $0xc] sm:$0xf]
        %v482 = vld [vmem:[%s477 + $0x10] sm:$0xf]
        %v483 = vld [vmem:[%s477 + $0x14] sm:$0xf]
        %v484 = vld [vmem:[%s477 + $0x18] sm:$0xf]
        %v485 = vld [vmem:[%s477 + $0x1c] sm:$0xf]
        %v486 = vld [vmem:[%s477 + $0x20] sm:$0xf]
        %v487 = vld [vmem:[%s477 + $0x24] sm:$0xf]
        %v488 = vld [vmem:[%s477 + $0x28] sm:$0xf]
        %v489 = vld [vmem:[%s477 + $0x2c] sm:$0xf]
        %v490 = vld [vmem:[%s477 + $0x30] sm:$0xf]
        %v491 = vld [vmem:[%s477 + $0x34] sm:$0xf]
        %v492 = vld [vmem:[%s477 + $0x38] sm:$0xf]
        %v493 = vld [vmem:[%s477 + $0x3c] sm:$0xf]
        %s494 = scalar_lea.vmem [#allocation7], 1
        %v495 = vld [vmem:[%s494] sm:$0x1]
        %v497 = vlaneseq
        %v498 = vshrl.u32 %v497, 7
        %v499 = vsub.s32 0, %v498
        %v500 = vrot.slane %v495, %v499
        %v518 = vunpack.c.l.b16 %v478
        %v519 = vunpack.c.l.b16 %v479
        %v520 = vunpack.c.l.b16 %v480
        %v521 = vunpack.c.l.b16 %v481
        %v522 = vunpack.c.l.b16 %v482
        %v523 = vunpack.c.l.b16 %v483
        %v524 = vunpack.c.l.b16 %v484
        %v525 = vunpack.c.l.b16 %v485
        %v526 = vunpack.c.l.b16 %v486
        %v527 = vunpack.c.l.b16 %v487
        %v528 = vunpack.c.l.b16 %v488
        %v529 = vunpack.c.l.b16 %v489
        %v530 = vunpack.c.l.b16 %v490
        %v531 = vunpack.c.l.b16 %v491
        %v532 = vunpack.c.l.b16 %v492
        %v533 = vunpack.c.l.b16 %v493
        %v534 = vpack.c.b16 %v519, %v518
        %v535 = vpack.c.b16 %v521, %v520
        %v536 = vpack.c.b16 %v523, %v522
        %v537 = vpack.c.b16 %v525, %v524
        %v538 = vpack.c.b16 %v527, %v526
        %v539 = vpack.c.b16 %v529, %v528
        %v540 = vpack.c.b16 %v531, %v530
        %v541 = vpack.c.b16 %v533, %v532
        %550 = vmatprep.subr.bf16.mxu0 0
        %551 = vmatpush1.bf16.msra.mxu0 %v541
        %552 = vmatprep.subr.bf16.mxu0 0
        %553 = vmatpush1.bf16.msra.mxu0 %v540
        %554 = vmatprep.subr.bf16.mxu0 0
        %555 = vmatpush1.bf16.msra.mxu0 %v539
        %556 = vmatprep.subr.bf16.mxu0 0
        %557 = vmatpush1.bf16.msra.mxu0 %v538
        %558 = vmatprep.subr.bf16.mxu0 0
        %559 = vmatpush1.bf16.msra.mxu0 %v537
        %560 = vmatprep.subr.bf16.mxu0 0
        %561 = vmatpush1.bf16.msra.mxu0 %v536
        %562 = vmatprep.subr.bf16.mxu0 0
        %563 = vmatpush1.bf16.msra.mxu0 %v535
        %564 = vmatprep.subr.bf16.mxu0 0
        %565 = vmatpush1.bf16.msra.mxu0 %v534
        %566 = vmatprep.subr.bf16.mxu0 0
        %567 = vmatpush2.bf16.msra.mxu0 0
        %568 = vmatprep.subr.bf16.mxu0 0
        %569 = vmatpush2.bf16.msra.mxu0 0
        %570 = vmatprep.subr.bf16.mxu0 0
        %571 = vmatpush2.bf16.msra.mxu0 0
        %572 = vmatprep.subr.bf16.mxu0 0
        %573 = vmatpush2.bf16.msra.mxu0 0
        %574 = vmatprep.subr.bf16.mxu0 0
        %575 = vmatpush2.bf16.msra.mxu0 0
        %576 = vmatprep.subr.bf16.mxu0 0
        %577 = vmatpush2.bf16.msra.mxu0 0
        %578 = vmatprep.subr.bf16.mxu0 0
        %579 = vmatpush2.bf16.msra.mxu0 0
        %580 = vmatprep.subr.bf16.mxu0 0
        %581 = vmatpush2.bf16.msra.mxu0 0
        %582 = vmatprep.mubr.bf16.mxu0 0
        %583 = vmatmul.mubr.bf16.gmra.mxu0 %v469
        %v584 = vpop.f32.mrf.mxu0
        %v585 = vadd.f32 %v500, %v584
        %v586 = vpop.f32.mrf.mxu0
        %v587 = vpop.f32.mrf.mxu0
        %v588 = vadd.f32 %v500, %v587
        %v589 = vpop.f32.mrf.mxu0
        %590 = vmatprep.mubr.bf16.mxu0 0
        %591 = vmatmul.mubr.bf16.gmra.mxu0 %v470
        %v592 = vpop.f32.mrf.mxu0
        %v593 = vadd.f32 %v500, %v592
        %v594 = vpop.f32.mrf.mxu0
        %v595 = vpop.f32.mrf.mxu0
        %v596 = vadd.f32 %v500, %v595
        %v597 = vpop.f32.mrf.mxu0
        %598 = vmatprep.mubr.bf16.mxu0 0
        %599 = vmatmul.mubr.bf16.gmra.mxu0 %v471
        %v600 = vpop.f32.mrf.mxu0
        %v601 = vadd.f32 %v500, %v600
        %v602 = vpop.f32.mrf.mxu0
        %v603 = vpop.f32.mrf.mxu0
        %v604 = vadd.f32 %v500, %v603
        %v605 = vpop.f32.mrf.mxu0
        %606 = vmatprep.mubr.bf16.mxu0 0
        %607 = vmatmul.mubr.bf16.gmra.mxu0 %v472
        %v608 = vpop.f32.mrf.mxu0
        %v609 = vadd.f32 %v500, %v608
        %v610 = vpop.f32.mrf.mxu0
        %v611 = vpop.f32.mrf.mxu0
        %v612 = vadd.f32 %v500, %v611
        %v613 = vpop.f32.mrf.mxu0
        %614 = vmatprep.mubr.bf16.mxu0 0
        %615 = vmatmul.mubr.bf16.gmra.mxu0 %v473
        %v616 = vpop.f32.mrf.mxu0
        %v617 = vadd.f32 %v500, %v616
        %v618 = vpop.f32.mrf.mxu0
        %v619 = vpop.f32.mrf.mxu0
        %v620 = vadd.f32 %v500, %v619
        %v621 = vpop.f32.mrf.mxu0
        %622 = vmatprep.mubr.bf16.mxu0 0
        %623 = vmatmul.mubr.bf16.gmra.mxu0 %v474
        %v624 = vpop.f32.mrf.mxu0
        %v625 = vadd.f32 %v500, %v624
        %v626 = vpop.f32.mrf.mxu0
        %v627 = vpop.f32.mrf.mxu0
        %v628 = vadd.f32 %v500, %v627
        %v629 = vpop.f32.mrf.mxu0
        %630 = vmatprep.mubr.bf16.mxu0 0
        %631 = vmatmul.mubr.bf16.gmra.mxu0 %v475
        %v632 = vpop.f32.mrf.mxu0
        %v633 = vadd.f32 %v500, %v632
        %v634 = vpop.f32.mrf.mxu0
        %v635 = vpop.f32.mrf.mxu0
        %v636 = vadd.f32 %v500, %v635
        %v637 = vpop.f32.mrf.mxu0
        %638 = vmatprep.mubr.bf16.mxu0 0
        %639 = vmatmul.mubr.bf16.gmra.mxu0 %v476
        %v640 = vpop.f32.mrf.mxu0
        %v641 = vadd.f32 %v500, %v640
        %v642 = vpop.f32.mrf.mxu0
        %v643 = vpop.f32.mrf.mxu0
        %v644 = vadd.f32 %v500, %v643
        %v645 = vpop.f32.mrf.mxu0
        %646 = vdwg.mxu0
        %v647 = vmax.f32 %v585, 0.0
        %v648 = vmax.f32 %v588, 0.0
        %v649 = vmax.f32 %v593, 0.0
        %v650 = vmax.f32 %v596, 0.0
        %v651 = vmax.f32 %v601, 0.0
        %v652 = vmax.f32 %v604, 0.0
        %v653 = vmax.f32 %v609, 0.0
        %v654 = vmax.f32 %v612, 0.0
        %v655 = vmax.f32 %v617, 0.0
        %v656 = vmax.f32 %v620, 0.0
        %v657 = vmax.f32 %v625, 0.0
        %v658 = vmax.f32 %v628, 0.0
        %v659 = vmax.f32 %v633, 0.0
        %v660 = vmax.f32 %v636, 0.0
        %v661 = vmax.f32 %v641, 0.0
        %v662 = vmax.f32 %v644, 0.0
        %v663 = vpack.c.bf16 %v648, %v647
        %v664 = vpack.c.bf16 %v650, %v649
        %v665 = vpack.c.bf16 %v652, %v651
        %v666 = vpack.c.bf16 %v654, %v653
        %v667 = vpack.c.bf16 %v656, %v655
        %v668 = vpack.c.bf16 %v658, %v657
        %v669 = vpack.c.bf16 %v660, %v659
        %v670 = vpack.c.bf16 %v662, %v661
        %s671 = scalar_lea.vmem [#allocation5], 128
        %v672 = vld [vmem:[%s671] sm:$0xf]
        %v673 = vld [vmem:[%s671 + $0x4] sm:$0xf]
        %v674 = vld [vmem:[%s671 + $0x8] sm:$0xf]
        %v675 = vld [vmem:[%s671 + $0xc] sm:$0xf]
        %v676 = vld [vmem:[%s671 + $0x10] sm:$0xf]
        %v677 = vld [vmem:[%s671 + $0x14] sm:$0xf]
        %v678 = vld [vmem:[%s671 + $0x18] sm:$0xf]
        %v679 = vld [vmem:[%s671 + $0x1c] sm:$0xf]
        %v680 = vld [vmem:[%s671 + $0x20] sm:$0xf]
        %v681 = vld [vmem:[%s671 + $0x24] sm:$0xf]
        %v682 = vld [vmem:[%s671 + $0x28] sm:$0xf]
        %v683 = vld [vmem:[%s671 + $0x2c] sm:$0xf]
        %v684 = vld [vmem:[%s671 + $0x30] sm:$0xf]
        %v685 = vld [vmem:[%s671 + $0x34] sm:$0xf]
        %v686 = vld [vmem:[%s671 + $0x38] sm:$0xf]
        %v687 = vld [vmem:[%s671 + $0x3c] sm:$0xf]
        %s688 = scalar_lea.vmem [#allocation7], 2
        %v689 = vld [vmem:[%s688] sm:$0x1]
        %v691 = vlaneseq
        %v692 = vshrl.u32 %v691, 7
        %v693 = vsub.s32 0, %v692
        %v694 = vrot.slane %v689, %v693
        %v712 = vunpack.c.l.b16 %v672
        %v713 = vunpack.c.l.b16 %v673
        %v714 = vunpack.c.l.b16 %v674
        %v715 = vunpack.c.l.b16 %v675
        %v716 = vunpack.c.l.b16 %v676
        %v717 = vunpack.c.l.b16 %v677
        %v718 = vunpack.c.l.b16 %v678
        %v719 = vunpack.c.l.b16 %v679
        %v720 = vunpack.c.l.b16 %v680
        %v721 = vunpack.c.l.b16 %v681
        %v722 = vunpack.c.l.b16 %v682
        %v723 = vunpack.c.l.b16 %v683
        %v724 = vunpack.c.l.b16 %v684
        %v725 = vunpack.c.l.b16 %v685
        %v726 = vunpack.c.l.b16 %v686
        %v727 = vunpack.c.l.b16 %v687
        %v728 = vpack.c.b16 %v713, %v712
        %v729 = vpack.c.b16 %v715, %v714
        %v730 = vpack.c.b16 %v717, %v716
        %v731 = vpack.c.b16 %v719, %v718
        %v732 = vpack.c.b16 %v721, %v720
        %v733 = vpack.c.b16 %v723, %v722
        %v734 = vpack.c.b16 %v725, %v724
        %v735 = vpack.c.b16 %v727, %v726
        %744 = vmatprep.subr.bf16.mxu0 0
        %745 = vmatpush1.bf16.msra.mxu0 %v735
        %746 = vmatprep.subr.bf16.mxu0 0
        %747 = vmatpush1.bf16.msra.mxu0 %v734
        %748 = vmatprep.subr.bf16.mxu0 0
        %749 = vmatpush1.bf16.msra.mxu0 %v733
        %750 = vmatprep.subr.bf16.mxu0 0
        %751 = vmatpush1.bf16.msra.mxu0 %v732
        %752 = vmatprep.subr.bf16.mxu0 0
        %753 = vmatpush1.bf16.msra.mxu0 %v731
        %754 = vmatprep.subr.bf16.mxu0 0
        %755 = vmatpush1.bf16.msra.mxu0 %v730
        %756 = vmatprep.subr.bf16.mxu0 0
        %757 = vmatpush1.bf16.msra.mxu0 %v729
        %758 = vmatprep.subr.bf16.mxu0 0
        %759 = vmatpush1.bf16.msra.mxu0 %v728
        %760 = vmatprep.subr.bf16.mxu0 0
        %761 = vmatpush2.bf16.msra.mxu0 0
        %762 = vmatprep.subr.bf16.mxu0 0
        %763 = vmatpush2.bf16.msra.mxu0 0
        %764 = vmatprep.subr.bf16.mxu0 0
        %765 = vmatpush2.bf16.msra.mxu0 0
        %766 = vmatprep.subr.bf16.mxu0 0
        %767 = vmatpush2.bf16.msra.mxu0 0
        %768 = vmatprep.subr.bf16.mxu0 0
        %769 = vmatpush2.bf16.msra.mxu0 0
        %770 = vmatprep.subr.bf16.mxu0 0
        %771 = vmatpush2.bf16.msra.mxu0 0
        %772 = vmatprep.subr.bf16.mxu0 0
        %773 = vmatpush2.bf16.msra.mxu0 0
        %774 = vmatprep.subr.bf16.mxu0 0
        %775 = vmatpush2.bf16.msra.mxu0 0
        %776 = vmatprep.mubr.bf16.mxu0 0
        %777 = vmatmul.mubr.bf16.gmra.mxu0 %v663
        %v778 = vpop.f32.mrf.mxu0
        %v779 = vadd.f32 %v694, %v778
        %v780 = vpop.f32.mrf.mxu0
        %v781 = vpop.f32.mrf.mxu0
        %v782 = vadd.f32 %v694, %v781
        %v783 = vpop.f32.mrf.mxu0
        %784 = vmatprep.mubr.bf16.mxu0 0
        %785 = vmatmul.mubr.bf16.gmra.mxu0 %v664
        %v786 = vpop.f32.mrf.mxu0
        %v787 = vadd.f32 %v694, %v786
        %v788 = vpop.f32.mrf.mxu0
        %v789 = vpop.f32.mrf.mxu0
        %v790 = vadd.f32 %v694, %v789
        %v791 = vpop.f32.mrf.mxu0
        %792 = vmatprep.mubr.bf16.mxu0 0
        %793 = vmatmul.mubr.bf16.gmra.mxu0 %v665
        %v794 = vpop.f32.mrf.mxu0
        %v795 = vadd.f32 %v694, %v794
        %v796 = vpop.f32.mrf.mxu0
        %v797 = vpop.f32.mrf.mxu0
        %v798 = vadd.f32 %v694, %v797
        %v799 = vpop.f32.mrf.mxu0
        %800 = vmatprep.mubr.bf16.mxu0 0
        %801 = vmatmul.mubr.bf16.gmra.mxu0 %v666
        %v802 = vpop.f32.mrf.mxu0
        %v803 = vadd.f32 %v694, %v802
        %v804 = vpop.f32.mrf.mxu0
        %v805 = vpop.f32.mrf.mxu0
        %v806 = vadd.f32 %v694, %v805
        %v807 = vpop.f32.mrf.mxu0
        %808 = vmatprep.mubr.bf16.mxu0 0
        %809 = vmatmul.mubr.bf16.gmra.mxu0 %v667
        %v810 = vpop.f32.mrf.mxu0
        %v811 = vadd.f32 %v694, %v810
        %v812 = vpop.f32.mrf.mxu0
        %v813 = vpop.f32.mrf.mxu0
        %v814 = vadd.f32 %v694, %v813
        %v815 = vpop.f32.mrf.mxu0
        %816 = vmatprep.mubr.bf16.mxu0 0
        %817 = vmatmul.mubr.bf16.gmra.mxu0 %v668
        %v818 = vpop.f32.mrf.mxu0
        %v819 = vadd.f32 %v694, %v818
        %v820 = vpop.f32.mrf.mxu0
        %v821 = vpop.f32.mrf.mxu0
        %v822 = vadd.f32 %v694, %v821
        %v823 = vpop.f32.mrf.mxu0
        %824 = vmatprep.mubr.bf16.mxu0 0
        %825 = vmatmul.mubr.bf16.gmra.mxu0 %v669
        %v826 = vpop.f32.mrf.mxu0
        %v827 = vadd.f32 %v694, %v826
        %v828 = vpop.f32.mrf.mxu0
        %v829 = vpop.f32.mrf.mxu0
        %v830 = vadd.f32 %v694, %v829
        %v831 = vpop.f32.mrf.mxu0
        %832 = vmatprep.mubr.bf16.mxu0 0
        %833 = vmatmul.mubr.bf16.gmra.mxu0 %v670
        %v834 = vpop.f32.mrf.mxu0
        %v835 = vadd.f32 %v694, %v834
        %v836 = vpop.f32.mrf.mxu0
        %v837 = vpop.f32.mrf.mxu0
        %v838 = vadd.f32 %v694, %v837
        %v839 = vpop.f32.mrf.mxu0
        %840 = vdwg.mxu0
        %v841 = vmax.f32 %v779, 0.0
        %v842 = vmax.f32 %v782, 0.0
        %v843 = vmax.f32 %v787, 0.0
        %v844 = vmax.f32 %v790, 0.0
        %v845 = vmax.f32 %v795, 0.0
        %v846 = vmax.f32 %v798, 0.0
        %v847 = vmax.f32 %v803, 0.0
        %v848 = vmax.f32 %v806, 0.0
        %v849 = vmax.f32 %v811, 0.0
        %v850 = vmax.f32 %v814, 0.0
        %v851 = vmax.f32 %v819, 0.0
        %v852 = vmax.f32 %v822, 0.0
        %v853 = vmax.f32 %v827, 0.0
        %v854 = vmax.f32 %v830, 0.0
        %v855 = vmax.f32 %v835, 0.0
        %v856 = vmax.f32 %v838, 0.0
        %v857 = vpack.c.bf16 %v842, %v841
        %v858 = vpack.c.bf16 %v844, %v843
        %v859 = vpack.c.bf16 %v846, %v845
        %v860 = vpack.c.bf16 %v848, %v847
        %v861 = vpack.c.bf16 %v850, %v849
        %v862 = vpack.c.bf16 %v852, %v851
        %v863 = vpack.c.bf16 %v854, %v853
        %v864 = vpack.c.bf16 %v856, %v855
        %s865 = scalar_lea.vmem [#allocation5], 192
        %v866 = vld [vmem:[%s865] sm:$0xf]
        %v867 = vld [vmem:[%s865 + $0x4] sm:$0xf]
        %v868 = vld [vmem:[%s865 + $0x8] sm:$0xf]
        %v869 = vld [vmem:[%s865 + $0xc] sm:$0xf]
        %v870 = vld [vmem:[%s865 + $0x10] sm:$0xf]
        %v871 = vld [vmem:[%s865 + $0x14] sm:$0xf]
        %v872 = vld [vmem:[%s865 + $0x18] sm:$0xf]
        %v873 = vld [vmem:[%s865 + $0x1c] sm:$0xf]
        %v874 = vld [vmem:[%s865 + $0x20] sm:$0xf]
        %v875 = vld [vmem:[%s865 + $0x24] sm:$0xf]
        %v876 = vld [vmem:[%s865 + $0x28] sm:$0xf]
        %v877 = vld [vmem:[%s865 + $0x2c] sm:$0xf]
        %v878 = vld [vmem:[%s865 + $0x30] sm:$0xf]
        %v879 = vld [vmem:[%s865 + $0x34] sm:$0xf]
        %v880 = vld [vmem:[%s865 + $0x38] sm:$0xf]
        %v881 = vld [vmem:[%s865 + $0x3c] sm:$0xf]
        %s882 = scalar_lea.vmem [#allocation7], 3
        %v883 = vld [vmem:[%s882] sm:$0x1]
        %v885 = vlaneseq
        %v886 = vshrl.u32 %v885, 7
        %v887 = vsub.s32 0, %v886
        %v888 = vrot.slane %v883, %v887
        %v906 = vunpack.c.l.b16 %v866
        %v907 = vunpack.c.l.b16 %v867
        %v908 = vunpack.c.l.b16 %v868
        %v909 = vunpack.c.l.b16 %v869
        %v910 = vunpack.c.l.b16 %v870
        %v911 = vunpack.c.l.b16 %v871
        %v912 = vunpack.c.l.b16 %v872
        %v913 = vunpack.c.l.b16 %v873
        %v914 = vunpack.c.l.b16 %v874
        %v915 = vunpack.c.l.b16 %v875
        %v916 = vunpack.c.l.b16 %v876
        %v917 = vunpack.c.l.b16 %v877
        %v918 = vunpack.c.l.b16 %v878
        %v919 = vunpack.c.l.b16 %v879
        %v920 = vunpack.c.l.b16 %v880
        %v921 = vunpack.c.l.b16 %v881
        %v922 = vpack.c.b16 %v907, %v906
        %v923 = vpack.c.b16 %v909, %v908
        %v924 = vpack.c.b16 %v911, %v910
        %v925 = vpack.c.b16 %v913, %v912
        %v926 = vpack.c.b16 %v915, %v914
        %v927 = vpack.c.b16 %v917, %v916
        %v928 = vpack.c.b16 %v919, %v918
        %v929 = vpack.c.b16 %v921, %v920
        %938 = vmatprep.subr.bf16.mxu0 0
        %939 = vmatpush1.bf16.msra.mxu0 %v929
        %940 = vmatprep.subr.bf16.mxu0 0
        %941 = vmatpush1.bf16.msra.mxu0 %v928
        %942 = vmatprep.subr.bf16.mxu0 0
        %943 = vmatpush1.bf16.msra.mxu0 %v927
        %944 = vmatprep.subr.bf16.mxu0 0
        %945 = vmatpush1.bf16.msra.mxu0 %v926
        %946 = vmatprep.subr.bf16.mxu0 0
        %947 = vmatpush1.bf16.msra.mxu0 %v925
        %948 = vmatprep.subr.bf16.mxu0 0
        %949 = vmatpush1.bf16.msra.mxu0 %v924
        %950 = vmatprep.subr.bf16.mxu0 0
        %951 = vmatpush1.bf16.msra.mxu0 %v923
        %952 = vmatprep.subr.bf16.mxu0 0
        %953 = vmatpush1.bf16.msra.mxu0 %v922
        %954 = vmatprep.subr.bf16.mxu0 0
        %955 = vmatpush2.bf16.msra.mxu0 0
        %956 = vmatprep.subr.bf16.mxu0 0
        %957 = vmatpush2.bf16.msra.mxu0 0
        %958 = vmatprep.subr.bf16.mxu0 0
        %959 = vmatpush2.bf16.msra.mxu0 0
        %960 = vmatprep.subr.bf16.mxu0 0
        %961 = vmatpush2.bf16.msra.mxu0 0
        %962 = vmatprep.subr.bf16.mxu0 0
        %963 = vmatpush2.bf16.msra.mxu0 0
        %964 = vmatprep.subr.bf16.mxu0 0
        %965 = vmatpush2.bf16.msra.mxu0 0
        %966 = vmatprep.subr.bf16.mxu0 0
        %967 = vmatpush2.bf16.msra.mxu0 0
        %968 = vmatprep.subr.bf16.mxu0 0
        %969 = vmatpush2.bf16.msra.mxu0 0
        %970 = vmatprep.mubr.bf16.mxu0 0
        %971 = vmatmul.mubr.bf16.gmra.mxu0 %v857
        %v972 = vpop.f32.mrf.mxu0
        %v973 = vadd.f32 %v888, %v972
        %v974 = vpop.f32.mrf.mxu0
        %v975 = vpop.f32.mrf.mxu0
        %v976 = vadd.f32 %v888, %v975
        %v977 = vpop.f32.mrf.mxu0
        %978 = vmatprep.mubr.bf16.mxu0 0
        %979 = vmatmul.mubr.bf16.gmra.mxu0 %v858
        %v980 = vpop.f32.mrf.mxu0
        %v981 = vadd.f32 %v888, %v980
        %v982 = vpop.f32.mrf.mxu0
        %v983 = vpop.f32.mrf.mxu0
        %v984 = vadd.f32 %v888, %v983
        %v985 = vpop.f32.mrf.mxu0
        %986 = vmatprep.mubr.bf16.mxu0 0
        %987 = vmatmul.mubr.bf16.gmra.mxu0 %v859
        %v988 = vpop.f32.mrf.mxu0
        %v989 = vadd.f32 %v888, %v988
        %v990 = vpop.f32.mrf.mxu0
        %v991 = vpop.f32.mrf.mxu0
        %v992 = vadd.f32 %v888, %v991
        %v993 = vpop.f32.mrf.mxu0
        %994 = vmatprep.mubr.bf16.mxu0 0
        %995 = vmatmul.mubr.bf16.gmra.mxu0 %v860
        %v996 = vpop.f32.mrf.mxu0
        %v997 = vadd.f32 %v888, %v996
        %v998 = vpop.f32.mrf.mxu0
        %v999 = vpop.f32.mrf.mxu0
        %v1000 = vadd.f32 %v888, %v999
        %v1001 = vpop.f32.mrf.mxu0
        %1002 = vmatprep.mubr.bf16.mxu0 0
        %1003 = vmatmul.mubr.bf16.gmra.mxu0 %v861
        %v1004 = vpop.f32.mrf.mxu0
        %v1005 = vadd.f32 %v888, %v1004
        %v1006 = vpop.f32.mrf.mxu0
        %v1007 = vpop.f32.mrf.mxu0
        %v1008 = vadd.f32 %v888, %v1007
        %v1009 = vpop.f32.mrf.mxu0
        %1010 = vmatprep.mubr.bf16.mxu0 0
        %1011 = vmatmul.mubr.bf16.gmra.mxu0 %v862
        %v1012 = vpop.f32.mrf.mxu0
        %v1013 = vadd.f32 %v888, %v1012
        %v1014 = vpop.f32.mrf.mxu0
        %v1015 = vpop.f32.mrf.mxu0
        %v1016 = vadd.f32 %v888, %v1015
        %v1017 = vpop.f32.mrf.mxu0
        %1018 = vmatprep.mubr.bf16.mxu0 0
        %1019 = vmatmul.mubr.bf16.gmra.mxu0 %v863
        %v1020 = vpop.f32.mrf.mxu0
        %v1021 = vadd.f32 %v888, %v1020
        %v1022 = vpop.f32.mrf.mxu0
        %v1023 = vpop.f32.mrf.mxu0
        %v1024 = vadd.f32 %v888, %v1023
        %v1025 = vpop.f32.mrf.mxu0
        %1026 = vmatprep.mubr.bf16.mxu0 0
        %1027 = vmatmul.mubr.bf16.gmra.mxu0 %v864
        %v1028 = vpop.f32.mrf.mxu0
        %v1029 = vadd.f32 %v888, %v1028
        %v1030 = vpop.f32.mrf.mxu0
        %v1031 = vpop.f32.mrf.mxu0
        %v1032 = vadd.f32 %v888, %v1031
        %v1033 = vpop.f32.mrf.mxu0
        %1034 = vdwg.mxu0
        %v1035 = vmax.f32 %v973, 0.0
        %v1036 = vmax.f32 %v976, 0.0
        %v1037 = vmax.f32 %v981, 0.0
        %v1038 = vmax.f32 %v984, 0.0
        %v1039 = vmax.f32 %v989, 0.0
        %v1040 = vmax.f32 %v992, 0.0
        %v1041 = vmax.f32 %v997, 0.0
        %v1042 = vmax.f32 %v1000, 0.0
        %v1043 = vmax.f32 %v1005, 0.0
        %v1044 = vmax.f32 %v1008, 0.0
        %v1045 = vmax.f32 %v1013, 0.0
        %v1046 = vmax.f32 %v1016, 0.0
        %v1047 = vmax.f32 %v1021, 0.0
        %v1048 = vmax.f32 %v1024, 0.0
        %v1049 = vmax.f32 %v1029, 0.0
        %v1050 = vmax.f32 %v1032, 0.0
        %v1051 = vpack.c.bf16 %v1036, %v1035
        %v1052 = vpack.c.bf16 %v1038, %v1037
        %v1053 = vpack.c.bf16 %v1040, %v1039
        %v1054 = vpack.c.bf16 %v1042, %v1041
        %v1055 = vpack.c.bf16 %v1044, %v1043
        %v1056 = vpack.c.bf16 %v1046, %v1045
        %v1057 = vpack.c.bf16 %v1048, %v1047
        %v1058 = vpack.c.bf16 %v1050, %v1049
        %s1059 = scalar_lea.vmem [#allocation5], 256
        %v1060 = vld [vmem:[%s1059] sm:$0xf]
        %v1061 = vld [vmem:[%s1059 + $0x4] sm:$0xf]
        %v1062 = vld [vmem:[%s1059 + $0x8] sm:$0xf]
        %v1063 = vld [vmem:[%s1059 + $0xc] sm:$0xf]
        %v1064 = vld [vmem:[%s1059 + $0x10] sm:$0xf]
        %v1065 = vld [vmem:[%s1059 + $0x14] sm:$0xf]
        %v1066 = vld [vmem:[%s1059 + $0x18] sm:$0xf]
        %v1067 = vld [vmem:[%s1059 + $0x1c] sm:$0xf]
        %v1068 = vld [vmem:[%s1059 + $0x20] sm:$0xf]
        %v1069 = vld [vmem:[%s1059 + $0x24] sm:$0xf]
        %v1070 = vld [vmem:[%s1059 + $0x28] sm:$0xf]
        %v1071 = vld [vmem:[%s1059 + $0x2c] sm:$0xf]
        %v1072 = vld [vmem:[%s1059 + $0x30] sm:$0xf]
        %v1073 = vld [vmem:[%s1059 + $0x34] sm:$0xf]
        %v1074 = vld [vmem:[%s1059 + $0x38] sm:$0xf]
        %v1075 = vld [vmem:[%s1059 + $0x3c] sm:$0xf]
        %s1076 = scalar_lea.vmem [#allocation7], 4
        %v1077 = vld [vmem:[%s1076] sm:$0x1]
        %v1079 = vlaneseq
        %v1080 = vshrl.u32 %v1079, 7
        %v1081 = vsub.s32 0, %v1080
        %v1082 = vrot.slane %v1077, %v1081
        %v1100 = vunpack.c.l.b16 %v1060
        %v1101 = vunpack.c.l.b16 %v1061
        %v1102 = vunpack.c.l.b16 %v1062
        %v1103 = vunpack.c.l.b16 %v1063
        %v1104 = vunpack.c.l.b16 %v1064
        %v1105 = vunpack.c.l.b16 %v1065
        %v1106 = vunpack.c.l.b16 %v1066
        %v1107 = vunpack.c.l.b16 %v1067
        %v1108 = vunpack.c.l.b16 %v1068
        %v1109 = vunpack.c.l.b16 %v1069
        %v1110 = vunpack.c.l.b16 %v1070
        %v1111 = vunpack.c.l.b16 %v1071
        %v1112 = vunpack.c.l.b16 %v1072
        %v1113 = vunpack.c.l.b16 %v1073
        %v1114 = vunpack.c.l.b16 %v1074
        %v1115 = vunpack.c.l.b16 %v1075
        %v1116 = vpack.c.b16 %v1101, %v1100
        %v1117 = vpack.c.b16 %v1103, %v1102
        %v1118 = vpack.c.b16 %v1105, %v1104
        %v1119 = vpack.c.b16 %v1107, %v1106
        %v1120 = vpack.c.b16 %v1109, %v1108
        %v1121 = vpack.c.b16 %v1111, %v1110
        %v1122 = vpack.c.b16 %v1113, %v1112
        %v1123 = vpack.c.b16 %v1115, %v1114
        %1132 = vmatprep.subr.bf16.mxu0 0
        %1133 = vmatpush1.bf16.msra.mxu0 %v1123
        %1134 = vmatprep.subr.bf16.mxu0 0
        %1135 = vmatpush1.bf16.msra.mxu0 %v1122
        %1136 = vmatprep.subr.bf16.mxu0 0
        %1137 = vmatpush1.bf16.msra.mxu0 %v1121
        %1138 = vmatprep.subr.bf16.mxu0 0
        %1139 = vmatpush1.bf16.msra.mxu0 %v1120
        %1140 = vmatprep.subr.bf16.mxu0 0
        %1141 = vmatpush1.bf16.msra.mxu0 %v1119
        %1142 = vmatprep.subr.bf16.mxu0 0
        %1143 = vmatpush1.bf16.msra.mxu0 %v1118
        %1144 = vmatprep.subr.bf16.mxu0 0
        %1145 = vmatpush1.bf16.msra.mxu0 %v1117
        %1146 = vmatprep.subr.bf16.mxu0 0
        %1147 = vmatpush1.bf16.msra.mxu0 %v1116
        %1148 = vmatprep.subr.bf16.mxu0 0
        %1149 = vmatpush2.bf16.msra.mxu0 0
        %1150 = vmatprep.subr.bf16.mxu0 0
        %1151 = vmatpush2.bf16.msra.mxu0 0
        %1152 = vmatprep.subr.bf16.mxu0 0
        %1153 = vmatpush2.bf16.msra.mxu0 0
        %1154 = vmatprep.subr.bf16.mxu0 0
        %1155 = vmatpush2.bf16.msra.mxu0 0
        %1156 = vmatprep.subr.bf16.mxu0 0
        %1157 = vmatpush2.bf16.msra.mxu0 0
        %1158 = vmatprep.subr.bf16.mxu0 0
        %1159 = vmatpush2.bf16.msra.mxu0 0
        %1160 = vmatprep.subr.bf16.mxu0 0
        %1161 = vmatpush2.bf16.msra.mxu0 0
        %1162 = vmatprep.subr.bf16.mxu0 0
        %1163 = vmatpush2.bf16.msra.mxu0 0
        %1164 = vmatprep.mubr.bf16.mxu0 0
        %1165 = vmatmul.mubr.bf16.gmra.mxu0 %v1051
        %v1166 = vpop.f32.mrf.mxu0
        %v1167 = vadd.f32 %v1082, %v1166
        %v1168 = vpop.f32.mrf.mxu0
        %v1169 = vpop.f32.mrf.mxu0
        %v1170 = vadd.f32 %v1082, %v1169
        %v1171 = vpop.f32.mrf.mxu0
        %1172 = vmatprep.mubr.bf16.mxu0 0
        %1173 = vmatmul.mubr.bf16.gmra.mxu0 %v1052
        %v1174 = vpop.f32.mrf.mxu0
        %v1175 = vadd.f32 %v1082, %v1174
        %v1176 = vpop.f32.mrf.mxu0
        %v1177 = vpop.f32.mrf.mxu0
        %v1178 = vadd.f32 %v1082, %v1177
        %v1179 = vpop.f32.mrf.mxu0
        %1180 = vmatprep.mubr.bf16.mxu0 0
        %1181 = vmatmul.mubr.bf16.gmra.mxu0 %v1053
        %v1182 = vpop.f32.mrf.mxu0
        %v1183 = vadd.f32 %v1082, %v1182
        %v1184 = vpop.f32.mrf.mxu0
        %v1185 = vpop.f32.mrf.mxu0
        %v1186 = vadd.f32 %v1082, %v1185
        %v1187 = vpop.f32.mrf.mxu0
        %1188 = vmatprep.mubr.bf16.mxu0 0
        %1189 = vmatmul.mubr.bf16.gmra.mxu0 %v1054
        %v1190 = vpop.f32.mrf.mxu0
        %v1191 = vadd.f32 %v1082, %v1190
        %v1192 = vpop.f32.mrf.mxu0
        %v1193 = vpop.f32.mrf.mxu0
        %v1194 = vadd.f32 %v1082, %v1193
        %v1195 = vpop.f32.mrf.mxu0
        %1196 = vmatprep.mubr.bf16.mxu0 0
        %1197 = vmatmul.mubr.bf16.gmra.mxu0 %v1055
        %v1198 = vpop.f32.mrf.mxu0
        %v1199 = vadd.f32 %v1082, %v1198
        %v1200 = vpop.f32.mrf.mxu0
        %v1201 = vpop.f32.mrf.mxu0
        %v1202 = vadd.f32 %v1082, %v1201
        %v1203 = vpop.f32.mrf.mxu0
        %1204 = vmatprep.mubr.bf16.mxu0 0
        %1205 = vmatmul.mubr.bf16.gmra.mxu0 %v1056
        %v1206 = vpop.f32.mrf.mxu0
        %v1207 = vadd.f32 %v1082, %v1206
        %v1208 = vpop.f32.mrf.mxu0
        %v1209 = vpop.f32.mrf.mxu0
        %v1210 = vadd.f32 %v1082, %v1209
        %v1211 = vpop.f32.mrf.mxu0
        %1212 = vmatprep.mubr.bf16.mxu0 0
        %1213 = vmatmul.mubr.bf16.gmra.mxu0 %v1057
        %v1214 = vpop.f32.mrf.mxu0
        %v1215 = vadd.f32 %v1082, %v1214
        %v1216 = vpop.f32.mrf.mxu0
        %v1217 = vpop.f32.mrf.mxu0
        %v1218 = vadd.f32 %v1082, %v1217
        %v1219 = vpop.f32.mrf.mxu0
        %1220 = vmatprep.mubr.bf16.mxu0 0
        %1221 = vmatmul.mubr.bf16.gmra.mxu0 %v1058
        %v1222 = vpop.f32.mrf.mxu0
        %v1223 = vadd.f32 %v1082, %v1222
        %v1224 = vpop.f32.mrf.mxu0
        %v1225 = vpop.f32.mrf.mxu0
        %v1226 = vadd.f32 %v1082, %v1225
        %v1227 = vpop.f32.mrf.mxu0
        %1228 = vdwg.mxu0
        %v1229 = vmax.f32 %v1167, 0.0
        %v1230 = vmax.f32 %v1170, 0.0
        %v1231 = vmax.f32 %v1175, 0.0
        %v1232 = vmax.f32 %v1178, 0.0
        %v1233 = vmax.f32 %v1183, 0.0
        %v1234 = vmax.f32 %v1186, 0.0
        %v1235 = vmax.f32 %v1191, 0.0
        %v1236 = vmax.f32 %v1194, 0.0
        %v1237 = vmax.f32 %v1199, 0.0
        %v1238 = vmax.f32 %v1202, 0.0
        %v1239 = vmax.f32 %v1207, 0.0
        %v1240 = vmax.f32 %v1210, 0.0
        %v1241 = vmax.f32 %v1215, 0.0
        %v1242 = vmax.f32 %v1218, 0.0
        %v1243 = vmax.f32 %v1223, 0.0
        %v1244 = vmax.f32 %v1226, 0.0
        %v1245 = vpack.c.bf16 %v1230, %v1229
        %v1246 = vpack.c.bf16 %v1232, %v1231
        %v1247 = vpack.c.bf16 %v1234, %v1233
        %v1248 = vpack.c.bf16 %v1236, %v1235
        %v1249 = vpack.c.bf16 %v1238, %v1237
        %v1250 = vpack.c.bf16 %v1240, %v1239
        %v1251 = vpack.c.bf16 %v1242, %v1241
        %v1252 = vpack.c.bf16 %v1244, %v1243
        %s1253 = scalar_lea.vmem [#allocation5], 320
        %v1254 = vld [vmem:[%s1253] sm:$0xf]
        %v1255 = vld [vmem:[%s1253 + $0x4] sm:$0xf]
        %v1256 = vld [vmem:[%s1253 + $0x8] sm:$0xf]
        %v1257 = vld [vmem:[%s1253 + $0xc] sm:$0xf]
        %v1258 = vld [vmem:[%s1253 + $0x10] sm:$0xf]
        %v1259 = vld [vmem:[%s1253 + $0x14] sm:$0xf]
        %v1260 = vld [vmem:[%s1253 + $0x18] sm:$0xf]
        %v1261 = vld [vmem:[%s1253 + $0x1c] sm:$0xf]
        %v1262 = vld [vmem:[%s1253 + $0x20] sm:$0xf]
        %v1263 = vld [vmem:[%s1253 + $0x24] sm:$0xf]
        %v1264 = vld [vmem:[%s1253 + $0x28] sm:$0xf]
        %v1265 = vld [vmem:[%s1253 + $0x2c] sm:$0xf]
        %v1266 = vld [vmem:[%s1253 + $0x30] sm:$0xf]
        %v1267 = vld [vmem:[%s1253 + $0x34] sm:$0xf]
        %v1268 = vld [vmem:[%s1253 + $0x38] sm:$0xf]
        %v1269 = vld [vmem:[%s1253 + $0x3c] sm:$0xf]
        %s1270 = scalar_lea.vmem [#allocation7], 5
        %v1271 = vld [vmem:[%s1270] sm:$0x1]
        %v1273 = vlaneseq
        %v1274 = vshrl.u32 %v1273, 7
        %v1275 = vsub.s32 0, %v1274
        %v1276 = vrot.slane %v1271, %v1275
        %v1294 = vunpack.c.l.b16 %v1254
        %v1295 = vunpack.c.l.b16 %v1255
        %v1296 = vunpack.c.l.b16 %v1256
        %v1297 = vunpack.c.l.b16 %v1257
        %v1298 = vunpack.c.l.b16 %v1258
        %v1299 = vunpack.c.l.b16 %v1259
        %v1300 = vunpack.c.l.b16 %v1260
        %v1301 = vunpack.c.l.b16 %v1261
        %v1302 = vunpack.c.l.b16 %v1262
        %v1303 = vunpack.c.l.b16 %v1263
        %v1304 = vunpack.c.l.b16 %v1264
        %v1305 = vunpack.c.l.b16 %v1265
        %v1306 = vunpack.c.l.b16 %v1266
        %v1307 = vunpack.c.l.b16 %v1267
        %v1308 = vunpack.c.l.b16 %v1268
        %v1309 = vunpack.c.l.b16 %v1269
        %v1310 = vpack.c.b16 %v1295, %v1294
        %v1311 = vpack.c.b16 %v1297, %v1296
        %v1312 = vpack.c.b16 %v1299, %v1298
        %v1313 = vpack.c.b16 %v1301, %v1300
        %v1314 = vpack.c.b16 %v1303, %v1302
        %v1315 = vpack.c.b16 %v1305, %v1304
        %v1316 = vpack.c.b16 %v1307, %v1306
        %v1317 = vpack.c.b16 %v1309, %v1308
        %1326 = vmatprep.subr.bf16.mxu0 0
        %1327 = vmatpush1.bf16.msra.mxu0 %v1317
        %1328 = vmatprep.subr.bf16.mxu0 0
        %1329 = vmatpush1.bf16.msra.mxu0 %v1316
        %1330 = vmatprep.subr.bf16.mxu0 0
        %1331 = vmatpush1.bf16.msra.mxu0 %v1315
        %1332 = vmatprep.subr.bf16.mxu0 0
        %1333 = vmatpush1.bf16.msra.mxu0 %v1314
        %1334 = vmatprep.subr.bf16.mxu0 0
        %1335 = vmatpush1.bf16.msra.mxu0 %v1313
        %1336 = vmatprep.subr.bf16.mxu0 0
        %1337 = vmatpush1.bf16.msra.mxu0 %v1312
        %1338 = vmatprep.subr.bf16.mxu0 0
        %1339 = vmatpush1.bf16.msra.mxu0 %v1311
        %1340 = vmatprep.subr.bf16.mxu0 0
        %1341 = vmatpush1.bf16.msra.mxu0 %v1310
        %1342 = vmatprep.subr.bf16.mxu0 0
        %1343 = vmatpush2.bf16.msra.mxu0 0
        %1344 = vmatprep.subr.bf16.mxu0 0
        %1345 = vmatpush2.bf16.msra.mxu0 0
        %1346 = vmatprep.subr.bf16.mxu0 0
        %1347 = vmatpush2.bf16.msra.mxu0 0
        %1348 = vmatprep.subr.bf16.mxu0 0
        %1349 = vmatpush2.bf16.msra.mxu0 0
        %1350 = vmatprep.subr.bf16.mxu0 0
        %1351 = vmatpush2.bf16.msra.mxu0 0
        %1352 = vmatprep.subr.bf16.mxu0 0
        %1353 = vmatpush2.bf16.msra.mxu0 0
        %1354 = vmatprep.subr.bf16.mxu0 0
        %1355 = vmatpush2.bf16.msra.mxu0 0
        %1356 = vmatprep.subr.bf16.mxu0 0
        %1357 = vmatpush2.bf16.msra.mxu0 0
        %1358 = vmatprep.mubr.bf16.mxu0 0
        %1359 = vmatmul.mubr.bf16.gmra.mxu0 %v1245
        %v1360 = vpop.f32.mrf.mxu0
        %v1361 = vadd.f32 %v1276, %v1360
        %v1362 = vpop.f32.mrf.mxu0
        %v1363 = vpop.f32.mrf.mxu0
        %v1364 = vadd.f32 %v1276, %v1363
        %v1365 = vpop.f32.mrf.mxu0
        %1366 = vmatprep.mubr.bf16.mxu0 0
        %1367 = vmatmul.mubr.bf16.gmra.mxu0 %v1246
        %v1368 = vpop.f32.mrf.mxu0
        %v1369 = vadd.f32 %v1276, %v1368
        %v1370 = vpop.f32.mrf.mxu0
        %v1371 = vpop.f32.mrf.mxu0
        %v1372 = vadd.f32 %v1276, %v1371
        %v1373 = vpop.f32.mrf.mxu0
        %1374 = vmatprep.mubr.bf16.mxu0 0
        %1375 = vmatmul.mubr.bf16.gmra.mxu0 %v1247
        %v1376 = vpop.f32.mrf.mxu0
        %v1377 = vadd.f32 %v1276, %v1376
        %v1378 = vpop.f32.mrf.mxu0
        %v1379 = vpop.f32.mrf.mxu0
        %v1380 = vadd.f32 %v1276, %v1379
        %v1381 = vpop.f32.mrf.mxu0
        %1382 = vmatprep.mubr.bf16.mxu0 0
        %1383 = vmatmul.mubr.bf16.gmra.mxu0 %v1248
        %v1384 = vpop.f32.mrf.mxu0
        %v1385 = vadd.f32 %v1276, %v1384
        %v1386 = vpop.f32.mrf.mxu0
        %v1387 = vpop.f32.mrf.mxu0
        %v1388 = vadd.f32 %v1276, %v1387
        %v1389 = vpop.f32.mrf.mxu0
        %1390 = vmatprep.mubr.bf16.mxu0 0
        %1391 = vmatmul.mubr.bf16.gmra.mxu0 %v1249
        %v1392 = vpop.f32.mrf.mxu0
        %v1393 = vadd.f32 %v1276, %v1392
        %v1394 = vpop.f32.mrf.mxu0
        %v1395 = vpop.f32.mrf.mxu0
        %v1396 = vadd.f32 %v1276, %v1395
        %v1397 = vpop.f32.mrf.mxu0
        %1398 = vmatprep.mubr.bf16.mxu0 0
        %1399 = vmatmul.mubr.bf16.gmra.mxu0 %v1250
        %v1400 = vpop.f32.mrf.mxu0
        %v1401 = vadd.f32 %v1276, %v1400
        %v1402 = vpop.f32.mrf.mxu0
        %v1403 = vpop.f32.mrf.mxu0
        %v1404 = vadd.f32 %v1276, %v1403
        %v1405 = vpop.f32.mrf.mxu0
        %1406 = vmatprep.mubr.bf16.mxu0 0
        %1407 = vmatmul.mubr.bf16.gmra.mxu0 %v1251
        %v1408 = vpop.f32.mrf.mxu0
        %v1409 = vadd.f32 %v1276, %v1408
        %v1410 = vpop.f32.mrf.mxu0
        %v1411 = vpop.f32.mrf.mxu0
        %v1412 = vadd.f32 %v1276, %v1411
        %v1413 = vpop.f32.mrf.mxu0
        %1414 = vmatprep.mubr.bf16.mxu0 0
        %1415 = vmatmul.mubr.bf16.gmra.mxu0 %v1252
        %v1416 = vpop.f32.mrf.mxu0
        %v1417 = vadd.f32 %v1276, %v1416
        %v1418 = vpop.f32.mrf.mxu0
        %v1419 = vpop.f32.mrf.mxu0
        %v1420 = vadd.f32 %v1276, %v1419
        %v1421 = vpop.f32.mrf.mxu0
        %1422 = vdwg.mxu0
        %v1423 = vpack.c.bf16 %v1364, %v1361
        %v1424 = vpack.c.bf16 %v1372, %v1369
        %v1425 = vpack.c.bf16 %v1380, %v1377
        %v1426 = vpack.c.bf16 %v1388, %v1385
        %v1427 = vpack.c.bf16 %v1396, %v1393
        %v1428 = vpack.c.bf16 %v1404, %v1401
        %v1429 = vpack.c.bf16 %v1412, %v1409
        %v1430 = vpack.c.bf16 %v1420, %v1417
        %s1431 = scalar_lea.vmem [#allocation5], 384
        %v1432 = vld [vmem:[%s1431] sm:$0xf]
        %v1433 = vld [vmem:[%s1431 + $0x4] sm:$0xf]
        %v1434 = vld [vmem:[%s1431 + $0x8] sm:$0xf]
        %v1435 = vld [vmem:[%s1431 + $0xc] sm:$0xf]
        %v1436 = vld [vmem:[%s1431 + $0x10] sm:$0xf]
        %v1437 = vld [vmem:[%s1431 + $0x14] sm:$0xf]
        %v1438 = vld [vmem:[%s1431 + $0x18] sm:$0xf]
        %v1439 = vld [vmem:[%s1431 + $0x1c] sm:$0xf]
        %v1440 = vld [vmem:[%s1431 + $0x20] sm:$0xf]
        %v1441 = vld [vmem:[%s1431 + $0x24] sm:$0xf]
        %v1442 = vld [vmem:[%s1431 + $0x28] sm:$0xf]
        %v1443 = vld [vmem:[%s1431 + $0x2c] sm:$0xf]
        %v1444 = vld [vmem:[%s1431 + $0x30] sm:$0xf]
        %v1445 = vld [vmem:[%s1431 + $0x34] sm:$0xf]
        %v1446 = vld [vmem:[%s1431 + $0x38] sm:$0xf]
        %v1447 = vld [vmem:[%s1431 + $0x3c] sm:$0xf]
        %s1448 = scalar_lea.vmem [#allocation7], 6
        %v1449 = vld [vmem:[%s1448] sm:$0x1]
        %v1451 = vlaneseq
        %v1452 = vshrl.u32 %v1451, 7
        %v1453 = vsub.s32 0, %v1452
        %v1454 = vrot.slane %v1449, %v1453
        %v1472 = vunpack.c.l.b16 %v1432
        %v1473 = vunpack.c.l.b16 %v1433
        %v1474 = vunpack.c.l.b16 %v1434
        %v1475 = vunpack.c.l.b16 %v1435
        %v1476 = vunpack.c.l.b16 %v1436
        %v1477 = vunpack.c.l.b16 %v1437
        %v1478 = vunpack.c.l.b16 %v1438
        %v1479 = vunpack.c.l.b16 %v1439
        %v1480 = vunpack.c.l.b16 %v1440
        %v1481 = vunpack.c.l.b16 %v1441
        %v1482 = vunpack.c.l.b16 %v1442
        %v1483 = vunpack.c.l.b16 %v1443
        %v1484 = vunpack.c.l.b16 %v1444
        %v1485 = vunpack.c.l.b16 %v1445
        %v1486 = vunpack.c.l.b16 %v1446
        %v1487 = vunpack.c.l.b16 %v1447
        %v1488 = vpack.c.b16 %v1473, %v1472
        %v1489 = vpack.c.b16 %v1475, %v1474
        %v1490 = vpack.c.b16 %v1477, %v1476
        %v1491 = vpack.c.b16 %v1479, %v1478
        %v1492 = vpack.c.b16 %v1481, %v1480
        %v1493 = vpack.c.b16 %v1483, %v1482
        %v1494 = vpack.c.b16 %v1485, %v1484
        %v1495 = vpack.c.b16 %v1487, %v1486
        %1504 = vmatprep.subr.bf16.mxu0 0
        %1505 = vmatpush1.bf16.msra.mxu0 %v1495
        %1506 = vmatprep.subr.bf16.mxu0 0
        %1507 = vmatpush1.bf16.msra.mxu0 %v1494
        %1508 = vmatprep.subr.bf16.mxu0 0
        %1509 = vmatpush1.bf16.msra.mxu0 %v1493
        %1510 = vmatprep.subr.bf16.mxu0 0
        %1511 = vmatpush1.bf16.msra.mxu0 %v1492
        %1512 = vmatprep.subr.bf16.mxu0 0
        %1513 = vmatpush1.bf16.msra.mxu0 %v1491
        %1514 = vmatprep.subr.bf16.mxu0 0
        %1515 = vmatpush1.bf16.msra.mxu0 %v1490
        %1516 = vmatprep.subr.bf16.mxu0 0
        %1517 = vmatpush1.bf16.msra.mxu0 %v1489
        %1518 = vmatprep.subr.bf16.mxu0 0
        %1519 = vmatpush1.bf16.msra.mxu0 %v1488
        %1520 = vmatprep.subr.bf16.mxu0 0
        %1521 = vmatpush2.bf16.msra.mxu0 0
        %1522 = vmatprep.subr.bf16.mxu0 0
        %1523 = vmatpush2.bf16.msra.mxu0 0
        %1524 = vmatprep.subr.bf16.mxu0 0
        %1525 = vmatpush2.bf16.msra.mxu0 0
        %1526 = vmatprep.subr.bf16.mxu0 0
        %1527 = vmatpush2.bf16.msra.mxu0 0
        %1528 = vmatprep.subr.bf16.mxu0 0
        %1529 = vmatpush2.bf16.msra.mxu0 0
        %1530 = vmatprep.subr.bf16.mxu0 0
        %1531 = vmatpush2.bf16.msra.mxu0 0
        %1532 = vmatprep.subr.bf16.mxu0 0
        %1533 = vmatpush2.bf16.msra.mxu0 0
        %1534 = vmatprep.subr.bf16.mxu0 0
        %1535 = vmatpush2.bf16.msra.mxu0 0
        %1536 = vmatprep.mubr.bf16.mxu0 0
        %1537 = vmatmul.mubr.bf16.gmra.mxu0 %v1423
        %v1538 = vpop.f32.mrf.mxu0
        %v1539 = vadd.f32 %v1454, %v1538
        %v1540 = vpop.f32.mrf.mxu0
        %v1541 = vpop.f32.mrf.mxu0
        %v1542 = vadd.f32 %v1454, %v1541
        %v1543 = vpop.f32.mrf.mxu0
        %1544 = vmatprep.mubr.bf16.mxu0 0
        %1545 = vmatmul.mubr.bf16.gmra.mxu0 %v1424
        %v1546 = vpop.f32.mrf.mxu0
        %v1547 = vadd.f32 %v1454, %v1546
        %v1548 = vpop.f32.mrf.mxu0
        %v1549 = vpop.f32.mrf.mxu0
        %v1550 = vadd.f32 %v1454, %v1549
        %v1551 = vpop.f32.mrf.mxu0
        %1552 = vmatprep.mubr.bf16.mxu0 0
        %1553 = vmatmul.mubr.bf16.gmra.mxu0 %v1425
        %v1554 = vpop.f32.mrf.mxu0
        %v1555 = vadd.f32 %v1454, %v1554
        %v1556 = vpop.f32.mrf.mxu0
        %v1557 = vpop.f32.mrf.mxu0
        %v1558 = vadd.f32 %v1454, %v1557
        %v1559 = vpop.f32.mrf.mxu0
        %1560 = vmatprep.mubr.bf16.mxu0 0
        %1561 = vmatmul.mubr.bf16.gmra.mxu0 %v1426
        %v1562 = vpop.f32.mrf.mxu0
        %v1563 = vadd.f32 %v1454, %v1562
        %v1564 = vpop.f32.mrf.mxu0
        %v1565 = vpop.f32.mrf.mxu0
        %v1566 = vadd.f32 %v1454, %v1565
        %v1567 = vpop.f32.mrf.mxu0
        %1568 = vmatprep.mubr.bf16.mxu0 0
        %1569 = vmatmul.mubr.bf16.gmra.mxu0 %v1427
        %v1570 = vpop.f32.mrf.mxu0
        %v1571 = vadd.f32 %v1454, %v1570
        %v1572 = vpop.f32.mrf.mxu0
        %v1573 = vpop.f32.mrf.mxu0
        %v1574 = vadd.f32 %v1454, %v1573
        %v1575 = vpop.f32.mrf.mxu0
        %1576 = vmatprep.mubr.bf16.mxu0 0
        %1577 = vmatmul.mubr.bf16.gmra.mxu0 %v1428
        %v1578 = vpop.f32.mrf.mxu0
        %v1579 = vadd.f32 %v1454, %v1578
        %v1580 = vpop.f32.mrf.mxu0
        %v1581 = vpop.f32.mrf.mxu0
        %v1582 = vadd.f32 %v1454, %v1581
        %v1583 = vpop.f32.mrf.mxu0
        %1584 = vmatprep.mubr.bf16.mxu0 0
        %1585 = vmatmul.mubr.bf16.gmra.mxu0 %v1429
        %v1586 = vpop.f32.mrf.mxu0
        %v1587 = vadd.f32 %v1454, %v1586
        %v1588 = vpop.f32.mrf.mxu0
        %v1589 = vpop.f32.mrf.mxu0
        %v1590 = vadd.f32 %v1454, %v1589
        %v1591 = vpop.f32.mrf.mxu0
        %1592 = vmatprep.mubr.bf16.mxu0 0
        %1593 = vmatmul.mubr.bf16.gmra.mxu0 %v1430
        %v1594 = vpop.f32.mrf.mxu0
        %v1595 = vadd.f32 %v1454, %v1594
        %v1596 = vpop.f32.mrf.mxu0
        %v1597 = vpop.f32.mrf.mxu0
        %v1598 = vadd.f32 %v1454, %v1597
        %v1599 = vpop.f32.mrf.mxu0
        %1600 = vdwg.mxu0
        %v1601 = vmax.f32 %v1539, 0.0
        %v1602 = vmax.f32 %v1542, 0.0
        %v1603 = vmax.f32 %v1547, 0.0
        %v1604 = vmax.f32 %v1550, 0.0
        %v1605 = vmax.f32 %v1555, 0.0
        %v1606 = vmax.f32 %v1558, 0.0
        %v1607 = vmax.f32 %v1563, 0.0
        %v1608 = vmax.f32 %v1566, 0.0
        %v1609 = vmax.f32 %v1571, 0.0
        %v1610 = vmax.f32 %v1574, 0.0
        %v1611 = vmax.f32 %v1579, 0.0
        %v1612 = vmax.f32 %v1582, 0.0
        %v1613 = vmax.f32 %v1587, 0.0
        %v1614 = vmax.f32 %v1590, 0.0
        %v1615 = vmax.f32 %v1595, 0.0
        %v1616 = vmax.f32 %v1598, 0.0
        %v1617 = vpack.c.bf16 %v1602, %v1601
        %v1618 = vpack.c.bf16 %v1604, %v1603
        %v1619 = vpack.c.bf16 %v1606, %v1605
        %v1620 = vpack.c.bf16 %v1608, %v1607
        %v1621 = vpack.c.bf16 %v1610, %v1609
        %v1622 = vpack.c.bf16 %v1612, %v1611
        %v1623 = vpack.c.bf16 %v1614, %v1613
        %v1624 = vpack.c.bf16 %v1616, %v1615
        %s1625 = scalar_lea.vmem [#allocation5], 448
        %v1626 = vld [vmem:[%s1625] sm:$0xf]
        %v1627 = vld [vmem:[%s1625 + $0x4] sm:$0xf]
        %v1628 = vld [vmem:[%s1625 + $0x8] sm:$0xf]
        %v1629 = vld [vmem:[%s1625 + $0xc] sm:$0xf]
        %v1630 = vld [vmem:[%s1625 + $0x10] sm:$0xf]
        %v1631 = vld [vmem:[%s1625 + $0x14] sm:$0xf]
        %v1632 = vld [vmem:[%s1625 + $0x18] sm:$0xf]
        %v1633 = vld [vmem:[%s1625 + $0x1c] sm:$0xf]
        %v1634 = vld [vmem:[%s1625 + $0x20] sm:$0xf]
        %v1635 = vld [vmem:[%s1625 + $0x24] sm:$0xf]
        %v1636 = vld [vmem:[%s1625 + $0x28] sm:$0xf]
        %v1637 = vld [vmem:[%s1625 + $0x2c] sm:$0xf]
        %v1638 = vld [vmem:[%s1625 + $0x30] sm:$0xf]
        %v1639 = vld [vmem:[%s1625 + $0x34] sm:$0xf]
        %v1640 = vld [vmem:[%s1625 + $0x38] sm:$0xf]
        %v1641 = vld [vmem:[%s1625 + $0x3c] sm:$0xf]
        %s1642 = scalar_lea.vmem [#allocation7], 7
        %v1643 = vld [vmem:[%s1642] sm:$0x1]
        %v1645 = vlaneseq
        %v1646 = vshrl.u32 %v1645, 7
        %v1647 = vsub.s32 0, %v1646
        %v1648 = vrot.slane %v1643, %v1647
        %v1666 = vunpack.c.l.b16 %v1626
        %v1667 = vunpack.c.l.b16 %v1627
        %v1668 = vunpack.c.l.b16 %v1628
        %v1669 = vunpack.c.l.b16 %v1629
        %v1670 = vunpack.c.l.b16 %v1630
        %v1671 = vunpack.c.l.b16 %v1631
        %v1672 = vunpack.c.l.b16 %v1632
        %v1673 = vunpack.c.l.b16 %v1633
        %v1674 = vunpack.c.l.b16 %v1634
        %v1675 = vunpack.c.l.b16 %v1635
        %v1676 = vunpack.c.l.b16 %v1636
        %v1677 = vunpack.c.l.b16 %v1637
        %v1678 = vunpack.c.l.b16 %v1638
        %v1679 = vunpack.c.l.b16 %v1639
        %v1680 = vunpack.c.l.b16 %v1640
        %v1681 = vunpack.c.l.b16 %v1641
        %v1682 = vpack.c.b16 %v1667, %v1666
        %v1683 = vpack.c.b16 %v1669, %v1668
        %v1684 = vpack.c.b16 %v1671, %v1670
        %v1685 = vpack.c.b16 %v1673, %v1672
        %v1686 = vpack.c.b16 %v1675, %v1674
        %v1687 = vpack.c.b16 %v1677, %v1676
        %v1688 = vpack.c.b16 %v1679, %v1678
        %v1689 = vpack.c.b16 %v1681, %v1680
        %1698 = vmatprep.subr.bf16.mxu0 0
        %1699 = vmatpush1.bf16.msra.mxu0 %v1689
        %1700 = vmatprep.subr.bf16.mxu0 0
        %1701 = vmatpush1.bf16.msra.mxu0 %v1688
        %1702 = vmatprep.subr.bf16.mxu0 0
        %1703 = vmatpush1.bf16.msra.mxu0 %v1687
        %1704 = vmatprep.subr.bf16.mxu0 0
        %1705 = vmatpush1.bf16.msra.mxu0 %v1686
        %1706 = vmatprep.subr.bf16.mxu0 0
        %1707 = vmatpush1.bf16.msra.mxu0 %v1685
        %1708 = vmatprep.subr.bf16.mxu0 0
        %1709 = vmatpush1.bf16.msra.mxu0 %v1684
        %1710 = vmatprep.subr.bf16.mxu0 0
        %1711 = vmatpush1.bf16.msra.mxu0 %v1683
        %1712 = vmatprep.subr.bf16.mxu0 0
        %1713 = vmatpush1.bf16.msra.mxu0 %v1682
        %1714 = vmatprep.subr.bf16.mxu0 0
        %1715 = vmatpush2.bf16.msra.mxu0 0
        %1716 = vmatprep.subr.bf16.mxu0 0
        %1717 = vmatpush2.bf16.msra.mxu0 0
        %1718 = vmatprep.subr.bf16.mxu0 0
        %1719 = vmatpush2.bf16.msra.mxu0 0
        %1720 = vmatprep.subr.bf16.mxu0 0
        %1721 = vmatpush2.bf16.msra.mxu0 0
        %1722 = vmatprep.subr.bf16.mxu0 0
        %1723 = vmatpush2.bf16.msra.mxu0 0
        %1724 = vmatprep.subr.bf16.mxu0 0
        %1725 = vmatpush2.bf16.msra.mxu0 0
        %1726 = vmatprep.subr.bf16.mxu0 0
        %1727 = vmatpush2.bf16.msra.mxu0 0
        %1728 = vmatprep.subr.bf16.mxu0 0
        %1729 = vmatpush2.bf16.msra.mxu0 0
        %1730 = vmatprep.mubr.bf16.mxu0 0
        %1731 = vmatmul.mubr.bf16.gmra.mxu0 %v1617
        %v1732 = vpop.f32.mrf.mxu0
        %v1733 = vadd.f32 %v1648, %v1732
        %v1734 = vpop.f32.mrf.mxu0
        %v1735 = vpop.f32.mrf.mxu0
        %v1736 = vadd.f32 %v1648, %v1735
        %v1737 = vpop.f32.mrf.mxu0
        %1738 = vmatprep.mubr.bf16.mxu0 0
        %1739 = vmatmul.mubr.bf16.gmra.mxu0 %v1618
        %v1740 = vpop.f32.mrf.mxu0
        %v1741 = vadd.f32 %v1648, %v1740
        %v1742 = vpop.f32.mrf.mxu0
        %v1743 = vpop.f32.mrf.mxu0
        %v1744 = vadd.f32 %v1648, %v1743
        %v1745 = vpop.f32.mrf.mxu0
        %1746 = vmatprep.mubr.bf16.mxu0 0
        %1747 = vmatmul.mubr.bf16.gmra.mxu0 %v1619
        %v1748 = vpop.f32.mrf.mxu0
        %v1749 = vadd.f32 %v1648, %v1748
        %v1750 = vpop.f32.mrf.mxu0
        %v1751 = vpop.f32.mrf.mxu0
        %v1752 = vadd.f32 %v1648, %v1751
        %v1753 = vpop.f32.mrf.mxu0
        %1754 = vmatprep.mubr.bf16.mxu0 0
        %1755 = vmatmul.mubr.bf16.gmra.mxu0 %v1620
        %v1756 = vpop.f32.mrf.mxu0
        %v1757 = vadd.f32 %v1648, %v1756
        %v1758 = vpop.f32.mrf.mxu0
        %v1759 = vpop.f32.mrf.mxu0
        %v1760 = vadd.f32 %v1648, %v1759
        %v1761 = vpop.f32.mrf.mxu0
        %1762 = vmatprep.mubr.bf16.mxu0 0
        %1763 = vmatmul.mubr.bf16.gmra.mxu0 %v1621
        %v1764 = vpop.f32.mrf.mxu0
        %v1765 = vadd.f32 %v1648, %v1764
        %v1766 = vpop.f32.mrf.mxu0
        %v1767 = vpop.f32.mrf.mxu0
        %v1768 = vadd.f32 %v1648, %v1767
        %v1769 = vpop.f32.mrf.mxu0
        %1770 = vmatprep.mubr.bf16.mxu0 0
        %1771 = vmatmul.mubr.bf16.gmra.mxu0 %v1622
        %v1772 = vpop.f32.mrf.mxu0
        %v1773 = vadd.f32 %v1648, %v1772
        %v1774 = vpop.f32.mrf.mxu0
        %v1775 = vpop.f32.mrf.mxu0
        %v1776 = vadd.f32 %v1648, %v1775
        %v1777 = vpop.f32.mrf.mxu0
        %1778 = vmatprep.mubr.bf16.mxu0 0
        %1779 = vmatmul.mubr.bf16.gmra.mxu0 %v1623
        %v1780 = vpop.f32.mrf.mxu0
        %v1781 = vadd.f32 %v1648, %v1780
        %v1782 = vpop.f32.mrf.mxu0
        %v1783 = vpop.f32.mrf.mxu0
        %v1784 = vadd.f32 %v1648, %v1783
        %v1785 = vpop.f32.mrf.mxu0
        %1786 = vmatprep.mubr.bf16.mxu0 0
        %1787 = vmatmul.mubr.bf16.gmra.mxu0 %v1624
        %v1788 = vpop.f32.mrf.mxu0
        %v1789 = vadd.f32 %v1648, %v1788
        %v1790 = vpop.f32.mrf.mxu0
        %v1791 = vpop.f32.mrf.mxu0
        %v1792 = vadd.f32 %v1648, %v1791
        %v1793 = vpop.f32.mrf.mxu0
        %1794 = vdwg.mxu0
        %v1795 = vmax.f32 %v1733, 0.0
        %v1796 = vmax.f32 %v1736, 0.0
        %v1797 = vmax.f32 %v1741, 0.0
        %v1798 = vmax.f32 %v1744, 0.0
        %v1799 = vmax.f32 %v1749, 0.0
        %v1800 = vmax.f32 %v1752, 0.0
        %v1801 = vmax.f32 %v1757, 0.0
        %v1802 = vmax.f32 %v1760, 0.0
        %v1803 = vmax.f32 %v1765, 0.0
        %v1804 = vmax.f32 %v1768, 0.0
        %v1805 = vmax.f32 %v1773, 0.0
        %v1806 = vmax.f32 %v1776, 0.0
        %v1807 = vmax.f32 %v1781, 0.0
        %v1808 = vmax.f32 %v1784, 0.0
        %v1809 = vmax.f32 %v1789, 0.0
        %v1810 = vmax.f32 %v1792, 0.0
        %v1811 = vpack.c.bf16 %v1796, %v1795
        %v1812 = vpack.c.bf16 %v1798, %v1797
        %v1813 = vpack.c.bf16 %v1800, %v1799
        %v1814 = vpack.c.bf16 %v1802, %v1801
        %v1815 = vpack.c.bf16 %v1804, %v1803
        %v1816 = vpack.c.bf16 %v1806, %v1805
        %v1817 = vpack.c.bf16 %v1808, %v1807
        %v1818 = vpack.c.bf16 %v1810, %v1809
        %s1819 = scalar_lea.vmem [#allocation5], 512
        %v1820 = vld [vmem:[%s1819] sm:$0xf]
        %v1821 = vld [vmem:[%s1819 + $0x4] sm:$0xf]
        %v1822 = vld [vmem:[%s1819 + $0x8] sm:$0xf]
        %v1823 = vld [vmem:[%s1819 + $0xc] sm:$0xf]
        %v1824 = vld [vmem:[%s1819 + $0x10] sm:$0xf]
        %v1825 = vld [vmem:[%s1819 + $0x14] sm:$0xf]
        %v1826 = vld [vmem:[%s1819 + $0x18] sm:$0xf]
        %v1827 = vld [vmem:[%s1819 + $0x1c] sm:$0xf]
        %v1828 = vld [vmem:[%s1819 + $0x20] sm:$0xf]
        %v1829 = vld [vmem:[%s1819 + $0x24] sm:$0xf]
        %v1830 = vld [vmem:[%s1819 + $0x28] sm:$0xf]
        %v1831 = vld [vmem:[%s1819 + $0x2c] sm:$0xf]
        %v1832 = vld [vmem:[%s1819 + $0x30] sm:$0xf]
        %v1833 = vld [vmem:[%s1819 + $0x34] sm:$0xf]
        %v1834 = vld [vmem:[%s1819 + $0x38] sm:$0xf]
        %v1835 = vld [vmem:[%s1819 + $0x3c] sm:$0xf]
        %s1836 = scalar_lea.vmem [#allocation7], 8
        %v1837 = vld [vmem:[%s1836] sm:$0x1]
        %v1839 = vlaneseq
        %v1840 = vshrl.u32 %v1839, 7
        %v1841 = vsub.s32 0, %v1840
        %v1842 = vrot.slane %v1837, %v1841
        %v1860 = vunpack.c.l.b16 %v1820
        %v1861 = vunpack.c.l.b16 %v1821
        %v1862 = vunpack.c.l.b16 %v1822
        %v1863 = vunpack.c.l.b16 %v1823
        %v1864 = vunpack.c.l.b16 %v1824
        %v1865 = vunpack.c.l.b16 %v1825
        %v1866 = vunpack.c.l.b16 %v1826
        %v1867 = vunpack.c.l.b16 %v1827
        %v1868 = vunpack.c.l.b16 %v1828
        %v1869 = vunpack.c.l.b16 %v1829
        %v1870 = vunpack.c.l.b16 %v1830
        %v1871 = vunpack.c.l.b16 %v1831
        %v1872 = vunpack.c.l.b16 %v1832
        %v1873 = vunpack.c.l.b16 %v1833
        %v1874 = vunpack.c.l.b16 %v1834
        %v1875 = vunpack.c.l.b16 %v1835
        %v1876 = vpack.c.b16 %v1861, %v1860
        %v1877 = vpack.c.b16 %v1863, %v1862
        %v1878 = vpack.c.b16 %v1865, %v1864
        %v1879 = vpack.c.b16 %v1867, %v1866
        %v1880 = vpack.c.b16 %v1869, %v1868
        %v1881 = vpack.c.b16 %v1871, %v1870
        %v1882 = vpack.c.b16 %v1873, %v1872
        %v1883 = vpack.c.b16 %v1875, %v1874
        %1892 = vmatprep.subr.bf16.mxu0 0
        %1893 = vmatpush1.bf16.msra.mxu0 %v1883
        %1894 = vmatprep.subr.bf16.mxu0 0
        %1895 = vmatpush1.bf16.msra.mxu0 %v1882
        %1896 = vmatprep.subr.bf16.mxu0 0
        %1897 = vmatpush1.bf16.msra.mxu0 %v1881
        %1898 = vmatprep.subr.bf16.mxu0 0
        %1899 = vmatpush1.bf16.msra.mxu0 %v1880
        %1900 = vmatprep.subr.bf16.mxu0 0
        %1901 = vmatpush1.bf16.msra.mxu0 %v1879
        %1902 = vmatprep.subr.bf16.mxu0 0
        %1903 = vmatpush1.bf16.msra.mxu0 %v1878
        %1904 = vmatprep.subr.bf16.mxu0 0
        %1905 = vmatpush1.bf16.msra.mxu0 %v1877
        %1906 = vmatprep.subr.bf16.mxu0 0
        %1907 = vmatpush1.bf16.msra.mxu0 %v1876
        %1908 = vmatprep.subr.bf16.mxu0 0
        %1909 = vmatpush2.bf16.msra.mxu0 0
        %1910 = vmatprep.subr.bf16.mxu0 0
        %1911 = vmatpush2.bf16.msra.mxu0 0
        %1912 = vmatprep.subr.bf16.mxu0 0
        %1913 = vmatpush2.bf16.msra.mxu0 0
        %1914 = vmatprep.subr.bf16.mxu0 0
        %1915 = vmatpush2.bf16.msra.mxu0 0
        %1916 = vmatprep.subr.bf16.mxu0 0
        %1917 = vmatpush2.bf16.msra.mxu0 0
        %1918 = vmatprep.subr.bf16.mxu0 0
        %1919 = vmatpush2.bf16.msra.mxu0 0
        %1920 = vmatprep.subr.bf16.mxu0 0
        %1921 = vmatpush2.bf16.msra.mxu0 0
        %1922 = vmatprep.subr.bf16.mxu0 0
        %1923 = vmatpush2.bf16.msra.mxu0 0
        %1924 = vmatprep.mubr.bf16.mxu0 0
        %1925 = vmatmul.mubr.bf16.gmra.mxu0 %v1811
        %v1926 = vpop.f32.mrf.mxu0
        %v1927 = vadd.f32 %v1842, %v1926
        %v1928 = vpop.f32.mrf.mxu0
        %v1929 = vpop.f32.mrf.mxu0
        %v1930 = vadd.f32 %v1842, %v1929
        %v1931 = vpop.f32.mrf.mxu0
        %1932 = vmatprep.mubr.bf16.mxu0 0
        %1933 = vmatmul.mubr.bf16.gmra.mxu0 %v1812
        %v1934 = vpop.f32.mrf.mxu0
        %v1935 = vadd.f32 %v1842, %v1934
        %v1936 = vpop.f32.mrf.mxu0
        %v1937 = vpop.f32.mrf.mxu0
        %v1938 = vadd.f32 %v1842, %v1937
        %v1939 = vpop.f32.mrf.mxu0
        %1940 = vmatprep.mubr.bf16.mxu0 0
        %1941 = vmatmul.mubr.bf16.gmra.mxu0 %v1813
        %v1942 = vpop.f32.mrf.mxu0
        %v1943 = vadd.f32 %v1842, %v1942
        %v1944 = vpop.f32.mrf.mxu0
        %v1945 = vpop.f32.mrf.mxu0
        %v1946 = vadd.f32 %v1842, %v1945
        %v1947 = vpop.f32.mrf.mxu0
        %1948 = vmatprep.mubr.bf16.mxu0 0
        %1949 = vmatmul.mubr.bf16.gmra.mxu0 %v1814
        %v1950 = vpop.f32.mrf.mxu0
        %v1951 = vadd.f32 %v1842, %v1950
        %v1952 = vpop.f32.mrf.mxu0
        %v1953 = vpop.f32.mrf.mxu0
        %v1954 = vadd.f32 %v1842, %v1953
        %v1955 = vpop.f32.mrf.mxu0
        %1956 = vmatprep.mubr.bf16.mxu0 0
        %1957 = vmatmul.mubr.bf16.gmra.mxu0 %v1815
        %v1958 = vpop.f32.mrf.mxu0
        %v1959 = vadd.f32 %v1842, %v1958
        %v1960 = vpop.f32.mrf.mxu0
        %v1961 = vpop.f32.mrf.mxu0
        %v1962 = vadd.f32 %v1842, %v1961
        %v1963 = vpop.f32.mrf.mxu0
        %1964 = vmatprep.mubr.bf16.mxu0 0
        %1965 = vmatmul.mubr.bf16.gmra.mxu0 %v1816
        %v1966 = vpop.f32.mrf.mxu0
        %v1967 = vadd.f32 %v1842, %v1966
        %v1968 = vpop.f32.mrf.mxu0
        %v1969 = vpop.f32.mrf.mxu0
        %v1970 = vadd.f32 %v1842, %v1969
        %v1971 = vpop.f32.mrf.mxu0
        %1972 = vmatprep.mubr.bf16.mxu0 0
        %1973 = vmatmul.mubr.bf16.gmra.mxu0 %v1817
        %v1974 = vpop.f32.mrf.mxu0
        %v1975 = vadd.f32 %v1842, %v1974
        %v1976 = vpop.f32.mrf.mxu0
        %v1977 = vpop.f32.mrf.mxu0
        %v1978 = vadd.f32 %v1842, %v1977
        %v1979 = vpop.f32.mrf.mxu0
        %1980 = vmatprep.mubr.bf16.mxu0 0
        %1981 = vmatmul.mubr.bf16.gmra.mxu0 %v1818
        %v1982 = vpop.f32.mrf.mxu0
        %v1983 = vadd.f32 %v1842, %v1982
        %v1984 = vpop.f32.mrf.mxu0
        %v1985 = vpop.f32.mrf.mxu0
        %v1986 = vadd.f32 %v1842, %v1985
        %v1987 = vpop.f32.mrf.mxu0
        %1988 = vdwg.mxu0
        %v1989 = vmax.f32 %v1927, 0.0
        %v1990 = vmax.f32 %v1930, 0.0
        %v1991 = vmax.f32 %v1935, 0.0
        %v1992 = vmax.f32 %v1938, 0.0
        %v1993 = vmax.f32 %v1943, 0.0
        %v1994 = vmax.f32 %v1946, 0.0
        %v1995 = vmax.f32 %v1951, 0.0
        %v1996 = vmax.f32 %v1954, 0.0
        %v1997 = vmax.f32 %v1959, 0.0
        %v1998 = vmax.f32 %v1962, 0.0
        %v1999 = vmax.f32 %v1967, 0.0
        %v2000 = vmax.f32 %v1970, 0.0
        %v2001 = vmax.f32 %v1975, 0.0
        %v2002 = vmax.f32 %v1978, 0.0
        %v2003 = vmax.f32 %v1983, 0.0
        %v2004 = vmax.f32 %v1986, 0.0
        %v2005 = vpack.c.bf16 %v1990, %v1989
        %v2006 = vpack.c.bf16 %v1992, %v1991
        %v2007 = vpack.c.bf16 %v1994, %v1993
        %v2008 = vpack.c.bf16 %v1996, %v1995
        %v2009 = vpack.c.bf16 %v1998, %v1997
        %v2010 = vpack.c.bf16 %v2000, %v1999
        %v2011 = vpack.c.bf16 %v2002, %v2001
        %v2012 = vpack.c.bf16 %v2004, %v2003
        %s2013 = scalar_lea.vmem [#allocation5], 576
        %v2014 = vld [vmem:[%s2013] sm:$0xf]
        %v2015 = vld [vmem:[%s2013 + $0x4] sm:$0xf]
        %v2016 = vld [vmem:[%s2013 + $0x8] sm:$0xf]
        %v2017 = vld [vmem:[%s2013 + $0xc] sm:$0xf]
        %v2018 = vld [vmem:[%s2013 + $0x10] sm:$0xf]
        %v2019 = vld [vmem:[%s2013 + $0x14] sm:$0xf]
        %v2020 = vld [vmem:[%s2013 + $0x18] sm:$0xf]
        %v2021 = vld [vmem:[%s2013 + $0x1c] sm:$0xf]
        %v2022 = vld [vmem:[%s2013 + $0x20] sm:$0xf]
        %v2023 = vld [vmem:[%s2013 + $0x24] sm:$0xf]
        %v2024 = vld [vmem:[%s2013 + $0x28] sm:$0xf]
        %v2025 = vld [vmem:[%s2013 + $0x2c] sm:$0xf]
        %v2026 = vld [vmem:[%s2013 + $0x30] sm:$0xf]
        %v2027 = vld [vmem:[%s2013 + $0x34] sm:$0xf]
        %v2028 = vld [vmem:[%s2013 + $0x38] sm:$0xf]
        %v2029 = vld [vmem:[%s2013 + $0x3c] sm:$0xf]
        %s2030 = scalar_lea.vmem [#allocation7], 9
        %v2031 = vld [vmem:[%s2030] sm:$0x1]
        %v2033 = vlaneseq
        %v2034 = vshrl.u32 %v2033, 7
        %v2035 = vsub.s32 0, %v2034
        %v2036 = vrot.slane %v2031, %v2035
        %v2054 = vunpack.c.l.b16 %v2014
        %v2055 = vunpack.c.l.b16 %v2015
        %v2056 = vunpack.c.l.b16 %v2016
        %v2057 = vunpack.c.l.b16 %v2017
        %v2058 = vunpack.c.l.b16 %v2018
        %v2059 = vunpack.c.l.b16 %v2019
        %v2060 = vunpack.c.l.b16 %v2020
        %v2061 = vunpack.c.l.b16 %v2021
        %v2062 = vunpack.c.l.b16 %v2022
        %v2063 = vunpack.c.l.b16 %v2023
        %v2064 = vunpack.c.l.b16 %v2024
        %v2065 = vunpack.c.l.b16 %v2025
        %v2066 = vunpack.c.l.b16 %v2026
        %v2067 = vunpack.c.l.b16 %v2027
        %v2068 = vunpack.c.l.b16 %v2028
        %v2069 = vunpack.c.l.b16 %v2029
        %v2070 = vpack.c.b16 %v2055, %v2054
        %v2071 = vpack.c.b16 %v2057, %v2056
        %v2072 = vpack.c.b16 %v2059, %v2058
        %v2073 = vpack.c.b16 %v2061, %v2060
        %v2074 = vpack.c.b16 %v2063, %v2062
        %v2075 = vpack.c.b16 %v2065, %v2064
        %v2076 = vpack.c.b16 %v2067, %v2066
        %v2077 = vpack.c.b16 %v2069, %v2068
        %2086 = vmatprep.subr.bf16.mxu0 0
        %2087 = vmatpush1.bf16.msra.mxu0 %v2077
        %2088 = vmatprep.subr.bf16.mxu0 0
        %2089 = vmatpush1.bf16.msra.mxu0 %v2076
        %2090 = vmatprep.subr.bf16.mxu0 0
        %2091 = vmatpush1.bf16.msra.mxu0 %v2075
        %2092 = vmatprep.subr.bf16.mxu0 0
        %2093 = vmatpush1.bf16.msra.mxu0 %v2074
        %2094 = vmatprep.subr.bf16.mxu0 0
        %2095 = vmatpush1.bf16.msra.mxu0 %v2073
        %2096 = vmatprep.subr.bf16.mxu0 0
        %2097 = vmatpush1.bf16.msra.mxu0 %v2072
        %2098 = vmatprep.subr.bf16.mxu0 0
        %2099 = vmatpush1.bf16.msra.mxu0 %v2071
        %2100 = vmatprep.subr.bf16.mxu0 0
        %2101 = vmatpush1.bf16.msra.mxu0 %v2070
        %2102 = vmatprep.subr.bf16.mxu0 0
        %2103 = vmatpush2.bf16.msra.mxu0 0
        %2104 = vmatprep.subr.bf16.mxu0 0
        %2105 = vmatpush2.bf16.msra.mxu0 0
        %2106 = vmatprep.subr.bf16.mxu0 0
        %2107 = vmatpush2.bf16.msra.mxu0 0
        %2108 = vmatprep.subr.bf16.mxu0 0
        %2109 = vmatpush2.bf16.msra.mxu0 0
        %2110 = vmatprep.subr.bf16.mxu0 0
        %2111 = vmatpush2.bf16.msra.mxu0 0
        %2112 = vmatprep.subr.bf16.mxu0 0
        %2113 = vmatpush2.bf16.msra.mxu0 0
        %2114 = vmatprep.subr.bf16.mxu0 0
        %2115 = vmatpush2.bf16.msra.mxu0 0
        %2116 = vmatprep.subr.bf16.mxu0 0
        %2117 = vmatpush2.bf16.msra.mxu0 0
        %2118 = vmatprep.mubr.bf16.mxu0 0
        %2119 = vmatmul.mubr.bf16.gmra.mxu0 %v2005
        %v2120 = vpop.f32.mrf.mxu0
        %v2121 = vadd.f32 %v2036, %v2120
        %v2122 = vpop.f32.mrf.mxu0
        %v2123 = vpop.f32.mrf.mxu0
        %v2124 = vadd.f32 %v2036, %v2123
        %v2125 = vpop.f32.mrf.mxu0
        %2126 = vmatprep.mubr.bf16.mxu0 0
        %2127 = vmatmul.mubr.bf16.gmra.mxu0 %v2006
        %v2128 = vpop.f32.mrf.mxu0
        %v2129 = vadd.f32 %v2036, %v2128
        %v2130 = vpop.f32.mrf.mxu0
        %v2131 = vpop.f32.mrf.mxu0
        %v2132 = vadd.f32 %v2036, %v2131
        %v2133 = vpop.f32.mrf.mxu0
        %2134 = vmatprep.mubr.bf16.mxu0 0
        %2135 = vmatmul.mubr.bf16.gmra.mxu0 %v2007
        %v2136 = vpop.f32.mrf.mxu0
        %v2137 = vadd.f32 %v2036, %v2136
        %v2138 = vpop.f32.mrf.mxu0
        %v2139 = vpop.f32.mrf.mxu0
        %v2140 = vadd.f32 %v2036, %v2139
        %v2141 = vpop.f32.mrf.mxu0
        %2142 = vmatprep.mubr.bf16.mxu0 0
        %2143 = vmatmul.mubr.bf16.gmra.mxu0 %v2008
        %v2144 = vpop.f32.mrf.mxu0
        %v2145 = vadd.f32 %v2036, %v2144
        %v2146 = vpop.f32.mrf.mxu0
        %v2147 = vpop.f32.mrf.mxu0
        %v2148 = vadd.f32 %v2036, %v2147
        %v2149 = vpop.f32.mrf.mxu0
        %2150 = vmatprep.mubr.bf16.mxu0 0
        %2151 = vmatmul.mubr.bf16.gmra.mxu0 %v2009
        %v2152 = vpop.f32.mrf.mxu0
        %v2153 = vadd.f32 %v2036, %v2152
        %v2154 = vpop.f32.mrf.mxu0
        %v2155 = vpop.f32.mrf.mxu0
        %v2156 = vadd.f32 %v2036, %v2155
        %v2157 = vpop.f32.mrf.mxu0
        %2158 = vmatprep.mubr.bf16.mxu0 0
        %2159 = vmatmul.mubr.bf16.gmra.mxu0 %v2010
        %v2160 = vpop.f32.mrf.mxu0
        %v2161 = vadd.f32 %v2036, %v2160
        %v2162 = vpop.f32.mrf.mxu0
        %v2163 = vpop.f32.mrf.mxu0
        %v2164 = vadd.f32 %v2036, %v2163
        %v2165 = vpop.f32.mrf.mxu0
        %2166 = vmatprep.mubr.bf16.mxu0 0
        %2167 = vmatmul.mubr.bf16.gmra.mxu0 %v2011
        %v2168 = vpop.f32.mrf.mxu0
        %v2169 = vadd.f32 %v2036, %v2168
        %v2170 = vpop.f32.mrf.mxu0
        %v2171 = vpop.f32.mrf.mxu0
        %v2172 = vadd.f32 %v2036, %v2171
        %v2173 = vpop.f32.mrf.mxu0
        %2174 = vmatprep.mubr.bf16.mxu0 0
        %2175 = vmatmul.mubr.bf16.gmra.mxu0 %v2012
        %v2176 = vpop.f32.mrf.mxu0
        %v2177 = vadd.f32 %v2036, %v2176
        %v2178 = vpop.f32.mrf.mxu0
        %v2179 = vpop.f32.mrf.mxu0
        %v2180 = vadd.f32 %v2036, %v2179
        %v2181 = vpop.f32.mrf.mxu0
        %2182 = vdwg.mxu0
        %v2183 = vmax.f32 %v2121, 0.0
        %v2184 = vmax.f32 %v2124, 0.0
        %v2185 = vmax.f32 %v2129, 0.0
        %v2186 = vmax.f32 %v2132, 0.0
        %v2187 = vmax.f32 %v2137, 0.0
        %v2188 = vmax.f32 %v2140, 0.0
        %v2189 = vmax.f32 %v2145, 0.0
        %v2190 = vmax.f32 %v2148, 0.0
        %v2191 = vmax.f32 %v2153, 0.0
        %v2192 = vmax.f32 %v2156, 0.0
        %v2193 = vmax.f32 %v2161, 0.0
        %v2194 = vmax.f32 %v2164, 0.0
        %v2195 = vmax.f32 %v2169, 0.0
        %v2196 = vmax.f32 %v2172, 0.0
        %v2197 = vmax.f32 %v2177, 0.0
        %v2198 = vmax.f32 %v2180, 0.0
        %v2199 = vpack.c.bf16 %v2184, %v2183
        %v2200 = vpack.c.bf16 %v2186, %v2185
        %v2201 = vpack.c.bf16 %v2188, %v2187
        %v2202 = vpack.c.bf16 %v2190, %v2189
        %v2203 = vpack.c.bf16 %v2192, %v2191
        %v2204 = vpack.c.bf16 %v2194, %v2193
        %v2205 = vpack.c.bf16 %v2196, %v2195
        %v2206 = vpack.c.bf16 %v2198, %v2197
        %s2207 = scalar_lea.vmem [#allocation5], 640
        %v2208 = vld [vmem:[%s2207] sm:$0xf]
        %v2209 = vld [vmem:[%s2207 + $0x4] sm:$0xf]
        %v2210 = vld [vmem:[%s2207 + $0x8] sm:$0xf]
        %v2211 = vld [vmem:[%s2207 + $0xc] sm:$0xf]
        %v2212 = vld [vmem:[%s2207 + $0x10] sm:$0xf]
        %v2213 = vld [vmem:[%s2207 + $0x14] sm:$0xf]
        %v2214 = vld [vmem:[%s2207 + $0x18] sm:$0xf]
        %v2215 = vld [vmem:[%s2207 + $0x1c] sm:$0xf]
        %v2216 = vld [vmem:[%s2207 + $0x20] sm:$0xf]
        %v2217 = vld [vmem:[%s2207 + $0x24] sm:$0xf]
        %v2218 = vld [vmem:[%s2207 + $0x28] sm:$0xf]
        %v2219 = vld [vmem:[%s2207 + $0x2c] sm:$0xf]
        %v2220 = vld [vmem:[%s2207 + $0x30] sm:$0xf]
        %v2221 = vld [vmem:[%s2207 + $0x34] sm:$0xf]
        %v2222 = vld [vmem:[%s2207 + $0x38] sm:$0xf]
        %v2223 = vld [vmem:[%s2207 + $0x3c] sm:$0xf]
        %s2224 = scalar_lea.vmem [#allocation7], 10
        %v2225 = vld [vmem:[%s2224] sm:$0x1]
        %v2227 = vlaneseq
        %v2228 = vshrl.u32 %v2227, 7
        %v2229 = vsub.s32 0, %v2228
        %v2230 = vrot.slane %v2225, %v2229
        %v2248 = vunpack.c.l.b16 %v2208
        %v2249 = vunpack.c.l.b16 %v2209
        %v2250 = vunpack.c.l.b16 %v2210
        %v2251 = vunpack.c.l.b16 %v2211
        %v2252 = vunpack.c.l.b16 %v2212
        %v2253 = vunpack.c.l.b16 %v2213
        %v2254 = vunpack.c.l.b16 %v2214
        %v2255 = vunpack.c.l.b16 %v2215
        %v2256 = vunpack.c.l.b16 %v2216
        %v2257 = vunpack.c.l.b16 %v2217
        %v2258 = vunpack.c.l.b16 %v2218
        %v2259 = vunpack.c.l.b16 %v2219
        %v2260 = vunpack.c.l.b16 %v2220
        %v2261 = vunpack.c.l.b16 %v2221
        %v2262 = vunpack.c.l.b16 %v2222
        %v2263 = vunpack.c.l.b16 %v2223
        %v2264 = vpack.c.b16 %v2249, %v2248
        %v2265 = vpack.c.b16 %v2251, %v2250
        %v2266 = vpack.c.b16 %v2253, %v2252
        %v2267 = vpack.c.b16 %v2255, %v2254
        %v2268 = vpack.c.b16 %v2257, %v2256
        %v2269 = vpack.c.b16 %v2259, %v2258
        %v2270 = vpack.c.b16 %v2261, %v2260
        %v2271 = vpack.c.b16 %v2263, %v2262
        %2280 = vmatprep.subr.bf16.mxu0 0
        %2281 = vmatpush1.bf16.msra.mxu0 %v2271
        %2282 = vmatprep.subr.bf16.mxu0 0
        %2283 = vmatpush1.bf16.msra.mxu0 %v2270
        %2284 = vmatprep.subr.bf16.mxu0 0
        %2285 = vmatpush1.bf16.msra.mxu0 %v2269
        %2286 = vmatprep.subr.bf16.mxu0 0
        %2287 = vmatpush1.bf16.msra.mxu0 %v2268
        %2288 = vmatprep.subr.bf16.mxu0 0
        %2289 = vmatpush1.bf16.msra.mxu0 %v2267
        %2290 = vmatprep.subr.bf16.mxu0 0
        %2291 = vmatpush1.bf16.msra.mxu0 %v2266
        %2292 = vmatprep.subr.bf16.mxu0 0
        %2293 = vmatpush1.bf16.msra.mxu0 %v2265
        %2294 = vmatprep.subr.bf16.mxu0 0
        %2295 = vmatpush1.bf16.msra.mxu0 %v2264
        %2296 = vmatprep.subr.bf16.mxu0 0
        %2297 = vmatpush2.bf16.msra.mxu0 0
        %2298 = vmatprep.subr.bf16.mxu0 0
        %2299 = vmatpush2.bf16.msra.mxu0 0
        %2300 = vmatprep.subr.bf16.mxu0 0
        %2301 = vmatpush2.bf16.msra.mxu0 0
        %2302 = vmatprep.subr.bf16.mxu0 0
        %2303 = vmatpush2.bf16.msra.mxu0 0
        %2304 = vmatprep.subr.bf16.mxu0 0
        %2305 = vmatpush2.bf16.msra.mxu0 0
        %2306 = vmatprep.subr.bf16.mxu0 0
        %2307 = vmatpush2.bf16.msra.mxu0 0
        %2308 = vmatprep.subr.bf16.mxu0 0
        %2309 = vmatpush2.bf16.msra.mxu0 0
        %2310 = vmatprep.subr.bf16.mxu0 0
        %2311 = vmatpush2.bf16.msra.mxu0 0
        %2312 = vmatprep.mubr.bf16.mxu0 0
        %2313 = vmatmul.mubr.bf16.gmra.mxu0 %v2199
        %v2314 = vpop.f32.mrf.mxu0
        %v2315 = vadd.f32 %v2230, %v2314
        %v2316 = vpop.f32.mrf.mxu0
        %v2317 = vpop.f32.mrf.mxu0
        %v2318 = vadd.f32 %v2230, %v2317
        %v2319 = vpop.f32.mrf.mxu0
        %2320 = vmatprep.mubr.bf16.mxu0 0
        %2321 = vmatmul.mubr.bf16.gmra.mxu0 %v2200
        %v2322 = vpop.f32.mrf.mxu0
        %v2323 = vadd.f32 %v2230, %v2322
        %v2324 = vpop.f32.mrf.mxu0
        %v2325 = vpop.f32.mrf.mxu0
        %v2326 = vadd.f32 %v2230, %v2325
        %v2327 = vpop.f32.mrf.mxu0
        %2328 = vmatprep.mubr.bf16.mxu0 0
        %2329 = vmatmul.mubr.bf16.gmra.mxu0 %v2201
        %v2330 = vpop.f32.mrf.mxu0
        %v2331 = vadd.f32 %v2230, %v2330
        %v2332 = vpop.f32.mrf.mxu0
        %v2333 = vpop.f32.mrf.mxu0
        %v2334 = vadd.f32 %v2230, %v2333
        %v2335 = vpop.f32.mrf.mxu0
        %2336 = vmatprep.mubr.bf16.mxu0 0
        %2337 = vmatmul.mubr.bf16.gmra.mxu0 %v2202
        %v2338 = vpop.f32.mrf.mxu0
        %v2339 = vadd.f32 %v2230, %v2338
        %v2340 = vpop.f32.mrf.mxu0
        %v2341 = vpop.f32.mrf.mxu0
        %v2342 = vadd.f32 %v2230, %v2341
        %v2343 = vpop.f32.mrf.mxu0
        %2344 = vmatprep.mubr.bf16.mxu0 0
        %2345 = vmatmul.mubr.bf16.gmra.mxu0 %v2203
        %v2346 = vpop.f32.mrf.mxu0
        %v2347 = vadd.f32 %v2230, %v2346
        %v2348 = vpop.f32.mrf.mxu0
        %v2349 = vpop.f32.mrf.mxu0
        %v2350 = vadd.f32 %v2230, %v2349
        %v2351 = vpop.f32.mrf.mxu0
        %2352 = vmatprep.mubr.bf16.mxu0 0
        %2353 = vmatmul.mubr.bf16.gmra.mxu0 %v2204
        %v2354 = vpop.f32.mrf.mxu0
        %v2355 = vadd.f32 %v2230, %v2354
        %v2356 = vpop.f32.mrf.mxu0
        %v2357 = vpop.f32.mrf.mxu0
        %v2358 = vadd.f32 %v2230, %v2357
        %v2359 = vpop.f32.mrf.mxu0
        %2360 = vmatprep.mubr.bf16.mxu0 0
        %2361 = vmatmul.mubr.bf16.gmra.mxu0 %v2205
        %v2362 = vpop.f32.mrf.mxu0
        %v2363 = vadd.f32 %v2230, %v2362
        %v2364 = vpop.f32.mrf.mxu0
        %v2365 = vpop.f32.mrf.mxu0
        %v2366 = vadd.f32 %v2230, %v2365
        %v2367 = vpop.f32.mrf.mxu0
        %2368 = vmatprep.mubr.bf16.mxu0 0
        %2369 = vmatmul.mubr.bf16.gmra.mxu0 %v2206
        %v2370 = vpop.f32.mrf.mxu0
        %v2371 = vadd.f32 %v2230, %v2370
        %v2372 = vpop.f32.mrf.mxu0
        %v2373 = vpop.f32.mrf.mxu0
        %v2374 = vadd.f32 %v2230, %v2373
        %v2375 = vpop.f32.mrf.mxu0
        %2376 = vdwg.mxu0
        %v2377 = vmax.f32 %v2315, 0.0
        %v2378 = vmax.f32 %v2318, 0.0
        %v2379 = vmax.f32 %v2323, 0.0
        %v2380 = vmax.f32 %v2326, 0.0
        %v2381 = vmax.f32 %v2331, 0.0
        %v2382 = vmax.f32 %v2334, 0.0
        %v2383 = vmax.f32 %v2339, 0.0
        %v2384 = vmax.f32 %v2342, 0.0
        %v2385 = vmax.f32 %v2347, 0.0
        %v2386 = vmax.f32 %v2350, 0.0
        %v2387 = vmax.f32 %v2355, 0.0
        %v2388 = vmax.f32 %v2358, 0.0
        %v2389 = vmax.f32 %v2363, 0.0
        %v2390 = vmax.f32 %v2366, 0.0
        %v2391 = vmax.f32 %v2371, 0.0
        %v2392 = vmax.f32 %v2374, 0.0
        %v2393 = vpack.c.bf16 %v2378, %v2377
        %v2394 = vpack.c.bf16 %v2380, %v2379
        %v2395 = vpack.c.bf16 %v2382, %v2381
        %v2396 = vpack.c.bf16 %v2384, %v2383
        %v2397 = vpack.c.bf16 %v2386, %v2385
        %v2398 = vpack.c.bf16 %v2388, %v2387
        %v2399 = vpack.c.bf16 %v2390, %v2389
        %v2400 = vpack.c.bf16 %v2392, %v2391
        %s2401 = scalar_lea.vmem [#allocation5], 704
        %v2402 = vld [vmem:[%s2401] sm:$0xf]
        %v2403 = vld [vmem:[%s2401 + $0x4] sm:$0xf]
        %v2404 = vld [vmem:[%s2401 + $0x8] sm:$0xf]
        %v2405 = vld [vmem:[%s2401 + $0xc] sm:$0xf]
        %v2406 = vld [vmem:[%s2401 + $0x10] sm:$0xf]
        %v2407 = vld [vmem:[%s2401 + $0x14] sm:$0xf]
        %v2408 = vld [vmem:[%s2401 + $0x18] sm:$0xf]
        %v2409 = vld [vmem:[%s2401 + $0x1c] sm:$0xf]
        %v2410 = vld [vmem:[%s2401 + $0x20] sm:$0xf]
        %v2411 = vld [vmem:[%s2401 + $0x24] sm:$0xf]
        %v2412 = vld [vmem:[%s2401 + $0x28] sm:$0xf]
        %v2413 = vld [vmem:[%s2401 + $0x2c] sm:$0xf]
        %v2414 = vld [vmem:[%s2401 + $0x30] sm:$0xf]
        %v2415 = vld [vmem:[%s2401 + $0x34] sm:$0xf]
        %v2416 = vld [vmem:[%s2401 + $0x38] sm:$0xf]
        %v2417 = vld [vmem:[%s2401 + $0x3c] sm:$0xf]
        %s2418 = scalar_lea.vmem [#allocation7], 11
        %v2419 = vld [vmem:[%s2418] sm:$0x1]
        %v2421 = vlaneseq
        %v2422 = vshrl.u32 %v2421, 7
        %v2423 = vsub.s32 0, %v2422
        %v2424 = vrot.slane %v2419, %v2423
        %v2442 = vunpack.c.l.b16 %v2402
        %v2443 = vunpack.c.l.b16 %v2403
        %v2444 = vunpack.c.l.b16 %v2404
        %v2445 = vunpack.c.l.b16 %v2405
        %v2446 = vunpack.c.l.b16 %v2406
        %v2447 = vunpack.c.l.b16 %v2407
        %v2448 = vunpack.c.l.b16 %v2408
        %v2449 = vunpack.c.l.b16 %v2409
        %v2450 = vunpack.c.l.b16 %v2410
        %v2451 = vunpack.c.l.b16 %v2411
        %v2452 = vunpack.c.l.b16 %v2412
        %v2453 = vunpack.c.l.b16 %v2413
        %v2454 = vunpack.c.l.b16 %v2414
        %v2455 = vunpack.c.l.b16 %v2415
        %v2456 = vunpack.c.l.b16 %v2416
        %v2457 = vunpack.c.l.b16 %v2417
        %v2458 = vpack.c.b16 %v2443, %v2442
        %v2459 = vpack.c.b16 %v2445, %v2444
        %v2460 = vpack.c.b16 %v2447, %v2446
        %v2461 = vpack.c.b16 %v2449, %v2448
        %v2462 = vpack.c.b16 %v2451, %v2450
        %v2463 = vpack.c.b16 %v2453, %v2452
        %v2464 = vpack.c.b16 %v2455, %v2454
        %v2465 = vpack.c.b16 %v2457, %v2456
        %2474 = vmatprep.subr.bf16.mxu0 0
        %2475 = vmatpush1.bf16.msra.mxu0 %v2465
        %2476 = vmatprep.subr.bf16.mxu0 0
        %2477 = vmatpush1.bf16.msra.mxu0 %v2464
        %2478 = vmatprep.subr.bf16.mxu0 0
        %2479 = vmatpush1.bf16.msra.mxu0 %v2463
        %2480 = vmatprep.subr.bf16.mxu0 0
        %2481 = vmatpush1.bf16.msra.mxu0 %v2462
        %2482 = vmatprep.subr.bf16.mxu0 0
        %2483 = vmatpush1.bf16.msra.mxu0 %v2461
        %2484 = vmatprep.subr.bf16.mxu0 0
        %2485 = vmatpush1.bf16.msra.mxu0 %v2460
        %2486 = vmatprep.subr.bf16.mxu0 0
        %2487 = vmatpush1.bf16.msra.mxu0 %v2459
        %2488 = vmatprep.subr.bf16.mxu0 0
        %2489 = vmatpush1.bf16.msra.mxu0 %v2458
        %2490 = vmatprep.subr.bf16.mxu0 0
        %2491 = vmatpush2.bf16.msra.mxu0 0
        %2492 = vmatprep.subr.bf16.mxu0 0
        %2493 = vmatpush2.bf16.msra.mxu0 0
        %2494 = vmatprep.subr.bf16.mxu0 0
        %2495 = vmatpush2.bf16.msra.mxu0 0
        %2496 = vmatprep.subr.bf16.mxu0 0
        %2497 = vmatpush2.bf16.msra.mxu0 0
        %2498 = vmatprep.subr.bf16.mxu0 0
        %2499 = vmatpush2.bf16.msra.mxu0 0
        %2500 = vmatprep.subr.bf16.mxu0 0
        %2501 = vmatpush2.bf16.msra.mxu0 0
        %2502 = vmatprep.subr.bf16.mxu0 0
        %2503 = vmatpush2.bf16.msra.mxu0 0
        %2504 = vmatprep.subr.bf16.mxu0 0
        %2505 = vmatpush2.bf16.msra.mxu0 0
        %2506 = vmatprep.mubr.bf16.mxu0 0
        %2507 = vmatmul.mubr.bf16.gmra.mxu0 %v2393
        %v2508 = vpop.f32.mrf.mxu0
        %v2509 = vadd.f32 %v2424, %v2508
        %v2510 = vpop.f32.mrf.mxu0
        %v2511 = vpop.f32.mrf.mxu0
        %v2512 = vadd.f32 %v2424, %v2511
        %v2513 = vpop.f32.mrf.mxu0
        %2514 = vmatprep.mubr.bf16.mxu0 0
        %2515 = vmatmul.mubr.bf16.gmra.mxu0 %v2394
        %v2516 = vpop.f32.mrf.mxu0
        %v2517 = vadd.f32 %v2424, %v2516
        %v2518 = vpop.f32.mrf.mxu0
        %v2519 = vpop.f32.mrf.mxu0
        %v2520 = vadd.f32 %v2424, %v2519
        %v2521 = vpop.f32.mrf.mxu0
        %2522 = vmatprep.mubr.bf16.mxu0 0
        %2523 = vmatmul.mubr.bf16.gmra.mxu0 %v2395
        %v2524 = vpop.f32.mrf.mxu0
        %v2525 = vadd.f32 %v2424, %v2524
        %v2526 = vpop.f32.mrf.mxu0
        %v2527 = vpop.f32.mrf.mxu0
        %v2528 = vadd.f32 %v2424, %v2527
        %v2529 = vpop.f32.mrf.mxu0
        %2530 = vmatprep.mubr.bf16.mxu0 0
        %2531 = vmatmul.mubr.bf16.gmra.mxu0 %v2396
        %v2532 = vpop.f32.mrf.mxu0
        %v2533 = vadd.f32 %v2424, %v2532
        %v2534 = vpop.f32.mrf.mxu0
        %v2535 = vpop.f32.mrf.mxu0
        %v2536 = vadd.f32 %v2424, %v2535
        %v2537 = vpop.f32.mrf.mxu0
        %2538 = vmatprep.mubr.bf16.mxu0 0
        %2539 = vmatmul.mubr.bf16.gmra.mxu0 %v2397
        %v2540 = vpop.f32.mrf.mxu0
        %v2541 = vadd.f32 %v2424, %v2540
        %v2542 = vpop.f32.mrf.mxu0
        %v2543 = vpop.f32.mrf.mxu0
        %v2544 = vadd.f32 %v2424, %v2543
        %v2545 = vpop.f32.mrf.mxu0
        %2546 = vmatprep.mubr.bf16.mxu0 0
        %2547 = vmatmul.mubr.bf16.gmra.mxu0 %v2398
        %v2548 = vpop.f32.mrf.mxu0
        %v2549 = vadd.f32 %v2424, %v2548
        %v2550 = vpop.f32.mrf.mxu0
        %v2551 = vpop.f32.mrf.mxu0
        %v2552 = vadd.f32 %v2424, %v2551
        %v2553 = vpop.f32.mrf.mxu0
        %2554 = vmatprep.mubr.bf16.mxu0 0
        %2555 = vmatmul.mubr.bf16.gmra.mxu0 %v2399
        %v2556 = vpop.f32.mrf.mxu0
        %v2557 = vadd.f32 %v2424, %v2556
        %v2558 = vpop.f32.mrf.mxu0
        %v2559 = vpop.f32.mrf.mxu0
        %v2560 = vadd.f32 %v2424, %v2559
        %v2561 = vpop.f32.mrf.mxu0
        %2562 = vmatprep.mubr.bf16.mxu0 0
        %2563 = vmatmul.mubr.bf16.gmra.mxu0 %v2400
        %v2564 = vpop.f32.mrf.mxu0
        %v2565 = vadd.f32 %v2424, %v2564
        %v2566 = vpop.f32.mrf.mxu0
        %v2567 = vpop.f32.mrf.mxu0
        %v2568 = vadd.f32 %v2424, %v2567
        %v2569 = vpop.f32.mrf.mxu0
        %2570 = vdwg.mxu0
        %v2571 = vxor.u32 %v2509, 2147483648
        %v2572 = vxor.u32 %v2512, 2147483648
        %v2573 = vxor.u32 %v2517, 2147483648
        %v2574 = vxor.u32 %v2520, 2147483648
        %v2575 = vxor.u32 %v2525, 2147483648
        %v2576 = vxor.u32 %v2528, 2147483648
        %v2577 = vxor.u32 %v2533, 2147483648
        %v2578 = vxor.u32 %v2536, 2147483648
        %v2579 = vxor.u32 %v2541, 2147483648
        %v2580 = vxor.u32 %v2544, 2147483648
        %v2581 = vxor.u32 %v2549, 2147483648
        %v2582 = vxor.u32 %v2552, 2147483648
        %v2583 = vxor.u32 %v2557, 2147483648
        %v2584 = vxor.u32 %v2560, 2147483648
        %v2585 = vxor.u32 %v2565, 2147483648
        %v2586 = vxor.u32 %v2568, 2147483648
        %v2587 = vmul.f32 %v2571, 1.442695
        %v2588 = vpow.pop %v2587
        %v2589 = vmul.f32 %v2572, 1.442695
        %v2590 = vpow.pop %v2589
        %v2591 = vmul.f32 %v2573, 1.442695
        %v2592 = vpow.pop %v2591
        %v2593 = vmul.f32 %v2574, 1.442695
        %v2594 = vpow.pop %v2593
        %v2595 = vmul.f32 %v2575, 1.442695
        %v2596 = vpow.pop %v2595
        %v2597 = vmul.f32 %v2576, 1.442695
        %v2598 = vpow.pop %v2597
        %v2599 = vmul.f32 %v2577, 1.442695
        %v2600 = vpow.pop %v2599
        %v2601 = vmul.f32 %v2578, 1.442695
        %v2602 = vpow.pop %v2601
        %v2603 = vmul.f32 %v2579, 1.442695
        %v2604 = vpow.pop %v2603
        %v2605 = vmul.f32 %v2580, 1.442695
        %v2606 = vpow.pop %v2605
        %v2607 = vmul.f32 %v2581, 1.442695
        %v2608 = vpow.pop %v2607
        %v2609 = vmul.f32 %v2582, 1.442695
        %v2610 = vpow.pop %v2609
        %v2611 = vmul.f32 %v2583, 1.442695
        %v2612 = vpow.pop %v2611
        %v2613 = vmul.f32 %v2584, 1.442695
        %v2614 = vpow.pop %v2613
        %v2615 = vmul.f32 %v2585, 1.442695
        %v2616 = vpow.pop %v2615
        %v2617 = vmul.f32 %v2586, 1.442695
        %v2618 = vpow.pop %v2617
        %v2619 = vadd.f32 %v2588, 1.0
        %v2620 = vadd.f32 %v2590, 1.0
        %v2621 = vadd.f32 %v2592, 1.0
        %v2622 = vadd.f32 %v2594, 1.0
        %v2623 = vadd.f32 %v2596, 1.0
        %v2624 = vadd.f32 %v2598, 1.0
        %v2625 = vadd.f32 %v2600, 1.0
        %v2626 = vadd.f32 %v2602, 1.0
        %v2627 = vadd.f32 %v2604, 1.0
        %v2628 = vadd.f32 %v2606, 1.0
        %v2629 = vadd.f32 %v2608, 1.0
        %v2630 = vadd.f32 %v2610, 1.0
        %v2631 = vadd.f32 %v2612, 1.0
        %v2632 = vadd.f32 %v2614, 1.0
        %v2633 = vadd.f32 %v2616, 1.0
        %v2634 = vadd.f32 %v2618, 1.0
        %v2635 = vrcp.pop %v2619
        %v2636 = vmul.f32 1.0, %v2635
        %v2637 = vrcp.pop %v2620
        %v2638 = vmul.f32 1.0, %v2637
        %v2639 = vrcp.pop %v2621
        %v2640 = vmul.f32 1.0, %v2639
        %v2641 = vrcp.pop %v2622
        %v2642 = vmul.f32 1.0, %v2641
        %v2643 = vrcp.pop %v2623
        %v2644 = vmul.f32 1.0, %v2643
        %v2645 = vrcp.pop %v2624
        %v2646 = vmul.f32 1.0, %v2645
        %v2647 = vrcp.pop %v2625
        %v2648 = vmul.f32 1.0, %v2647
        %v2649 = vrcp.pop %v2626
        %v2650 = vmul.f32 1.0, %v2649
        %v2651 = vrcp.pop %v2627
        %v2652 = vmul.f32 1.0, %v2651
        %v2653 = vrcp.pop %v2628
        %v2654 = vmul.f32 1.0, %v2653
        %v2655 = vrcp.pop %v2629
        %v2656 = vmul.f32 1.0, %v2655
        %v2657 = vrcp.pop %v2630
        %v2658 = vmul.f32 1.0, %v2657
        %v2659 = vrcp.pop %v2631
        %v2660 = vmul.f32 1.0, %v2659
        %v2661 = vrcp.pop %v2632
        %v2662 = vmul.f32 1.0, %v2661
        %v2663 = vrcp.pop %v2633
        %v2664 = vmul.f32 1.0, %v2663
        %v2665 = vrcp.pop %v2634
        %v2666 = vmul.f32 1.0, %v2665
        %2667 = vst [vmem:[%s217] sm:$0xff] %v2636
        %2668 = vst [vmem:[%s217 + $0x8] sm:$0xff] %v2638
        %2669 = vst [vmem:[%s217 + $0x10] sm:$0xff] %v2640
        %2670 = vst [vmem:[%s217 + $0x18] sm:$0xff] %v2642
        %2671 = vst [vmem:[%s217 + $0x20] sm:$0xff] %v2644
        %2672 = vst [vmem:[%s217 + $0x28] sm:$0xff] %v2646
        %2673 = vst [vmem:[%s217 + $0x30] sm:$0xff] %v2648
        %2674 = vst [vmem:[%s217 + $0x38] sm:$0xff] %v2650
        %2675 = vst [vmem:[%s217 + $0x40] sm:$0xff] %v2652
        %2676 = vst [vmem:[%s217 + $0x48] sm:$0xff] %v2654
        %2677 = vst [vmem:[%s217 + $0x50] sm:$0xff] %v2656
        %2678 = vst [vmem:[%s217 + $0x58] sm:$0xff] %v2658
        %2679 = vst [vmem:[%s217 + $0x60] sm:$0xff] %v2660
        %2680 = vst [vmem:[%s217 + $0x68] sm:$0xff] %v2662
        %2681 = vst [vmem:[%s217 + $0x70] sm:$0xff] %v2664
        %2682 = vst [vmem:[%s217 + $0x78] sm:$0xff] %v2666
        %s2683 = sand.u32 %s97, 1
        %s2684 = scalar_lea.sflag [#allocation4], %s2683
        %s2685 = sand.u32 %s97, 1
        %s2686 = smul.addr %s2685, 128
        %s2687 = scalar_lea.vmem [#allocation8], %s2686
        // Predicated region
        $region45: #{tpu_custom_call.1} parent=31 // pred_check
          %p2688 = pneg %p107
        $region46: #{tpu_custom_call.1} parent=31 // pred_check_branch
          %2690 = sbr.rel (%p2688) target = $region48
        $region47: #{tpu_custom_call.1} parent=31 // pred_region
          %s2691 = smul.u32 16, %s21
          %s2693 = ssub.s32 2048, 2048
          %2694 = vsyncadd %s2684, %s2693
          %s2695 = smul.addr %s2691, 128
          %s2696 = scalar_lea.hbm %s3, %s2695
          %s2697 = sshll.u32 %s2687, 4
          %s2698 = int_to_ptr.vmem [resolvable:$true] %s2697
          %2703 = dma.vmem_to_hbm [thread:$0]  %s2698, 2048, %s2696, %s2684, 128, 128, 8
        $region48: #{tpu_custom_call.1} parent=31 // pred_fallthru
          _
      $region32: #{tpu_custom_call.1} parent=5 // pred_fallthru
        _
      %p2704 = scmp.le.s32.totalorder 2, %s16
      // Predicated region
      $region49: #{tpu_custom_call.1} parent=5 // pred_check
        %p2705 = pneg %p2704
      $region50: #{tpu_custom_call.1} parent=5 // pred_check_branch
        %2707 = sbr.rel (%p2705) target = $region52
      $region51: #{tpu_custom_call.1} parent=5 // pred_region
        %s2708 = ssub.s32 %s16, 2
        // Predicated region
        $region53: #{tpu_custom_call.1} parent=51 // pred_check
          %p2709 = pneg %p113
        $region54: #{tpu_custom_call.1} parent=51 // pred_check_branch
          %2711 = sbr.rel (%p2709) target = $region56
        $region55: #{tpu_custom_call.1} parent=51 // pred_region
          %s2712 = sand.u32 %s98, 1
          %s2713 = scalar_lea.sflag [#allocation4], %s2712
          %s2714 = sand.u32 %s98, 1
          %s2715 = smul.addr %s2714, 128
          %s2716 = scalar_lea.vmem [#allocation8], %s2715
          %2717 = dma.done %s2713, 2048
        $region56: #{tpu_custom_call.1} parent=51 // pred_fallthru
          _
      $region52: #{tpu_custom_call.1} parent=5 // pred_fallthru
        _
    $region6: #{tpu_custom_call.1} parent=1 // loop_footer
      %s20 = sadd.s32 1, %s16
    $region7: #{tpu_custom_call.1} parent=1 // loop_footer_branch
      %15 = sbr.rel target = $region3
    $region8: #{tpu_custom_call.1} parent=1 // loop_exit
      _
    %2718 = vsyncpa [#allocation3], 1
    %s2719 = scalar_lea.sflag [#allocation3], 1
    %2720 = vsyncpa %s2719, 1
    %2721 = vsyncpa [#allocation6], 1
    %2722 = vsyncpa [#allocation4], 1
    %s2723 = scalar_lea.sflag [#allocation4], 1
    %2724 = vsyncpa %s2723, 1

// kernel: tpu_custom_call.1
$region0: #{tpu_custom_call.1}
  #allocation0 [shape = 'u32[]', space=smem, size = 0x4, offset = 0x4, fixed_abs, tag = 'smem constant byte address 0x4 - core index']
  #allocation1 [shape = 'u32[144,128]{1,0:T(1,128)}', space=vmem, size = 0x12000, scoped, tag = 'internal scratch']
  %s0 = inlined_call_operand.hbm [shape: bf16[256,128], index: 0, kind: input, shape index: {}]
  %s1 = inlined_call_operand.hbm [shape: bf16[12,128,128], index: 1, kind: input, shape index: {}]
  %s2 = inlined_call_operand.hbm [shape: f32[12,1,128], index: 2, kind: input, shape index: {}]
  %s3 = inlined_call_operand.hbm [shape: f32[256,128], index: 3, kind: output, shape index: {}]
  %s4 = sld [smem:[#allocation0]]
  $region57: #{tpu_custom_call.1} parent=0
    _
  %s6 = ssub.s32 1, %s4
  %s7 = scalar_select 0, %s6, %s4
  $region1: #{tpu_custom_call.1} parent=0
    #allocation2 [shape = 'u8[65536]{0}', space=vmem, size = 0x10000, scoped, tag = 'input window, operand 0']
    #allocation3 [shape = 's32[2]{0}', space=sflag, size = 0x8, scoped, tag = 'scoped memory for tpu_custom_call.1']
    #allocation4 [shape = 's32[2]{0}', space=sflag, size = 0x8, scoped, tag = 'scoped memory for tpu_custom_call.1']
    #allocation5 [shape = 'u8[393216]{0}', space=vmem, size = 0x60000, scoped, tag = 'input window, operand 1, single buffered']
    #allocation6 [shape = 's32[1]{0}', space=sflag, size = 0x4, scoped, tag = 'scoped memory for tpu_custom_call.1']
    #allocation7 [shape = 'u8[6144]{0}', space=vmem, size = 0x1800, scoped, tag = 'input window, operand 2, single buffered']
    #allocation8 [shape = 'u8[131072]{0}', space=vmem, size = 0x20000, scoped, tag = 'output window, operand 0']
    %8 = vsyncpa [#allocation3], 0
    %s9 = scalar_lea.sflag [#allocation3], 1
    %10 = vsyncpa %s9, 0
    %11 = vsyncpa [#allocation6], 0
    %12 = vsyncpa [#allocation4], 0
    %s13 = scalar_lea.sflag [#allocation4], 1
    %14 = vsyncpa %s13, 0
    loop: start=0, step=1, limit=4
    $region2: #{tpu_custom_call.1} parent=1 // loop_pre_header
      _
    $region3: #{tpu_custom_call.1} parent=1 // loop_header
      %s16 = sphi 0, %s20
      %p17 = scmp.ge.s32.totalorder %s16, 4
      %s26 = sphi 0, %s28
      %s29 = sphi 0, %s26
      %s30 = sphi 0, %s29
      %s46 = sphi 0, %s30
      %s50 = sphi 0, %s50
      %s52 = sphi 0, %s50
      %s53 = sphi 0, %s52
      %s67 = sphi 0, %s53
      %s71 = sphi 0, %s71
      %s73 = sphi 0, %s71
      %s74 = sphi 0, %s73
      %s88 = sphi 0, %s74
      %s94 = sphi 0, %s96
      %s97 = sphi 0, %s94
      %s98 = sphi 0, %s97
      %s114 = sphi 0, %s98
    $region4: #{tpu_custom_call.1} parent=1 // loop_header_branch
      %19 = sbr.rel (%p17) target = $region8
    $region5: #{tpu_custom_call.1} parent=1 // loop_body
      %s21 = ssub.s32 %s16, 1
      %s22 = ssub.s32 %s16, 2
      %s23 = sadd.s32 %s16, 1
      %s24 = ssub.s32 %s16, %s23
      %p25 = scmp.eq.s32.totalorder %s24, 0
      %s27 = sadd.s32 %s26, 1
      %s28 = scalar_select %p25, %s26, %s27
      %p31 = pneg %p25
      %p32 = scmp.eq.s32.totalorder %s16, 1
      %p33 = por %p31, %p32
      %p34 = scmp.ne.s32.totalorder %s26, %s29
      %p35 = scmp.eq.s32.totalorder %s16, 0
      %p36 = por %p34, %p35
      %p37 = scmp.ne.s32.totalorder %s26, %s29
      %p38 = scmp.eq.s32.totalorder %s21, 1
      %p39 = por %p37, %p38
      %p40 = scmp.ne.s32.totalorder %s29, %s30
      %p41 = scmp.eq.s32.totalorder %s21, 0
      %p42 = por %p40, %p41
      %p43 = scmp.ne.s32.totalorder %s29, %s30
      %p44 = scmp.eq.s32.totalorder %s22, 1
      %p45 = por %p43, %p44
      %p47 = scmp.ne.s32.totalorder %s30, %s46
      %p48 = scmp.eq.s32.totalorder %s22, 0
      %p49 = por %p47, %p48
      %s51 = sadd.s32 %s50, 1
      %p54 = scmp.eq.s32.totalorder %s16, 1
      %p55 = scmp.ne.s32.totalorder %s50, %s52
      %p56 = scmp.eq.s32.totalorder %s16, 0
      %p57 = por %p55, %p56
      %p58 = scmp.ne.s32.totalorder %s50, %s52
      %p59 = scmp.eq.s32.totalorder %s21, 1
      %p60 = por %p58, %p59
      %p61 = scmp.ne.s32.totalorder %s52, %s53
      %p62 = scmp.eq.s32.totalorder %s21, 0
      %p63 = por %p61, %p62
      %p64 = scmp.ne.s32.totalorder %s52, %s53
      %p65 = scmp.eq.s32.totalorder %s22, 1
      %p66 = por %p64, %p65
      %p68 = scmp.ne.s32.totalorder %s53, %s67
      %p69 = scmp.eq.s32.totalorder %s22, 0
      %p70 = por %p68, %p69
      %s72 = sadd.s32 %s71, 1
      %p75 = scmp.eq.s32.totalorder %s16, 1
      %p76 = scmp.ne.s32.totalorder %s71, %s73
      %p77 = scmp.eq.s32.totalorder %s16, 0
      %p78 = por %p76, %p77
      %p79 = scmp.ne.s32.totalorder %s71, %s73
      %p80 = scmp.eq.s32.totalorder %s21, 1
      %p81 = por %p79, %p80
      %p82 = scmp.ne.s32.totalorder %s73, %s74
      %p83 = scmp.eq.s32.totalorder %s21, 0
      %p84 = por %p82, %p83
      %p85 = scmp.ne.s32.totalorder %s73, %s74
      %p86 = scmp.eq.s32.totalorder %s22, 1
      %p87 = por %p85, %p86
      %p89 = scmp.ne.s32.totalorder %s74, %s88
      %p90 = scmp.eq.s32.totalorder %s22, 0
      %p91 = por %p89, %p90
      %s92 = ssub.s32 %s16, %s23
      %p93 = scmp.eq.s32.totalorder %s92, 0
      %s95 = sadd.s32 %s94, 1
      %s96 = scalar_select %p93, %s94, %s95
      %p99 = pneg %p93
      %p100 = scmp.eq.s32.totalorder %s16, 1
      %p101 = por %p99, %p100
      %p102 = scmp.ne.s32.totalorder %s94, %s97
      %p103 = scmp.eq.s32.totalorder %s16, 0
      %p104 = por %p102, %p103
      %p105 = scmp.ne.s32.totalorder %s94, %s97
      %p106 = scmp.eq.s32.totalorder %s21, 1
      %p107 = por %p105, %p106
      %p108 = scmp.ne.s32.totalorder %s97, %s98
      %p109 = scmp.eq.s32.totalorder %s21, 0
      %p110 = por %p108, %p109
      %p111 = scmp.ne.s32.totalorder %s97, %s98
      %p112 = scmp.eq.s32.totalorder %s22, 1
      %p113 = por %p111, %p112
      %p115 = scmp.ne.s32.totalorder %s98, %s114
      %p116 = scmp.eq.s32.totalorder %s22, 0
      %p117 = por %p115, %p116
      %p118 = scmp.le.s32.totalorder 1, %s16
      %p119 = scmp.lt.s32.totalorder %s16, 3
      %p120 = pnand %p118, %p119
      %p121 = pneg %p120
      // Predicated region
      $region9: #{tpu_custom_call.1} parent=5 // pred_check
        _
      $region10: #{tpu_custom_call.1} parent=5 // pred_check_branch
        %123 = sbr.rel (%p120) target = $region12
      $region11: #{tpu_custom_call.1} parent=5 // pred_region
        %s124 = ssub.s32 %s16, 1
        // Predicated region
        $region13: #{tpu_custom_call.1} parent=11 // pred_check
          %p125 = pneg %p63
        $region14: #{tpu_custom_call.1} parent=11 // pred_check_branch
          %127 = sbr.rel (%p125) target = $region16
        $region15: #{tpu_custom_call.1} parent=11 // pred_region
          %s129 = ssub.s32 12288, 12288
          %130 = vsyncadd [#allocation6], %s129
          %s131 = sshll.u32 [#allocation5], 4
          %s132 = int_to_ptr.vmem [resolvable:$true] %s131
          %137 = dma.hbm_to_vmem [thread:$0]  %s1, 12288, %s132, [#allocation6], 64, 64, 4
        $region16: #{tpu_custom_call.1} parent=11 // pred_fallthru
          _
        // Predicated region
        $region17: #{tpu_custom_call.1} parent=11 // pred_check
          %p138 = pneg %p84
        $region18: #{tpu_custom_call.1} parent=11 // pred_check_branch
          %140 = sbr.rel (%p138) target = $region20
        $region19: #{tpu_custom_call.1} parent=11 // pred_region
          %s142 = ssub.s32 192, 192
          %143 = vsyncadd [#allocation6], %s142
          %s144 = sshll.u32 [#allocation7], 4
          %s145 = int_to_ptr.vmem [resolvable:$true] %s144
          %150 = dma.hbm_to_vmem [thread:$0]  %s2, 192, %s145, [#allocation6], 16, 16, 1
        $region20: #{tpu_custom_call.1} parent=11 // pred_fallthru
          _
      $region12: #{tpu_custom_call.1} parent=5 // pred_fallthru
        _
      %p151 = scmp.lt.s32.totalorder %s16, 2
      // Predicated region
      $region21: #{tpu_custom_call.1} parent=5 // pred_check
        %p152 = pneg %p151
      $region22: #{tpu_custom_call.1} parent=5 // pred_check_branch
        %154 = sbr.rel (%p152) target = $region24
      $region23: #{tpu_custom_call.1} parent=5 // pred_region
        // Predicated region
        $region25: #{tpu_custom_call.1} parent=23 // pred_check
          %p155 = pneg %p36
        $region26: #{tpu_custom_call.1} parent=23 // pred_check_branch
          %157 = sbr.rel (%p155) target = $region28
        $region27: #{tpu_custom_call.1} parent=23 // pred_region
          %s158 = sand.u32 %s26, 1
          %s159 = scalar_lea.sflag [#allocation3], %s158
          %s160 = sand.u32 %s26, 1
          %s161 = smul.addr %s160, 64
          %s162 = scalar_lea.vmem [#allocation2], %s161
          %s163 = smul.u32 16, %s16
          %s165 = ssub.s32 1024, 1024
          %166 = vsyncadd %s159, %s165
          %s167 = smul.addr %s163, 64
          %s168 = scalar_lea.hbm %s0, %s167
          %s169 = sshll.u32 %s162, 4
          %s170 = int_to_ptr.vmem [resolvable:$true] %s169
          %175 = dma.hbm_to_vmem [thread:$0]  %s168, 1024, %s170, %s159, 64, 64, 4
        $region28: #{tpu_custom_call.1} parent=23 // pred_fallthru
          _
      $region24: #{tpu_custom_call.1} parent=5 // pred_fallthru
        _
      %p176 = scmp.le.s32.totalorder 1, %s16
      %p177 = scmp.lt.s32.totalorder %s16, 3
      %p178 = pnand %p176, %p177
      %p179 = pneg %p178
      // Predicated region
      $region29: #{tpu_custom_call.1} parent=5 // pred_check
        _
      $region30: #{tpu_custom_call.1} parent=5 // pred_check_branch
        %181 = sbr.rel (%p178) target = $region32
      $region31: #{tpu_custom_call.1} parent=5 // pred_region
        %s182 = ssub.s32 %s16, 1
        %s183 = sand.u32 %s29, 1
        %s184 = scalar_lea.sflag [#allocation3], %s183
        %s185 = sand.u32 %s29, 1
        %s186 = smul.addr %s185, 64
        %s187 = scalar_lea.vmem [#allocation2], %s186
        // Predicated region
        $region33: #{tpu_custom_call.1} parent=31 // pred_check
          %p188 = pneg %p42
        $region34: #{tpu_custom_call.1} parent=31 // pred_check_branch
          %190 = sbr.rel (%p188) target = $region36
        $region35: #{tpu_custom_call.1} parent=31 // pred_region
          %191 = dma.done %s184, 1024
        $region36: #{tpu_custom_call.1} parent=31 // pred_fallthru
          _
        // Predicated region
        $region37: #{tpu_custom_call.1} parent=31 // pred_check
          %p192 = pneg %p63
        $region38: #{tpu_custom_call.1} parent=31 // pred_check_branch
          %194 = sbr.rel (%p192) target = $region40
        $region39: #{tpu_custom_call.1} parent=31 // pred_region
          %195 = dma.done [#allocation6], 12288
        $region40: #{tpu_custom_call.1} parent=31 // pred_fallthru
          _
        // Predicated region
        $region41: #{tpu_custom_call.1} parent=31 // pred_check
          %p196 = pneg %p84
        $region42: #{tpu_custom_call.1} parent=31 // pred_check_branch
          %198 = sbr.rel (%p196) target = $region44
        $region43: #{tpu_custom_call.1} parent=31 // pred_region
          %199 = dma.done [#allocation6], 192
        $region44: #{tpu_custom_call.1} parent=31 // pred_fallthru
          _
        %s200 = sand.u32 %s29, 1
        %s201 = scalar_lea.sflag [#allocation3], %s200
        %s202 = sand.u32 %s29, 1
        %s203 = smul.addr %s202, 64
        %s204 = scalar_lea.vmem [#allocation2], %s203
        %p205 = pneg %p42
        %p206 = pneg %p39
        %p207 = pneg %p63
        %p208 = pneg %p60
        %p209 = pneg %p84
        %p210 = pneg %p81
        %p211 = pneg %p110
        %p212 = pneg %p107
        %s213 = sand.u32 %s97, 1
        %s214 = scalar_lea.sflag [#allocation4], %s213
        %s215 = sand.u32 %s97, 1
        %s216 = smul.addr %s215, 128
        %s217 = scalar_lea.vmem [#allocation8], %s216
        %s218 = smul.u32 16, %s21
        %s219 = smul.u32 16, %s21
        %v221 = vld [vmem:[%s187] sm:$0xf]
        %v222 = vld [vmem:[%s187 + $0x4] sm:$0xf]
        %v223 = vld [vmem:[%s187 + $0x8] sm:$0xf]
        %v224 = vld [vmem:[%s187 + $0xc] sm:$0xf]
        %v225 = vld [vmem:[%s187 + $0x10] sm:$0xf]
        %v226 = vld [vmem:[%s187 + $0x14] sm:$0xf]
        %v227 = vld [vmem:[%s187 + $0x18] sm:$0xf]
        %v228 = vld [vmem:[%s187 + $0x1c] sm:$0xf]
        %v229 = vld [vmem:[%s187 + $0x20] sm:$0xf]
        %v230 = vld [vmem:[%s187 + $0x24] sm:$0xf]
        %v231 = vld [vmem:[%s187 + $0x28] sm:$0xf]
        %v232 = vld [vmem:[%s187 + $0x2c] sm:$0xf]
        %v233 = vld [vmem:[%s187 + $0x30] sm:$0xf]
        %v234 = vld [vmem:[%s187 + $0x34] sm:$0xf]
        %v235 = vld [vmem:[%s187 + $0x38] sm:$0xf]
        %v236 = vld [vmem:[%s187 + $0x3c] sm:$0xf]
        %v237 = vld [vmem:[#allocation5] sm:$0xf]
        %v238 = vld [vmem:[#allocation5 + $0x4] sm:$0xf]
        %v239 = vld [vmem:[#allocation5 + $0x8] sm:$0xf]
        %v240 = vld [vmem:[#allocation5 + $0xc] sm:$0xf]
        %v241 = vld [vmem:[#allocation5 + $0x10] sm:$0xf]
        %v242 = vld [vmem:[#allocation5 + $0x14] sm:$0xf]
        %v243 = vld [vmem:[#allocation5 + $0x18] sm:$0xf]
        %v244 = vld [vmem:[#allocation5 + $0x1c] sm:$0xf]
        %v245 = vld [vmem:[#allocation5 + $0x20] sm:$0xf]
        %v246 = vld [vmem:[#allocation5 + $0x24] sm:$0xf]
        %v247 = vld [vmem:[#allocation5 + $0x28] sm:$0xf]
        %v248 = vld [vmem:[#allocation5 + $0x2c] sm:$0xf]
        %v249 = vld [vmem:[#allocation5 + $0x30] sm:$0xf]
        %v250 = vld [vmem:[#allocation5 + $0x34] sm:$0xf]
        %v251 = vld [vmem:[#allocation5 + $0x38] sm:$0xf]
        %v252 = vld [vmem:[#allocation5 + $0x3c] sm:$0xf]
        %v253 = vld [vmem:[#allocation7] sm:$0x1]
        %v255 = vlaneseq
        %v256 = vshrl.u32 %v255, 7
        %v257 = vsub.s32 0, %v256
        %v258 = vrot.slane %v253, %v257
        %v276 = vunpack.c.l.b16 %v221
        %v277 = vunpack.c.l.b16 %v222
        %v278 = vunpack.c.l.b16 %v223
        %v279 = vunpack.c.l.b16 %v224
        %v280 = vunpack.c.l.b16 %v225
        %v281 = vunpack.c.l.b16 %v226
        %v282 = vunpack.c.l.b16 %v227
        %v283 = vunpack.c.l.b16 %v228
        %v284 = vunpack.c.l.b16 %v229
        %v285 = vunpack.c.l.b16 %v230
        %v286 = vunpack.c.l.b16 %v231
        %v287 = vunpack.c.l.b16 %v232
        %v288 = vunpack.c.l.b16 %v233
        %v289 = vunpack.c.l.b16 %v234
        %v290 = vunpack.c.l.b16 %v235
        %v291 = vunpack.c.l.b16 %v236
        %v292 = vpack.c.b16 %v277, %v276
        %v293 = vpack.c.b16 %v279, %v278
        %v294 = vpack.c.b16 %v281, %v280
        %v295 = vpack.c.b16 %v283, %v282
        %v296 = vpack.c.b16 %v285, %v284
        %v297 = vpack.c.b16 %v287, %v286
        %v298 = vpack.c.b16 %v289, %v288
        %v299 = vpack.c.b16 %v291, %v290
        %v324 = vunpack.c.l.b16 %v237
        %v325 = vunpack.c.l.b16 %v238
        %v326 = vunpack.c.l.b16 %v239
        %v327 = vunpack.c.l.b16 %v240
        %v328 = vunpack.c.l.b16 %v241
        %v329 = vunpack.c.l.b16 %v242
        %v330 = vunpack.c.l.b16 %v243
        %v331 = vunpack.c.l.b16 %v244
        %v332 = vunpack.c.l.b16 %v245
        %v333 = vunpack.c.l.b16 %v246
        %v334 = vunpack.c.l.b16 %v247
        %v335 = vunpack.c.l.b16 %v248
        %v336 = vunpack.c.l.b16 %v249
        %v337 = vunpack.c.l.b16 %v250
        %v338 = vunpack.c.l.b16 %v251
        %v339 = vunpack.c.l.b16 %v252
        %v340 = vpack.c.b16 %v325, %v324
        %v341 = vpack.c.b16 %v327, %v326
        %v342 = vpack.c.b16 %v329, %v328
        %v343 = vpack.c.b16 %v331, %v330
        %v344 = vpack.c.b16 %v333, %v332
        %v345 = vpack.c.b16 %v335, %v334
        %v346 = vpack.c.b16 %v337, %v336
        %v347 = vpack.c.b16 %v339, %v338
        %356 = vmatprep.subr.bf16.mxu0 0
        %357 = vmatpush1.bf16.msra.mxu0 %v347
        %358 = vmatprep.subr.bf16.mxu0 0
        %359 = vmatpush1.bf16.msra.mxu0 %v346
        %360 = vmatprep.subr.bf16.mxu0 0
        %361 = vmatpush1.bf16.msra.mxu0 %v345
        %362 = vmatprep.subr.bf16.mxu0 0
        %363 = vmatpush1.bf16.msra.mxu0 %v344
        %364 = vmatprep.subr.bf16.mxu0 0
        %365 = vmatpush1.bf16.msra.mxu0 %v343
        %366 = vmatprep.subr.bf16.mxu0 0
        %367 = vmatpush1.bf16.msra.mxu0 %v342
        %368 = vmatprep.subr.bf16.mxu0 0
        %369 = vmatpush1.bf16.msra.mxu0 %v341
        %370 = vmatprep.subr.bf16.mxu0 0
        %371 = vmatpush1.bf16.msra.mxu0 %v340
        %372 = vmatprep.subr.bf16.mxu0 0
        %373 = vmatpush2.bf16.msra.mxu0 0
        %374 = vmatprep.subr.bf16.mxu0 0
        %375 = vmatpush2.bf16.msra.mxu0 0
        %376 = vmatprep.subr.bf16.mxu0 0
        %377 = vmatpush2.bf16.msra.mxu0 0
        %378 = vmatprep.subr.bf16.mxu0 0
        %379 = vmatpush2.bf16.msra.mxu0 0
        %380 = vmatprep.subr.bf16.mxu0 0
        %381 = vmatpush2.bf16.msra.mxu0 0
        %382 = vmatprep.subr.bf16.mxu0 0
        %383 = vmatpush2.bf16.msra.mxu0 0
        %384 = vmatprep.subr.bf16.mxu0 0
        %385 = vmatpush2.bf16.msra.mxu0 0
        %386 = vmatprep.subr.bf16.mxu0 0
        %387 = vmatpush2.bf16.msra.mxu0 0
        %388 = vmatprep.mubr.bf16.mxu0 0
        %389 = vmatmul.mubr.bf16.gmra.mxu0 %v292
        %v390 = vpop.f32.mrf.mxu0
        %v391 = vadd.f32 %v258, %v390
        %v392 = vpop.f32.mrf.mxu0
        %v393 = vpop.f32.mrf.mxu0
        %v394 = vadd.f32 %v258, %v393
        %v395 = vpop.f32.mrf.mxu0
        %396 = vmatprep.mubr.bf16.mxu0 0
        %397 = vmatmul.mubr.bf16.gmra.mxu0 %v293
        %v398 = vpop.f32.mrf.mxu0
        %v399 = vadd.f32 %v258, %v398
        %v400 = vpop.f32.mrf.mxu0
        %v401 = vpop.f32.mrf.mxu0
        %v402 = vadd.f32 %v258, %v401
        %v403 = vpop.f32.mrf.mxu0
        %404 = vmatprep.mubr.bf16.mxu0 0
        %405 = vmatmul.mubr.bf16.gmra.mxu0 %v294
        %v406 = vpop.f32.mrf.mxu0
        %v407 = vadd.f32 %v258, %v406
        %v408 = vpop.f32.mrf.mxu0
        %v409 = vpop.f32.mrf.mxu0
        %v410 = vadd.f32 %v258, %v409
        %v411 = vpop.f32.mrf.mxu0
        %412 = vmatprep.mubr.bf16.mxu0 0
        %413 = vmatmul.mubr.bf16.gmra.mxu0 %v295
        %v414 = vpop.f32.mrf.mxu0
        %v415 = vadd.f32 %v258, %v414
        %v416 = vpop.f32.mrf.mxu0
        %v417 = vpop.f32.mrf.mxu0
        %v418 = vadd.f32 %v258, %v417
        %v419 = vpop.f32.mrf.mxu0
        %420 = vmatprep.mubr.bf16.mxu0 0
        %421 = vmatmul.mubr.bf16.gmra.mxu0 %v296
        %v422 = vpop.f32.mrf.mxu0
        %v423 = vadd.f32 %v258, %v422
        %v424 = vpop.f32.mrf.mxu0
        %v425 = vpop.f32.mrf.mxu0
        %v426 = vadd.f32 %v258, %v425
        %v427 = vpop.f32.mrf.mxu0
        %428 = vmatprep.mubr.bf16.mxu0 0
        %429 = vmatmul.mubr.bf16.gmra.mxu0 %v297
        %v430 = vpop.f32.mrf.mxu0
        %v431 = vadd.f32 %v258, %v430
        %v432 = vpop.f32.mrf.mxu0
        %v433 = vpop.f32.mrf.mxu0
        %v434 = vadd.f32 %v258, %v433
        %v435 = vpop.f32.mrf.mxu0
        %436 = vmatprep.mubr.bf16.mxu0 0
        %437 = vmatmul.mubr.bf16.gmra.mxu0 %v298
        %v438 = vpop.f32.mrf.mxu0
        %v439 = vadd.f32 %v258, %v438
        %v440 = vpop.f32.mrf.mxu0
        %v441 = vpop.f32.mrf.mxu0
        %v442 = vadd.f32 %v258, %v441
        %v443 = vpop.f32.mrf.mxu0
        %444 = vmatprep.mubr.bf16.mxu0 0
        %445 = vmatmul.mubr.bf16.gmra.mxu0 %v299
        %v446 = vpop.f32.mrf.mxu0
        %v447 = vadd.f32 %v258, %v446
        %v448 = vpop.f32.mrf.mxu0
        %v449 = vpop.f32.mrf.mxu0
        %v450 = vadd.f32 %v258, %v449
        %v451 = vpop.f32.mrf.mxu0
        %452 = vdwg.mxu0
        %v453 = vmax.f32 %v391, 0.0
        %v454 = vmax.f32 %v394, 0.0
        %v455 = vmax.f32 %v399, 0.0
        %v456 = vmax.f32 %v402, 0.0
        %v457 = vmax.f32 %v407, 0.0
        %v458 = vmax.f32 %v410, 0.0
        %v459 = vmax.f32 %v415, 0.0
        %v460 = vmax.f32 %v418, 0.0
        %v461 = vmax.f32 %v423, 0.0
        %v462 = vmax.f32 %v426, 0.0
        %v463 = vmax.f32 %v431, 0.0
        %v464 = vmax.f32 %v434, 0.0
        %v465 = vmax.f32 %v439, 0.0
        %v466 = vmax.f32 %v442, 0.0
        %v467 = vmax.f32 %v447, 0.0
        %v468 = vmax.f32 %v450, 0.0
        %v469 = vpack.c.bf16 %v454, %v453
        %v470 = vpack.c.bf16 %v456, %v455
        %v471 = vpack.c.bf16 %v458, %v457
        %v472 = vpack.c.bf16 %v460, %v459
        %v473 = vpack.c.bf16 %v462, %v461
        %v474 = vpack.c.bf16 %v464, %v463
        %v475 = vpack.c.bf16 %v466, %v465
        %v476 = vpack.c.bf16 %v468, %v467
        %s477 = scalar_lea.vmem [#allocation5], 64
        %v478 = vld [vmem:[%s477] sm:$0xf]
        %v479 = vld [vmem:[%s477 + $0x4] sm:$0xf]
        %v480 = vld [vmem:[%s477 + $0x8] sm:$0xf]
        %v481 = vld [vmem:[%s477 + $0xc] sm:$0xf]
        %v482 = vld [vmem:[%s477 + $0x10] sm:$0xf]
        %v483 = vld [vmem:[%s477 + $0x14] sm:$0xf]
        %v484 = vld [vmem:[%s477 + $0x18] sm:$0xf]
        %v485 = vld [vmem:[%s477 + $0x1c] sm:$0xf]
        %v486 = vld [vmem:[%s477 + $0x20] sm:$0xf]
        %v487 = vld [vmem:[%s477 + $0x24] sm:$0xf]
        %v488 = vld [vmem:[%s477 + $0x28] sm:$0xf]
        %v489 = vld [vmem:[%s477 + $0x2c] sm:$0xf]
        %v490 = vld [vmem:[%s477 + $0x30] sm:$0xf]
        %v491 = vld [vmem:[%s477 + $0x34] sm:$0xf]
        %v492 = vld [vmem:[%s477 + $0x38] sm:$0xf]
        %v493 = vld [vmem:[%s477 + $0x3c] sm:$0xf]
        %s494 = scalar_lea.vmem [#allocation7], 1
        %v495 = vld [vmem:[%s494] sm:$0x1]
        %v497 = vlaneseq
        %v498 = vshrl.u32 %v497, 7
        %v499 = vsub.s32 0, %v498
        %v500 = vrot.slane %v495, %v499
        %v518 = vunpack.c.l.b16 %v478
        %v519 = vunpack.c.l.b16 %v479
        %v520 = vunpack.c.l.b16 %v480
        %v521 = vunpack.c.l.b16 %v481
        %v522 = vunpack.c.l.b16 %v482
        %v523 = vunpack.c.l.b16 %v483
        %v524 = vunpack.c.l.b16 %v484
        %v525 = vunpack.c.l.b16 %v485
        %v526 = vunpack.c.l.b16 %v486
        %v527 = vunpack.c.l.b16 %v487
        %v528 = vunpack.c.l.b16 %v488
        %v529 = vunpack.c.l.b16 %v489
        %v530 = vunpack.c.l.b16 %v490
        %v531 = vunpack.c.l.b16 %v491
        %v532 = vunpack.c.l.b16 %v492
        %v533 = vunpack.c.l.b16 %v493
        %v534 = vpack.c.b16 %v519, %v518
        %v535 = vpack.c.b16 %v521, %v520
        %v536 = vpack.c.b16 %v523, %v522
        %v537 = vpack.c.b16 %v525, %v524
        %v538 = vpack.c.b16 %v527, %v526
        %v539 = vpack.c.b16 %v529, %v528
        %v540 = vpack.c.b16 %v531, %v530
        %v541 = vpack.c.b16 %v533, %v532
        %550 = vmatprep.subr.bf16.mxu0 0
        %551 = vmatpush1.bf16.msra.mxu0 %v541
        %552 = vmatprep.subr.bf16.mxu0 0
        %553 = vmatpush1.bf16.msra.mxu0 %v540
        %554 = vmatprep.subr.bf16.mxu0 0
        %555 = vmatpush1.bf16.msra.mxu0 %v539
        %556 = vmatprep.subr.bf16.mxu0 0
        %557 = vmatpush1.bf16.msra.mxu0 %v538
        %558 = vmatprep.subr.bf16.mxu0 0
        %559 = vmatpush1.bf16.msra.mxu0 %v537
        %560 = vmatprep.subr.bf16.mxu0 0
        %561 = vmatpush1.bf16.msra.mxu0 %v536
        %562 = vmatprep.subr.bf16.mxu0 0
        %563 = vmatpush1.bf16.msra.mxu0 %v535
        %564 = vmatprep.subr.bf16.mxu0 0
        %565 = vmatpush1.bf16.msra.mxu0 %v534
        %566 = vmatprep.subr.bf16.mxu0 0
        %567 = vmatpush2.bf16.msra.mxu0 0
        %568 = vmatprep.subr.bf16.mxu0 0
        %569 = vmatpush2.bf16.msra.mxu0 0
        %570 = vmatprep.subr.bf16.mxu0 0
        %571 = vmatpush2.bf16.msra.mxu0 0
        %572 = vmatprep.subr.bf16.mxu0 0
        %573 = vmatpush2.bf16.msra.mxu0 0
        %574 = vmatprep.subr.bf16.mxu0 0
        %575 = vmatpush2.bf16.msra.mxu0 0
        %576 = vmatprep.subr.bf16.mxu0 0
        %577 = vmatpush2.bf16.msra.mxu0 0
        %578 = vmatprep.subr.bf16.mxu0 0
        %579 = vmatpush2.bf16.msra.mxu0 0
        %580 = vmatprep.subr.bf16.mxu0 0
        %581 = vmatpush2.bf16.msra.mxu0 0
        %582 = vmatprep.mubr.bf16.mxu0 0
        %583 = vmatmul.mubr.bf16.gmra.mxu0 %v469
        %v584 = vpop.f32.mrf.mxu0
        %v585 = vadd.f32 %v500, %v584
        %v586 = vpop.f32.mrf.mxu0
        %v587 = vpop.f32.mrf.mxu0
        %v588 = vadd.f32 %v500, %v587
        %v589 = vpop.f32.mrf.mxu0
        %590 = vmatprep.mubr.bf16.mxu0 0
        %591 = vmatmul.mubr.bf16.gmra.mxu0 %v470
        %v592 = vpop.f32.mrf.mxu0
        %v593 = vadd.f32 %v500, %v592
        %v594 = vpop.f32.mrf.mxu0
        %v595 = vpop.f32.mrf.mxu0
        %v596 = vadd.f32 %v500, %v595
        %v597 = vpop.f32.mrf.mxu0
        %598 = vmatprep.mubr.bf16.mxu0 0
        %599 = vmatmul.mubr.bf16.gmra.mxu0 %v471
        %v600 = vpop.f32.mrf.mxu0
        %v601 = vadd.f32 %v500, %v600
        %v602 = vpop.f32.mrf.mxu0
        %v603 = vpop.f32.mrf.mxu0
        %v604 = vadd.f32 %v500, %v603
        %v605 = vpop.f32.mrf.mxu0
        %606 = vmatprep.mubr.bf16.mxu0 0
        %607 = vmatmul.mubr.bf16.gmra.mxu0 %v472
        %v608 = vpop.f32.mrf.mxu0
        %v609 = vadd.f32 %v500, %v608
        %v610 = vpop.f32.mrf.mxu0
        %v611 = vpop.f32.mrf.mxu0
        %v612 = vadd.f32 %v500, %v611
        %v613 = vpop.f32.mrf.mxu0
        %614 = vmatprep.mubr.bf16.mxu0 0
        %615 = vmatmul.mubr.bf16.gmra.mxu0 %v473
        %v616 = vpop.f32.mrf.mxu0
        %v617 = vadd.f32 %v500, %v616
        %v618 = vpop.f32.mrf.mxu0
        %v619 = vpop.f32.mrf.mxu0
        %v620 = vadd.f32 %v500, %v619
        %v621 = vpop.f32.mrf.mxu0
        %622 = vmatprep.mubr.bf16.mxu0 0
        %623 = vmatmul.mubr.bf16.gmra.mxu0 %v474
        %v624 = vpop.f32.mrf.mxu0
        %v625 = vadd.f32 %v500, %v624
        %v626 = vpop.f32.mrf.mxu0
        %v627 = vpop.f32.mrf.mxu0
        %v628 = vadd.f32 %v500, %v627
        %v629 = vpop.f32.mrf.mxu0
        %630 = vmatprep.mubr.bf16.mxu0 0
        %631 = vmatmul.mubr.bf16.gmra.mxu0 %v475
        %v632 = vpop.f32.mrf.mxu0
        %v633 = vadd.f32 %v500, %v632
        %v634 = vpop.f32.mrf.mxu0
        %v635 = vpop.f32.mrf.mxu0
        %v636 = vadd.f32 %v500, %v635
        %v637 = vpop.f32.mrf.mxu0
        %638 = vmatprep.mubr.bf16.mxu0 0
        %639 = vmatmul.mubr.bf16.gmra.mxu0 %v476
        %v640 = vpop.f32.mrf.mxu0
        %v641 = vadd.f32 %v500, %v640
        %v642 = vpop.f32.mrf.mxu0
        %v643 = vpop.f32.mrf.mxu0
        %v644 = vadd.f32 %v500, %v643
        %v645 = vpop.f32.mrf.mxu0
        %646 = vdwg.mxu0
        %v647 = vmax.f32 %v585, 0.0
        %v648 = vmax.f32 %v588, 0.0
        %v649 = vmax.f32 %v593, 0.0
        %v650 = vmax.f32 %v596, 0.0
        %v651 = vmax.f32 %v601, 0.0
        %v652 = vmax.f32 %v604, 0.0
        %v653 = vmax.f32 %v609, 0.0
        %v654 = vmax.f32 %v612, 0.0
        %v655 = vmax.f32 %v617, 0.0
        %v656 = vmax.f32 %v620, 0.0
        %v657 = vmax.f32 %v625, 0.0
        %v658 = vmax.f32 %v628, 0.0
        %v659 = vmax.f32 %v633, 0.0
        %v660 = vmax.f32 %v636, 0.0
        %v661 = vmax.f32 %v641, 0.0
        %v662 = vmax.f32 %v644, 0.0
        %v663 = vpack.c.bf16 %v648, %v647
        %v664 = vpack.c.bf16 %v650, %v649
        %v665 = vpack.c.bf16 %v652, %v651
        %v666 = vpack.c.bf16 %v654, %v653
        %v667 = vpack.c.bf16 %v656, %v655
        %v668 = vpack.c.bf16 %v658, %v657
        %v669 = vpack.c.bf16 %v660, %v659
        %v670 = vpack.c.bf16 %v662, %v661
        %s671 = scalar_lea.vmem [#allocation5], 128
        %v672 = vld [vmem:[%s671] sm:$0xf]
        %v673 = vld [vmem:[%s671 + $0x4] sm:$0xf]
        %v674 = vld [vmem:[%s671 + $0x8] sm:$0xf]
        %v675 = vld [vmem:[%s671 + $0xc] sm:$0xf]
        %v676 = vld [vmem:[%s671 + $0x10] sm:$0xf]
        %v677 = vld [vmem:[%s671 + $0x14] sm:$0xf]
        %v678 = vld [vmem:[%s671 + $0x18] sm:$0xf]
        %v679 = vld [vmem:[%s671 + $0x1c] sm:$0xf]
        %v680 = vld [vmem:[%s671 + $0x20] sm:$0xf]
        %v681 = vld [vmem:[%s671 + $0x24] sm:$0xf]
        %v682 = vld [vmem:[%s671 + $0x28] sm:$0xf]
        %v683 = vld [vmem:[%s671 + $0x2c] sm:$0xf]
        %v684 = vld [vmem:[%s671 + $0x30] sm:$0xf]
        %v685 = vld [vmem:[%s671 + $0x34] sm:$0xf]
        %v686 = vld [vmem:[%s671 + $0x38] sm:$0xf]
        %v687 = vld [vmem:[%s671 + $0x3c] sm:$0xf]
        %s688 = scalar_lea.vmem [#allocation7], 2
        %v689 = vld [vmem:[%s688] sm:$0x1]
        %v691 = vlaneseq
        %v692 = vshrl.u32 %v691, 7
        %v693 = vsub.s32 0, %v692
        %v694 = vrot.slane %v689, %v693
        %v712 = vunpack.c.l.b16 %v672
        %v713 = vunpack.c.l.b16 %v673
        %v714 = vunpack.c.l.b16 %v674
        %v715 = vunpack.c.l.b16 %v675
        %v716 = vunpack.c.l.b16 %v676
        %v717 = vunpack.c.l.b16 %v677
        %v718 = vunpack.c.l.b16 %v678
        %v719 = vunpack.c.l.b16 %v679
        %v720 = vunpack.c.l.b16 %v680
        %v721 = vunpack.c.l.b16 %v681
        %v722 = vunpack.c.l.b16 %v682
        %v723 = vunpack.c.l.b16 %v683
        %v724 = vunpack.c.l.b16 %v684
        %v725 = vunpack.c.l.b16 %v685
        %v726 = vunpack.c.l.b16 %v686
        %v727 = vunpack.c.l.b16 %v687
        %v728 = vpack.c.b16 %v713, %v712
        %v729 = vpack.c.b16 %v715, %v714
        %v730 = vpack.c.b16 %v717, %v716
        %v731 = vpack.c.b16 %v719, %v718
        %v732 = vpack.c.b16 %v721, %v720
        %v733 = vpack.c.b16 %v723, %v722
        %v734 = vpack.c.b16 %v725, %v724
        %v735 = vpack.c.b16 %v727, %v726
        %744 = vmatprep.subr.bf16.mxu0 0
        %745 = vmatpush1.bf16.msra.mxu0 %v735
        %746 = vmatprep.subr.bf16.mxu0 0
        %747 = vmatpush1.bf16.msra.mxu0 %v734
        %748 = vmatprep.subr.bf16.mxu0 0
        %749 = vmatpush1.bf16.msra.mxu0 %v733
        %750 = vmatprep.subr.bf16.mxu0 0
        %751 = vmatpush1.bf16.msra.mxu0 %v732
        %752 = vmatprep.subr.bf16.mxu0 0
        %753 = vmatpush1.bf16.msra.mxu0 %v731
        %754 = vmatprep.subr.bf16.mxu0 0
        %755 = vmatpush1.bf16.msra.mxu0 %v730
        %756 = vmatprep.subr.bf16.mxu0 0
        %757 = vmatpush1.bf16.msra.mxu0 %v729
        %758 = vmatprep.subr.bf16.mxu0 0
        %759 = vmatpush1.bf16.msra.mxu0 %v728
        %760 = vmatprep.subr.bf16.mxu0 0
        %761 = vmatpush2.bf16.msra.mxu0 0
        %762 = vmatprep.subr.bf16.mxu0 0
        %763 = vmatpush2.bf16.msra.mxu0 0
        %764 = vmatprep.subr.bf16.mxu0 0
        %765 = vmatpush2.bf16.msra.mxu0 0
        %766 = vmatprep.subr.bf16.mxu0 0
        %767 = vmatpush2.bf16.msra.mxu0 0
        %768 = vmatprep.subr.bf16.mxu0 0
        %769 = vmatpush2.bf16.msra.mxu0 0
        %770 = vmatprep.subr.bf16.mxu0 0
        %771 = vmatpush2.bf16.msra.mxu0 0
        %772 = vmatprep.subr.bf16.mxu0 0
        %773 = vmatpush2.bf16.msra.mxu0 0
        %774 = vmatprep.subr.bf16.mxu0 0
        %775 = vmatpush2.bf16.msra.mxu0 0
        %776 = vmatprep.mubr.bf16.mxu0 0
        %777 = vmatmul.mubr.bf16.gmra.mxu0 %v663
        %v778 = vpop.f32.mrf.mxu0
        %v779 = vadd.f32 %v694, %v778
        %v780 = vpop.f32.mrf.mxu0
        %v781 = vpop.f32.mrf.mxu0
        %v782 = vadd.f32 %v694, %v781
        %v783 = vpop.f32.mrf.mxu0
        %784 = vmatprep.mubr.bf16.mxu0 0
        %785 = vmatmul.mubr.bf16.gmra.mxu0 %v664
        %v786 = vpop.f32.mrf.mxu0
        %v787 = vadd.f32 %v694, %v786
        %v788 = vpop.f32.mrf.mxu0
        %v789 = vpop.f32.mrf.mxu0
        %v790 = vadd.f32 %v694, %v789
        %v791 = vpop.f32.mrf.mxu0
        %792 = vmatprep.mubr.bf16.mxu0 0
        %793 = vmatmul.mubr.bf16.gmra.mxu0 %v665
        %v794 = vpop.f32.mrf.mxu0
        %v795 = vadd.f32 %v694, %v794
        %v796 = vpop.f32.mrf.mxu0
        %v797 = vpop.f32.mrf.mxu0
        %v798 = vadd.f32 %v694, %v797
        %v799 = vpop.f32.mrf.mxu0
        %800 = vmatprep.mubr.bf16.mxu0 0
        %801 = vmatmul.mubr.bf16.gmra.mxu0 %v666
        %v802 = vpop.f32.mrf.mxu0
        %v803 = vadd.f32 %v694, %v802
        %v804 = vpop.f32.mrf.mxu0
        %v805 = vpop.f32.mrf.mxu0
        %v806 = vadd.f32 %v694, %v805
        %v807 = vpop.f32.mrf.mxu0
        %808 = vmatprep.mubr.bf16.mxu0 0
        %809 = vmatmul.mubr.bf16.gmra.mxu0 %v667
        %v810 = vpop.f32.mrf.mxu0
        %v811 = vadd.f32 %v694, %v810
        %v812 = vpop.f32.mrf.mxu0
        %v813 = vpop.f32.mrf.mxu0
        %v814 = vadd.f32 %v694, %v813
        %v815 = vpop.f32.mrf.mxu0
        %816 = vmatprep.mubr.bf16.mxu0 0
        %817 = vmatmul.mubr.bf16.gmra.mxu0 %v668
        %v818 = vpop.f32.mrf.mxu0
        %v819 = vadd.f32 %v694, %v818
        %v820 = vpop.f32.mrf.mxu0
        %v821 = vpop.f32.mrf.mxu0
        %v822 = vadd.f32 %v694, %v821
        %v823 = vpop.f32.mrf.mxu0
        %824 = vmatprep.mubr.bf16.mxu0 0
        %825 = vmatmul.mubr.bf16.gmra.mxu0 %v669
        %v826 = vpop.f32.mrf.mxu0
        %v827 = vadd.f32 %v694, %v826
        %v828 = vpop.f32.mrf.mxu0
        %v829 = vpop.f32.mrf.mxu0
        %v830 = vadd.f32 %v694, %v829
        %v831 = vpop.f32.mrf.mxu0
        %832 = vmatprep.mubr.bf16.mxu0 0
        %833 = vmatmul.mubr.bf16.gmra.mxu0 %v670
        %v834 = vpop.f32.mrf.mxu0
        %v835 = vadd.f32 %v694, %v834
        %v836 = vpop.f32.mrf.mxu0
        %v837 = vpop.f32.mrf.mxu0
        %v838 = vadd.f32 %v694, %v837
        %v839 = vpop.f32.mrf.mxu0
        %840 = vdwg.mxu0
        %v841 = vmax.f32 %v779, 0.0
        %v842 = vmax.f32 %v782, 0.0
        %v843 = vmax.f32 %v787, 0.0
        %v844 = vmax.f32 %v790, 0.0
        %v845 = vmax.f32 %v795, 0.0
        %v846 = vmax.f32 %v798, 0.0
        %v847 = vmax.f32 %v803, 0.0
        %v848 = vmax.f32 %v806, 0.0
        %v849 = vmax.f32 %v811, 0.0
        %v850 = vmax.f32 %v814, 0.0
        %v851 = vmax.f32 %v819, 0.0
        %v852 = vmax.f32 %v822, 0.0
        %v853 = vmax.f32 %v827, 0.0
        %v854 = vmax.f32 %v830, 0.0
        %v855 = vmax.f32 %v835, 0.0
        %v856 = vmax.f32 %v838, 0.0
        %v857 = vpack.c.bf16 %v842, %v841
        %v858 = vpack.c.bf16 %v844, %v843
        %v859 = vpack.c.bf16 %v846, %v845
        %v860 = vpack.c.bf16 %v848, %v847
        %v861 = vpack.c.bf16 %v850, %v849
        %v862 = vpack.c.bf16 %v852, %v851
        %v863 = vpack.c.bf16 %v854, %v853
        %v864 = vpack.c.bf16 %v856, %v855
        %s865 = scalar_lea.vmem [#allocation5], 192
        %v866 = vld [vmem:[%s865] sm:$0xf]
        %v867 = vld [vmem:[%s865 + $0x4] sm:$0xf]
        %v868 = vld [vmem:[%s865 + $0x8] sm:$0xf]
        %v869 = vld [vmem:[%s865 + $0xc] sm:$0xf]
        %v870 = vld [vmem:[%s865 + $0x10] sm:$0xf]
        %v871 = vld [vmem:[%s865 + $0x14] sm:$0xf]
        %v872 = vld [vmem:[%s865 + $0x18] sm:$0xf]
        %v873 = vld [vmem:[%s865 + $0x1c] sm:$0xf]
        %v874 = vld [vmem:[%s865 + $0x20] sm:$0xf]
        %v875 = vld [vmem:[%s865 + $0x24] sm:$0xf]
        %v876 = vld [vmem:[%s865 + $0x28] sm:$0xf]
        %v877 = vld [vmem:[%s865 + $0x2c] sm:$0xf]
        %v878 = vld [vmem:[%s865 + $0x30] sm:$0xf]
        %v879 = vld [vmem:[%s865 + $0x34] sm:$0xf]
        %v880 = vld [vmem:[%s865 + $0x38] sm:$0xf]
        %v881 = vld [vmem:[%s865 + $0x3c] sm:$0xf]
        %s882 = scalar_lea.vmem [#allocation7], 3
        %v883 = vld [vmem:[%s882] sm:$0x1]
        %v885 = vlaneseq
        %v886 = vshrl.u32 %v885, 7
        %v887 = vsub.s32 0, %v886
        %v888 = vrot.slane %v883, %v887
        %v906 = vunpack.c.l.b16 %v866
        %v907 = vunpack.c.l.b16 %v867
        %v908 = vunpack.c.l.b16 %v868
        %v909 = vunpack.c.l.b16 %v869
        %v910 = vunpack.c.l.b16 %v870
        %v911 = vunpack.c.l.b16 %v871
        %v912 = vunpack.c.l.b16 %v872
        %v913 = vunpack.c.l.b16 %v873
        %v914 = vunpack.c.l.b16 %v874
        %v915 = vunpack.c.l.b16 %v875
        %v916 = vunpack.c.l.b16 %v876
        %v917 = vunpack.c.l.b16 %v877
        %v918 = vunpack.c.l.b16 %v878
        %v919 = vunpack.c.l.b16 %v879
        %v920 = vunpack.c.l.b16 %v880
        %v921 = vunpack.c.l.b16 %v881
        %v922 = vpack.c.b16 %v907, %v906
        %v923 = vpack.c.b16 %v909, %v908
        %v924 = vpack.c.b16 %v911, %v910
        %v925 = vpack.c.b16 %v913, %v912
        %v926 = vpack.c.b16 %v915, %v914
        %v927 = vpack.c.b16 %v917, %v916
        %v928 = vpack.c.b16 %v919, %v918
        %v929 = vpack.c.b16 %v921, %v920
        %938 = vmatprep.subr.bf16.mxu0 0
        %939 = vmatpush1.bf16.msra.mxu0 %v929
        %940 = vmatprep.subr.bf16.mxu0 0
        %941 = vmatpush1.bf16.msra.mxu0 %v928
        %942 = vmatprep.subr.bf16.mxu0 0
        %943 = vmatpush1.bf16.msra.mxu0 %v927
        %944 = vmatprep.subr.bf16.mxu0 0
        %945 = vmatpush1.bf16.msra.mxu0 %v926
        %946 = vmatprep.subr.bf16.mxu0 0
        %947 = vmatpush1.bf16.msra.mxu0 %v925
        %948 = vmatprep.subr.bf16.mxu0 0
        %949 = vmatpush1.bf16.msra.mxu0 %v924
        %950 = vmatprep.subr.bf16.mxu0 0
        %951 = vmatpush1.bf16.msra.mxu0 %v923
        %952 = vmatprep.subr.bf16.mxu0 0
        %953 = vmatpush1.bf16.msra.mxu0 %v922
        %954 = vmatprep.subr.bf16.mxu0 0
        %955 = vmatpush2.bf16.msra.mxu0 0
        %956 = vmatprep.subr.bf16.mxu0 0
        %957 = vmatpush2.bf16.msra.mxu0 0
        %958 = vmatprep.subr.bf16.mxu0 0
        %959 = vmatpush2.bf16.msra.mxu0 0
        %960 = vmatprep.subr.bf16.mxu0 0
        %961 = vmatpush2.bf16.msra.mxu0 0
        %962 = vmatprep.subr.bf16.mxu0 0
        %963 = vmatpush2.bf16.msra.mxu0 0
        %964 = vmatprep.subr.bf16.mxu0 0
        %965 = vmatpush2.bf16.msra.mxu0 0
        %966 = vmatprep.subr.bf16.mxu0 0
        %967 = vmatpush2.bf16.msra.mxu0 0
        %968 = vmatprep.subr.bf16.mxu0 0
        %969 = vmatpush2.bf16.msra.mxu0 0
        %970 = vmatprep.mubr.bf16.mxu0 0
        %971 = vmatmul.mubr.bf16.gmra.mxu0 %v857
        %v972 = vpop.f32.mrf.mxu0
        %v973 = vadd.f32 %v888, %v972
        %v974 = vpop.f32.mrf.mxu0
        %v975 = vpop.f32.mrf.mxu0
        %v976 = vadd.f32 %v888, %v975
        %v977 = vpop.f32.mrf.mxu0
        %978 = vmatprep.mubr.bf16.mxu0 0
        %979 = vmatmul.mubr.bf16.gmra.mxu0 %v858
        %v980 = vpop.f32.mrf.mxu0
        %v981 = vadd.f32 %v888, %v980
        %v982 = vpop.f32.mrf.mxu0
        %v983 = vpop.f32.mrf.mxu0
        %v984 = vadd.f32 %v888, %v983
        %v985 = vpop.f32.mrf.mxu0
        %986 = vmatprep.mubr.bf16.mxu0 0
        %987 = vmatmul.mubr.bf16.gmra.mxu0 %v859
        %v988 = vpop.f32.mrf.mxu0
        %v989 = vadd.f32 %v888, %v988
        %v990 = vpop.f32.mrf.mxu0
        %v991 = vpop.f32.mrf.mxu0
        %v992 = vadd.f32 %v888, %v991
        %v993 = vpop.f32.mrf.mxu0
        %994 = vmatprep.mubr.bf16.mxu0 0
        %995 = vmatmul.mubr.bf16.gmra.mxu0 %v860
        %v996 = vpop.f32.mrf.mxu0
        %v997 = vadd.f32 %v888, %v996
        %v998 = vpop.f32.mrf.mxu0
        %v999 = vpop.f32.mrf.mxu0
        %v1000 = vadd.f32 %v888, %v999
        %v1001 = vpop.f32.mrf.mxu0
        %1002 = vmatprep.mubr.bf16.mxu0 0
        %1003 = vmatmul.mubr.bf16.gmra.mxu0 %v861
        %v1004 = vpop.f32.mrf.mxu0
        %v1005 = vadd.f32 %v888, %v1004
        %v1006 = vpop.f32.mrf.mxu0
        %v1007 = vpop.f32.mrf.mxu0
        %v1008 = vadd.f32 %v888, %v1007
        %v1009 = vpop.f32.mrf.mxu0
        %1010 = vmatprep.mubr.bf16.mxu0 0
        %1011 = vmatmul.mubr.bf16.gmra.mxu0 %v862
        %v1012 = vpop.f32.mrf.mxu0
        %v1013 = vadd.f32 %v888, %v1012
        %v1014 = vpop.f32.mrf.mxu0
        %v1015 = vpop.f32.mrf.mxu0
        %v1016 = vadd.f32 %v888, %v1015
        %v1017 = vpop.f32.mrf.mxu0
        %1018 = vmatprep.mubr.bf16.mxu0 0
        %1019 = vmatmul.mubr.bf16.gmra.mxu0 %v863
        %v1020 = vpop.f32.mrf.mxu0
        %v1021 = vadd.f32 %v888, %v1020
        %v1022 = vpop.f32.mrf.mxu0
        %v1023 = vpop.f32.mrf.mxu0
        %v1024 = vadd.f32 %v888, %v1023
        %v1025 = vpop.f32.mrf.mxu0
        %1026 = vmatprep.mubr.bf16.mxu0 0
        %1027 = vmatmul.mubr.bf16.gmra.mxu0 %v864
        %v1028 = vpop.f32.mrf.mxu0
        %v1029 = vadd.f32 %v888, %v1028
        %v1030 = vpop.f32.mrf.mxu0
        %v1031 = vpop.f32.mrf.mxu0
        %v1032 = vadd.f32 %v888, %v1031
        %v1033 = vpop.f32.mrf.mxu0
        %1034 = vdwg.mxu0
        %v1035 = vmax.f32 %v973, 0.0
        %v1036 = vmax.f32 %v976, 0.0
        %v1037 = vmax.f32 %v981, 0.0
        %v1038 = vmax.f32 %v984, 0.0
        %v1039 = vmax.f32 %v989, 0.0
        %v1040 = vmax.f32 %v992, 0.0
        %v1041 = vmax.f32 %v997, 0.0
        %v1042 = vmax.f32 %v1000, 0.0
        %v1043 = vmax.f32 %v1005, 0.0
        %v1044 = vmax.f32 %v1008, 0.0
        %v1045 = vmax.f32 %v1013, 0.0
        %v1046 = vmax.f32 %v1016, 0.0
        %v1047 = vmax.f32 %v1021, 0.0
        %v1048 = vmax.f32 %v1024, 0.0
        %v1049 = vmax.f32 %v1029, 0.0
        %v1050 = vmax.f32 %v1032, 0.0
        %v1051 = vpack.c.bf16 %v1036, %v1035
        %v1052 = vpack.c.bf16 %v1038, %v1037
        %v1053 = vpack.c.bf16 %v1040, %v1039
        %v1054 = vpack.c.bf16 %v1042, %v1041
        %v1055 = vpack.c.bf16 %v1044, %v1043
        %v1056 = vpack.c.bf16 %v1046, %v1045
        %v1057 = vpack.c.bf16 %v1048, %v1047
        %v1058 = vpack.c.bf16 %v1050, %v1049
        %s1059 = scalar_lea.vmem [#allocation5], 256
        %v1060 = vld [vmem:[%s1059] sm:$0xf]
        %v1061 = vld [vmem:[%s1059 + $0x4] sm:$0xf]
        %v1062 = vld [vmem:[%s1059 + $0x8] sm:$0xf]
        %v1063 = vld [vmem:[%s1059 + $0xc] sm:$0xf]
        %v1064 = vld [vmem:[%s1059 + $0x10] sm:$0xf]
        %v1065 = vld [vmem:[%s1059 + $0x14] sm:$0xf]
        %v1066 = vld [vmem:[%s1059 + $0x18] sm:$0xf]
        %v1067 = vld [vmem:[%s1059 + $0x1c] sm:$0xf]
        %v1068 = vld [vmem:[%s1059 + $0x20] sm:$0xf]
        %v1069 = vld [vmem:[%s1059 + $0x24] sm:$0xf]
        %v1070 = vld [vmem:[%s1059 + $0x28] sm:$0xf]
        %v1071 = vld [vmem:[%s1059 + $0x2c] sm:$0xf]
        %v1072 = vld [vmem:[%s1059 + $0x30] sm:$0xf]
        %v1073 = vld [vmem:[%s1059 + $0x34] sm:$0xf]
        %v1074 = vld [vmem:[%s1059 + $0x38] sm:$0xf]
        %v1075 = vld [vmem:[%s1059 + $0x3c] sm:$0xf]
        %s1076 = scalar_lea.vmem [#allocation7], 4
        %v1077 = vld [vmem:[%s1076] sm:$0x1]
        %v1079 = vlaneseq
        %v1080 = vshrl.u32 %v1079, 7
        %v1081 = vsub.s32 0, %v1080
        %v1082 = vrot.slane %v1077, %v1081
        %v1100 = vunpack.c.l.b16 %v1060
        %v1101 = vunpack.c.l.b16 %v1061
        %v1102 = vunpack.c.l.b16 %v1062
        %v1103 = vunpack.c.l.b16 %v1063
        %v1104 = vunpack.c.l.b16 %v1064
        %v1105 = vunpack.c.l.b16 %v1065
        %v1106 = vunpack.c.l.b16 %v1066
        %v1107 = vunpack.c.l.b16 %v1067
        %v1108 = vunpack.c.l.b16 %v1068
        %v1109 = vunpack.c.l.b16 %v1069
        %v1110 = vunpack.c.l.b16 %v1070
        %v1111 = vunpack.c.l.b16 %v1071
        %v1112 = vunpack.c.l.b16 %v1072
        %v1113 = vunpack.c.l.b16 %v1073
        %v1114 = vunpack.c.l.b16 %v1074
        %v1115 = vunpack.c.l.b16 %v1075
        %v1116 = vpack.c.b16 %v1101, %v1100
        %v1117 = vpack.c.b16 %v1103, %v1102
        %v1118 = vpack.c.b16 %v1105, %v1104
        %v1119 = vpack.c.b16 %v1107, %v1106
        %v1120 = vpack.c.b16 %v1109, %v1108
        %v1121 = vpack.c.b16 %v1111, %v1110
        %v1122 = vpack.c.b16 %v1113, %v1112
        %v1123 = vpack.c.b16 %v1115, %v1114
        %1132 = vmatprep.subr.bf16.mxu0 0
        %1133 = vmatpush1.bf16.msra.mxu0 %v1123
        %1134 = vmatprep.subr.bf16.mxu0 0
        %1135 = vmatpush1.bf16.msra.mxu0 %v1122
        %1136 = vmatprep.subr.bf16.mxu0 0
        %1137 = vmatpush1.bf16.msra.mxu0 %v1121
        %1138 = vmatprep.subr.bf16.mxu0 0
        %1139 = vmatpush1.bf16.msra.mxu0 %v1120
        %1140 = vmatprep.subr.bf16.mxu0 0
        %1141 = vmatpush1.bf16.msra.mxu0 %v1119
        %1142 = vmatprep.subr.bf16.mxu0 0
        %1143 = vmatpush1.bf16.msra.mxu0 %v1118
        %1144 = vmatprep.subr.bf16.mxu0 0
        %1145 = vmatpush1.bf16.msra.mxu0 %v1117
        %1146 = vmatprep.subr.bf16.mxu0 0
        %1147 = vmatpush1.bf16.msra.mxu0 %v1116
        %1148 = vmatprep.subr.bf16.mxu0 0
        %1149 = vmatpush2.bf16.msra.mxu0 0
        %1150 = vmatprep.subr.bf16.mxu0 0
        %1151 = vmatpush2.bf16.msra.mxu0 0
        %1152 = vmatprep.subr.bf16.mxu0 0
        %1153 = vmatpush2.bf16.msra.mxu0 0
        %1154 = vmatprep.subr.bf16.mxu0 0
        %1155 = vmatpush2.bf16.msra.mxu0 0
        %1156 = vmatprep.subr.bf16.mxu0 0
        %1157 = vmatpush2.bf16.msra.mxu0 0
        %1158 = vmatprep.subr.bf16.mxu0 0
        %1159 = vmatpush2.bf16.msra.mxu0 0
        %1160 = vmatprep.subr.bf16.mxu0 0
        %1161 = vmatpush2.bf16.msra.mxu0 0
        %1162 = vmatprep.subr.bf16.mxu0 0
        %1163 = vmatpush2.bf16.msra.mxu0 0
        %1164 = vmatprep.mubr.bf16.mxu0 0
        %1165 = vmatmul.mubr.bf16.gmra.mxu0 %v1051
        %v1166 = vpop.f32.mrf.mxu0
        %v1167 = vadd.f32 %v1082, %v1166
        %v1168 = vpop.f32.mrf.mxu0
        %v1169 = vpop.f32.mrf.mxu0
        %v1170 = vadd.f32 %v1082, %v1169
        %v1171 = vpop.f32.mrf.mxu0
        %1172 = vmatprep.mubr.bf16.mxu0 0
        %1173 = vmatmul.mubr.bf16.gmra.mxu0 %v1052
        %v1174 = vpop.f32.mrf.mxu0
        %v1175 = vadd.f32 %v1082, %v1174
        %v1176 = vpop.f32.mrf.mxu0
        %v1177 = vpop.f32.mrf.mxu0
        %v1178 = vadd.f32 %v1082, %v1177
        %v1179 = vpop.f32.mrf.mxu0
        %1180 = vmatprep.mubr.bf16.mxu0 0
        %1181 = vmatmul.mubr.bf16.gmra.mxu0 %v1053
        %v1182 = vpop.f32.mrf.mxu0
        %v1183 = vadd.f32 %v1082, %v1182
        %v1184 = vpop.f32.mrf.mxu0
        %v1185 = vpop.f32.mrf.mxu0
        %v1186 = vadd.f32 %v1082, %v1185
        %v1187 = vpop.f32.mrf.mxu0
        %1188 = vmatprep.mubr.bf16.mxu0 0
        %1189 = vmatmul.mubr.bf16.gmra.mxu0 %v1054
        %v1190 = vpop.f32.mrf.mxu0
        %v1191 = vadd.f32 %v1082, %v1190
        %v1192 = vpop.f32.mrf.mxu0
        %v1193 = vpop.f32.mrf.mxu0
        %v1194 = vadd.f32 %v1082, %v1193
        %v1195 = vpop.f32.mrf.mxu0
        %1196 = vmatprep.mubr.bf16.mxu0 0
        %1197 = vmatmul.mubr.bf16.gmra.mxu0 %v1055
        %v1198 = vpop.f32.mrf.mxu0
        %v1199 = vadd.f32 %v1082, %v1198
        %v1200 = vpop.f32.mrf.mxu0
        %v1201 = vpop.f32.mrf.mxu0
        %v1202 = vadd.f32 %v1082, %v1201
        %v1203 = vpop.f32.mrf.mxu0
        %1204 = vmatprep.mubr.bf16.mxu0 0
        %1205 = vmatmul.mubr.bf16.gmra.mxu0 %v1056
        %v1206 = vpop.f32.mrf.mxu0
        %v1207 = vadd.f32 %v1082, %v1206
        %v1208 = vpop.f32.mrf.mxu0
        %v1209 = vpop.f32.mrf.mxu0
        %v1210 = vadd.f32 %v1082, %v1209
        %v1211 = vpop.f32.mrf.mxu0
        %1212 = vmatprep.mubr.bf16.mxu0 0
        %1213 = vmatmul.mubr.bf16.gmra.mxu0 %v1057
        %v1214 = vpop.f32.mrf.mxu0
        %v1215 = vadd.f32 %v1082, %v1214
        %v1216 = vpop.f32.mrf.mxu0
        %v1217 = vpop.f32.mrf.mxu0
        %v1218 = vadd.f32 %v1082, %v1217
        %v1219 = vpop.f32.mrf.mxu0
        %1220 = vmatprep.mubr.bf16.mxu0 0
        %1221 = vmatmul.mubr.bf16.gmra.mxu0 %v1058
        %v1222 = vpop.f32.mrf.mxu0
        %v1223 = vadd.f32 %v1082, %v1222
        %v1224 = vpop.f32.mrf.mxu0
        %v1225 = vpop.f32.mrf.mxu0
        %v1226 = vadd.f32 %v1082, %v1225
        %v1227 = vpop.f32.mrf.mxu0
        %1228 = vdwg.mxu0
        %v1229 = vmax.f32 %v1167, 0.0
        %v1230 = vmax.f32 %v1170, 0.0
        %v1231 = vmax.f32 %v1175, 0.0
        %v1232 = vmax.f32 %v1178, 0.0
        %v1233 = vmax.f32 %v1183, 0.0
        %v1234 = vmax.f32 %v1186, 0.0
        %v1235 = vmax.f32 %v1191, 0.0
        %v1236 = vmax.f32 %v1194, 0.0
        %v1237 = vmax.f32 %v1199, 0.0
        %v1238 = vmax.f32 %v1202, 0.0
        %v1239 = vmax.f32 %v1207, 0.0
        %v1240 = vmax.f32 %v1210, 0.0
        %v1241 = vmax.f32 %v1215, 0.0
        %v1242 = vmax.f32 %v1218, 0.0
        %v1243 = vmax.f32 %v1223, 0.0
        %v1244 = vmax.f32 %v1226, 0.0
        %v1245 = vpack.c.bf16 %v1230, %v1229
        %v1246 = vpack.c.bf16 %v1232, %v1231
        %v1247 = vpack.c.bf16 %v1234, %v1233
        %v1248 = vpack.c.bf16 %v1236, %v1235
        %v1249 = vpack.c.bf16 %v1238, %v1237
        %v1250 = vpack.c.bf16 %v1240, %v1239
        %v1251 = vpack.c.bf16 %v1242, %v1241
        %v1252 = vpack.c.bf16 %v1244, %v1243
        %s1253 = scalar_lea.vmem [#allocation5], 320
        %v1254 = vld [vmem:[%s1253] sm:$0xf]
        %v1255 = vld [vmem:[%s1253 + $0x4] sm:$0xf]
        %v1256 = vld [vmem:[%s1253 + $0x8] sm:$0xf]
        %v1257 = vld [vmem:[%s1253 + $0xc] sm:$0xf]
        %v1258 = vld [vmem:[%s1253 + $0x10] sm:$0xf]
        %v1259 = vld [vmem:[%s1253 + $0x14] sm:$0xf]
        %v1260 = vld [vmem:[%s1253 + $0x18] sm:$0xf]
        %v1261 = vld [vmem:[%s1253 + $0x1c] sm:$0xf]
        %v1262 = vld [vmem:[%s1253 + $0x20] sm:$0xf]
        %v1263 = vld [vmem:[%s1253 + $0x24] sm:$0xf]
        %v1264 = vld [vmem:[%s1253 + $0x28] sm:$0xf]
        %v1265 = vld [vmem:[%s1253 + $0x2c] sm:$0xf]
        %v1266 = vld [vmem:[%s1253 + $0x30] sm:$0xf]
        %v1267 = vld [vmem:[%s1253 + $0x34] sm:$0xf]
        %v1268 = vld [vmem:[%s1253 + $0x38] sm:$0xf]
        %v1269 = vld [vmem:[%s1253 + $0x3c] sm:$0xf]
        %s1270 = scalar_lea.vmem [#allocation7], 5
        %v1271 = vld [vmem:[%s1270] sm:$0x1]
        %v1273 = vlaneseq
        %v1274 = vshrl.u32 %v1273, 7
        %v1275 = vsub.s32 0, %v1274
        %v1276 = vrot.slane %v1271, %v1275
        %v1294 = vunpack.c.l.b16 %v1254
        %v1295 = vunpack.c.l.b16 %v1255
        %v1296 = vunpack.c.l.b16 %v1256
        %v1297 = vunpack.c.l.b16 %v1257
        %v1298 = vunpack.c.l.b16 %v1258
        %v1299 = vunpack.c.l.b16 %v1259
        %v1300 = vunpack.c.l.b16 %v1260
        %v1301 = vunpack.c.l.b16 %v1261
        %v1302 = vunpack.c.l.b16 %v1262
        %v1303 = vunpack.c.l.b16 %v1263
        %v1304 = vunpack.c.l.b16 %v1264
        %v1305 = vunpack.c.l.b16 %v1265
        %v1306 = vunpack.c.l.b16 %v1266
        %v1307 = vunpack.c.l.b16 %v1267
        %v1308 = vunpack.c.l.b16 %v1268
        %v1309 = vunpack.c.l.b16 %v1269
        %v1310 = vpack.c.b16 %v1295, %v1294
        %v1311 = vpack.c.b16 %v1297, %v1296
        %v1312 = vpack.c.b16 %v1299, %v1298
        %v1313 = vpack.c.b16 %v1301, %v1300
        %v1314 = vpack.c.b16 %v1303, %v1302
        %v1315 = vpack.c.b16 %v1305, %v1304
        %v1316 = vpack.c.b16 %v1307, %v1306
        %v1317 = vpack.c.b16 %v1309, %v1308
        %1326 = vmatprep.subr.bf16.mxu0 0
        %1327 = vmatpush1.bf16.msra.mxu0 %v1317
        %1328 = vmatprep.subr.bf16.mxu0 0
        %1329 = vmatpush1.bf16.msra.mxu0 %v1316
        %1330 = vmatprep.subr.bf16.mxu0 0
        %1331 = vmatpush1.bf16.msra.mxu0 %v1315
        %1332 = vmatprep.subr.bf16.mxu0 0
        %1333 = vmatpush1.bf16.msra.mxu0 %v1314
        %1334 = vmatprep.subr.bf16.mxu0 0
        %1335 = vmatpush1.bf16.msra.mxu0 %v1313
        %1336 = vmatprep.subr.bf16.mxu0 0
        %1337 = vmatpush1.bf16.msra.mxu0 %v1312
        %1338 = vmatprep.subr.bf16.mxu0 0
        %1339 = vmatpush1.bf16.msra.mxu0 %v1311
        %1340 = vmatprep.subr.bf16.mxu0 0
        %1341 = vmatpush1.bf16.msra.mxu0 %v1310
        %1342 = vmatprep.subr.bf16.mxu0 0
        %1343 = vmatpush2.bf16.msra.mxu0 0
        %1344 = vmatprep.subr.bf16.mxu0 0
        %1345 = vmatpush2.bf16.msra.mxu0 0
        %1346 = vmatprep.subr.bf16.mxu0 0
        %1347 = vmatpush2.bf16.msra.mxu0 0
        %1348 = vmatprep.subr.bf16.mxu0 0
        %1349 = vmatpush2.bf16.msra.mxu0 0
        %1350 = vmatprep.subr.bf16.mxu0 0
        %1351 = vmatpush2.bf16.msra.mxu0 0
        %1352 = vmatprep.subr.bf16.mxu0 0
        %1353 = vmatpush2.bf16.msra.mxu0 0
        %1354 = vmatprep.subr.bf16.mxu0 0
        %1355 = vmatpush2.bf16.msra.mxu0 0
        %1356 = vmatprep.subr.bf16.mxu0 0
        %1357 = vmatpush2.bf16.msra.mxu0 0
        %1358 = vmatprep.mubr.bf16.mxu0 0
        %1359 = vmatmul.mubr.bf16.gmra.mxu0 %v1245
        %v1360 = vpop.f32.mrf.mxu0
        %v1361 = vadd.f32 %v1276, %v1360
        %v1362 = vpop.f32.mrf.mxu0
        %v1363 = vpop.f32.mrf.mxu0
        %v1364 = vadd.f32 %v1276, %v1363
        %v1365 = vpop.f32.mrf.mxu0
        %1366 = vmatprep.mubr.bf16.mxu0 0
        %1367 = vmatmul.mubr.bf16.gmra.mxu0 %v1246
        %v1368 = vpop.f32.mrf.mxu0
        %v1369 = vadd.f32 %v1276, %v1368
        %v1370 = vpop.f32.mrf.mxu0
        %v1371 = vpop.f32.mrf.mxu0
        %v1372 = vadd.f32 %v1276, %v1371
        %v1373 = vpop.f32.mrf.mxu0
        %1374 = vmatprep.mubr.bf16.mxu0 0
        %1375 = vmatmul.mubr.bf16.gmra.mxu0 %v1247
        %v1376 = vpop.f32.mrf.mxu0
        %v1377 = vadd.f32 %v1276, %v1376
        %v1378 = vpop.f32.mrf.mxu0
        %v1379 = vpop.f32.mrf.mxu0
        %v1380 = vadd.f32 %v1276, %v1379
        %v1381 = vpop.f32.mrf.mxu0
        %1382 = vmatprep.mubr.bf16.mxu0 0
        %1383 = vmatmul.mubr.bf16.gmra.mxu0 %v1248
        %v1384 = vpop.f32.mrf.mxu0
        %v1385 = vadd.f32 %v1276, %v1384
        %v1386 = vpop.f32.mrf.mxu0
        %v1387 = vpop.f32.mrf.mxu0
        %v1388 = vadd.f32 %v1276, %v1387
        %v1389 = vpop.f32.mrf.mxu0
        %1390 = vmatprep.mubr.bf16.mxu0 0
        %1391 = vmatmul.mubr.bf16.gmra.mxu0 %v1249
        %v1392 = vpop.f32.mrf.mxu0
        %v1393 = vadd.f32 %v1276, %v1392
        %v1394 = vpop.f32.mrf.mxu0
        %v1395 = vpop.f32.mrf.mxu0
        %v1396 = vadd.f32 %v1276, %v1395
        %v1397 = vpop.f32.mrf.mxu0
        %1398 = vmatprep.mubr.bf16.mxu0 0
        %1399 = vmatmul.mubr.bf16.gmra.mxu0 %v1250
        %v1400 = vpop.f32.mrf.mxu0
        %v1401 = vadd.f32 %v1276, %v1400
        %v1402 = vpop.f32.mrf.mxu0
        %v1403 = vpop.f32.mrf.mxu0
        %v1404 = vadd.f32 %v1276, %v1403
        %v1405 = vpop.f32.mrf.mxu0
        %1406 = vmatprep.mubr.bf16.mxu0 0
        %1407 = vmatmul.mubr.bf16.gmra.mxu0 %v1251
        %v1408 = vpop.f32.mrf.mxu0
        %v1409 = vadd.f32 %v1276, %v1408
        %v1410 = vpop.f32.mrf.mxu0
        %v1411 = vpop.f32.mrf.mxu0
        %v1412 = vadd.f32 %v1276, %v1411
        %v1413 = vpop.f32.mrf.mxu0
        %1414 = vmatprep.mubr.bf16.mxu0 0
        %1415 = vmatmul.mubr.bf16.gmra.mxu0 %v1252
        %v1416 = vpop.f32.mrf.mxu0
        %v1417 = vadd.f32 %v1276, %v1416
        %v1418 = vpop.f32.mrf.mxu0
        %v1419 = vpop.f32.mrf.mxu0
        %v1420 = vadd.f32 %v1276, %v1419
        %v1421 = vpop.f32.mrf.mxu0
        %1422 = vdwg.mxu0
        %v1423 = vpack.c.bf16 %v1364, %v1361
        %v1424 = vpack.c.bf16 %v1372, %v1369
        %v1425 = vpack.c.bf16 %v1380, %v1377
        %v1426 = vpack.c.bf16 %v1388, %v1385
        %v1427 = vpack.c.bf16 %v1396, %v1393
        %v1428 = vpack.c.bf16 %v1404, %v1401
        %v1429 = vpack.c.bf16 %v1412, %v1409
        %v1430 = vpack.c.bf16 %v1420, %v1417
        %s1431 = scalar_lea.vmem [#allocation5], 384
        %v1432 = vld [vmem:[%s1431] sm:$0xf]
        %v1433 = vld [vmem:[%s1431 + $0x4] sm:$0xf]
        %v1434 = vld [vmem:[%s1431 + $0x8] sm:$0xf]
        %v1435 = vld [vmem:[%s1431 + $0xc] sm:$0xf]
        %v1436 = vld [vmem:[%s1431 + $0x10] sm:$0xf]
        %v1437 = vld [vmem:[%s1431 + $0x14] sm:$0xf]
        %v1438 = vld [vmem:[%s1431 + $0x18] sm:$0xf]
        %v1439 = vld [vmem:[%s1431 + $0x1c] sm:$0xf]
        %v1440 = vld [vmem:[%s1431 + $0x20] sm:$0xf]
        %v1441 = vld [vmem:[%s1431 + $0x24] sm:$0xf]
        %v1442 = vld [vmem:[%s1431 + $0x28] sm:$0xf]
        %v1443 = vld [vmem:[%s1431 + $0x2c] sm:$0xf]
        %v1444 = vld [vmem:[%s1431 + $0x30] sm:$0xf]
        %v1445 = vld [vmem:[%s1431 + $0x34] sm:$0xf]
        %v1446 = vld [vmem:[%s1431 + $0x38] sm:$0xf]
        %v1447 = vld [vmem:[%s1431 + $0x3c] sm:$0xf]
        %s1448 = scalar_lea.vmem [#allocation7], 6
        %v1449 = vld [vmem:[%s1448] sm:$0x1]
        %v1451 = vlaneseq
        %v1452 = vshrl.u32 %v1451, 7
        %v1453 = vsub.s32 0, %v1452
        %v1454 = vrot.slane %v1449, %v1453
        %v1472 = vunpack.c.l.b16 %v1432
        %v1473 = vunpack.c.l.b16 %v1433
        %v1474 = vunpack.c.l.b16 %v1434
        %v1475 = vunpack.c.l.b16 %v1435
        %v1476 = vunpack.c.l.b16 %v1436
        %v1477 = vunpack.c.l.b16 %v1437
        %v1478 = vunpack.c.l.b16 %v1438
        %v1479 = vunpack.c.l.b16 %v1439
        %v1480 = vunpack.c.l.b16 %v1440
        %v1481 = vunpack.c.l.b16 %v1441
        %v1482 = vunpack.c.l.b16 %v1442
        %v1483 = vunpack.c.l.b16 %v1443
        %v1484 = vunpack.c.l.b16 %v1444
        %v1485 = vunpack.c.l.b16 %v1445
        %v1486 = vunpack.c.l.b16 %v1446
        %v1487 = vunpack.c.l.b16 %v1447
        %v1488 = vpack.c.b16 %v1473, %v1472
        %v1489 = vpack.c.b16 %v1475, %v1474
        %v1490 = vpack.c.b16 %v1477, %v1476
        %v1491 = vpack.c.b16 %v1479, %v1478
        %v1492 = vpack.c.b16 %v1481, %v1480
        %v1493 = vpack.c.b16 %v1483, %v1482
        %v1494 = vpack.c.b16 %v1485, %v1484
        %v1495 = vpack.c.b16 %v1487, %v1486
        %1504 = vmatprep.subr.bf16.mxu0 0
        %1505 = vmatpush1.bf16.msra.mxu0 %v1495
        %1506 = vmatprep.subr.bf16.mxu0 0
        %1507 = vmatpush1.bf16.msra.mxu0 %v1494
        %1508 = vmatprep.subr.bf16.mxu0 0
        %1509 = vmatpush1.bf16.msra.mxu0 %v1493
        %1510 = vmatprep.subr.bf16.mxu0 0
        %1511 = vmatpush1.bf16.msra.mxu0 %v1492
        %1512 = vmatprep.subr.bf16.mxu0 0
        %1513 = vmatpush1.bf16.msra.mxu0 %v1491
        %1514 = vmatprep.subr.bf16.mxu0 0
        %1515 = vmatpush1.bf16.msra.mxu0 %v1490
        %1516 = vmatprep.subr.bf16.mxu0 0
        %1517 = vmatpush1.bf16.msra.mxu0 %v1489
        %1518 = vmatprep.subr.bf16.mxu0 0
        %1519 = vmatpush1.bf16.msra.mxu0 %v1488
        %1520 = vmatprep.subr.bf16.mxu0 0
        %1521 = vmatpush2.bf16.msra.mxu0 0
        %1522 = vmatprep.subr.bf16.mxu0 0
        %1523 = vmatpush2.bf16.msra.mxu0 0
        %1524 = vmatprep.subr.bf16.mxu0 0
        %1525 = vmatpush2.bf16.msra.mxu0 0
        %1526 = vmatprep.subr.bf16.mxu0 0
        %1527 = vmatpush2.bf16.msra.mxu0 0
        %1528 = vmatprep.subr.bf16.mxu0 0
        %1529 = vmatpush2.bf16.msra.mxu0 0
        %1530 = vmatprep.subr.bf16.mxu0 0
        %1531 = vmatpush2.bf16.msra.mxu0 0
        %1532 = vmatprep.subr.bf16.mxu0 0
        %1533 = vmatpush2.bf16.msra.mxu0 0
        %1534 = vmatprep.subr.bf16.mxu0 0
        %1535 = vmatpush2.bf16.msra.mxu0 0
        %1536 = vmatprep.mubr.bf16.mxu0 0
        %1537 = vmatmul.mubr.bf16.gmra.mxu0 %v1423
        %v1538 = vpop.f32.mrf.mxu0
        %v1539 = vadd.f32 %v1454, %v1538
        %v1540 = vpop.f32.mrf.mxu0
        %v1541 = vpop.f32.mrf.mxu0
        %v1542 = vadd.f32 %v1454, %v1541
        %v1543 = vpop.f32.mrf.mxu0
        %1544 = vmatprep.mubr.bf16.mxu0 0
        %1545 = vmatmul.mubr.bf16.gmra.mxu0 %v1424
        %v1546 = vpop.f32.mrf.mxu0
        %v1547 = vadd.f32 %v1454, %v1546
        %v1548 = vpop.f32.mrf.mxu0
        %v1549 = vpop.f32.mrf.mxu0
        %v1550 = vadd.f32 %v1454, %v1549
        %v1551 = vpop.f32.mrf.mxu0
        %1552 = vmatprep.mubr.bf16.mxu0 0
        %1553 = vmatmul.mubr.bf16.gmra.mxu0 %v1425
        %v1554 = vpop.f32.mrf.mxu0
        %v1555 = vadd.f32 %v1454, %v1554
        %v1556 = vpop.f32.mrf.mxu0
        %v1557 = vpop.f32.mrf.mxu0
        %v1558 = vadd.f32 %v1454, %v1557
        %v1559 = vpop.f32.mrf.mxu0
        %1560 = vmatprep.mubr.bf16.mxu0 0
        %1561 = vmatmul.mubr.bf16.gmra.mxu0 %v1426
        %v1562 = vpop.f32.mrf.mxu0
        %v1563 = vadd.f32 %v1454, %v1562
        %v1564 = vpop.f32.mrf.mxu0
        %v1565 = vpop.f32.mrf.mxu0
        %v1566 = vadd.f32 %v1454, %v1565
        %v1567 = vpop.f32.mrf.mxu0
        %1568 = vmatprep.mubr.bf16.mxu0 0
        %1569 = vmatmul.mubr.bf16.gmra.mxu0 %v1427
        %v1570 = vpop.f32.mrf.mxu0
        %v1571 = vadd.f32 %v1454, %v1570
        %v1572 = vpop.f32.mrf.mxu0
        %v1573 = vpop.f32.mrf.mxu0
        %v1574 = vadd.f32 %v1454, %v1573
        %v1575 = vpop.f32.mrf.mxu0
        %1576 = vmatprep.mubr.bf16.mxu0 0
        %1577 = vmatmul.mubr.bf16.gmra.mxu0 %v1428
        %v1578 = vpop.f32.mrf.mxu0
        %v1579 = vadd.f32 %v1454, %v1578
        %v1580 = vpop.f32.mrf.mxu0
        %v1581 = vpop.f32.mrf.mxu0
        %v1582 = vadd.f32 %v1454, %v1581
        %v1583 = vpop.f32.mrf.mxu0
        %1584 = vmatprep.mubr.bf16.mxu0 0
        %1585 = vmatmul.mubr.bf16.gmra.mxu0 %v1429
        %v1586 = vpop.f32.mrf.mxu0
        %v1587 = vadd.f32 %v1454, %v1586
        %v1588 = vpop.f32.mrf.mxu0
        %v1589 = vpop.f32.mrf.mxu0
        %v1590 = vadd.f32 %v1454, %v1589
        %v1591 = vpop.f32.mrf.mxu0
        %1592 = vmatprep.mubr.bf16.mxu0 0
        %1593 = vmatmul.mubr.bf16.gmra.mxu0 %v1430
        %v1594 = vpop.f32.mrf.mxu0
        %v1595 = vadd.f32 %v1454, %v1594
        %v1596 = vpop.f32.mrf.mxu0
        %v1597 = vpop.f32.mrf.mxu0
        %v1598 = vadd.f32 %v1454, %v1597
        %v1599 = vpop.f32.mrf.mxu0
        %1600 = vdwg.mxu0
        %v1601 = vmax.f32 %v1539, 0.0
        %v1602 = vmax.f32 %v1542, 0.0
        %v1603 = vmax.f32 %v1547, 0.0
        %v1604 = vmax.f32 %v1550, 0.0
        %v1605 = vmax.f32 %v1555, 0.0
        %v1606 = vmax.f32 %v1558, 0.0
        %v1607 = vmax.f32 %v1563, 0.0
        %v1608 = vmax.f32 %v1566, 0.0
        %v1609 = vmax.f32 %v1571, 0.0
        %v1610 = vmax.f32 %v1574, 0.0
        %v1611 = vmax.f32 %v1579, 0.0
        %v1612 = vmax.f32 %v1582, 0.0
        %v1613 = vmax.f32 %v1587, 0.0
        %v1614 = vmax.f32 %v1590, 0.0
        %v1615 = vmax.f32 %v1595, 0.0
        %v1616 = vmax.f32 %v1598, 0.0
        %v1617 = vpack.c.bf16 %v1602, %v1601
        %v1618 = vpack.c.bf16 %v1604, %v1603
        %v1619 = vpack.c.bf16 %v1606, %v1605
        %v1620 = vpack.c.bf16 %v1608, %v1607
        %v1621 = vpack.c.bf16 %v1610, %v1609
        %v1622 = vpack.c.bf16 %v1612, %v1611
        %v1623 = vpack.c.bf16 %v1614, %v1613
        %v1624 = vpack.c.bf16 %v1616, %v1615
        %s1625 = scalar_lea.vmem [#allocation5], 448
        %v1626 = vld [vmem:[%s1625] sm:$0xf]
        %v1627 = vld [vmem:[%s1625 + $0x4] sm:$0xf]
        %v1628 = vld [vmem:[%s1625 + $0x8] sm:$0xf]
        %v1629 = vld [vmem:[%s1625 + $0xc] sm:$0xf]
        %v1630 = vld [vmem:[%s1625 + $0x10] sm:$0xf]
        %v1631 = vld [vmem:[%s1625 + $0x14] sm:$0xf]
        %v1632 = vld [vmem:[%s1625 + $0x18] sm:$0xf]
        %v1633 = vld [vmem:[%s1625 + $0x1c] sm:$0xf]
        %v1634 = vld [vmem:[%s1625 + $0x20] sm:$0xf]
        %v1635 = vld [vmem:[%s1625 + $0x24] sm:$0xf]
        %v1636 = vld [vmem:[%s1625 + $0x28] sm:$0xf]
        %v1637 = vld [vmem:[%s1625 + $0x2c] sm:$0xf]
        %v1638 = vld [vmem:[%s1625 + $0x30] sm:$0xf]
        %v1639 = vld [vmem:[%s1625 + $0x34] sm:$0xf]
        %v1640 = vld [vmem:[%s1625 + $0x38] sm:$0xf]
        %v1641 = vld [vmem:[%s1625 + $0x3c] sm:$0xf]
        %s1642 = scalar_lea.vmem [#allocation7], 7
        %v1643 = vld [vmem:[%s1642] sm:$0x1]
        %v1645 = vlaneseq
        %v1646 = vshrl.u32 %v1645, 7
        %v1647 = vsub.s32 0, %v1646
        %v1648 = vrot.slane %v1643, %v1647
        %v1666 = vunpack.c.l.b16 %v1626
        %v1667 = vunpack.c.l.b16 %v1627
        %v1668 = vunpack.c.l.b16 %v1628
        %v1669 = vunpack.c.l.b16 %v1629
        %v1670 = vunpack.c.l.b16 %v1630
        %v1671 = vunpack.c.l.b16 %v1631
        %v1672 = vunpack.c.l.b16 %v1632
        %v1673 = vunpack.c.l.b16 %v1633
        %v1674 = vunpack.c.l.b16 %v1634
        %v1675 = vunpack.c.l.b16 %v1635
        %v1676 = vunpack.c.l.b16 %v1636
        %v1677 = vunpack.c.l.b16 %v1637
        %v1678 = vunpack.c.l.b16 %v1638
        %v1679 = vunpack.c.l.b16 %v1639
        %v1680 = vunpack.c.l.b16 %v1640
        %v1681 = vunpack.c.l.b16 %v1641
        %v1682 = vpack.c.b16 %v1667, %v1666
        %v1683 = vpack.c.b16 %v1669, %v1668
        %v1684 = vpack.c.b16 %v1671, %v1670
        %v1685 = vpack.c.b16 %v1673, %v1672
        %v1686 = vpack.c.b16 %v1675, %v1674
        %v1687 = vpack.c.b16 %v1677, %v1676
        %v1688 = vpack.c.b16 %v1679, %v1678
        %v1689 = vpack.c.b16 %v1681, %v1680
        %1698 = vmatprep.subr.bf16.mxu0 0
        %1699 = vmatpush1.bf16.msra.mxu0 %v1689
        %1700 = vmatprep.subr.bf16.mxu0 0
        %1701 = vmatpush1.bf16.msra.mxu0 %v1688
        %1702 = vmatprep.subr.bf16.mxu0 0
        %1703 = vmatpush1.bf16.msra.mxu0 %v1687
        %1704 = vmatprep.subr.bf16.mxu0 0
        %1705 = vmatpush1.bf16.msra.mxu0 %v1686
        %1706 = vmatprep.subr.bf16.mxu0 0
        %1707 = vmatpush1.bf16.msra.mxu0 %v1685
        %1708 = vmatprep.subr.bf16.mxu0 0
        %1709 = vmatpush1.bf16.msra.mxu0 %v1684
        %1710 = vmatprep.subr.bf16.mxu0 0
        %1711 = vmatpush1.bf16.msra.mxu0 %v1683
        %1712 = vmatprep.subr.bf16.mxu0 0
        %1713 = vmatpush1.bf16.msra.mxu0 %v1682
        %1714 = vmatprep.subr.bf16.mxu0 0
        %1715 = vmatpush2.bf16.msra.mxu0 0
        %1716 = vmatprep.subr.bf16.mxu0 0
        %1717 = vmatpush2.bf16.msra.mxu0 0
        %1718 = vmatprep.subr.bf16.mxu0 0
        %1719 = vmatpush2.bf16.msra.mxu0 0
        %1720 = vmatprep.subr.bf16.mxu0 0
        %1721 = vmatpush2.bf16.msra.mxu0 0
        %1722 = vmatprep.subr.bf16.mxu0 0
        %1723 = vmatpush2.bf16.msra.mxu0 0
        %1724 = vmatprep.subr.bf16.mxu0 0
        %1725 = vmatpush2.bf16.msra.mxu0 0
        %1726 = vmatprep.subr.bf16.mxu0 0
        %1727 = vmatpush2.bf16.msra.mxu0 0
        %1728 = vmatprep.subr.bf16.mxu0 0
        %1729 = vmatpush2.bf16.msra.mxu0 0
        %1730 = vmatprep.mubr.bf16.mxu0 0
        %1731 = vmatmul.mubr.bf16.gmra.mxu0 %v1617
        %v1732 = vpop.f32.mrf.mxu0
        %v1733 = vadd.f32 %v1648, %v1732
        %v1734 = vpop.f32.mrf.mxu0
        %v1735 = vpop.f32.mrf.mxu0
        %v1736 = vadd.f32 %v1648, %v1735
        %v1737 = vpop.f32.mrf.mxu0
        %1738 = vmatprep.mubr.bf16.mxu0 0
        %1739 = vmatmul.mubr.bf16.gmra.mxu0 %v1618
        %v1740 = vpop.f32.mrf.mxu0
        %v1741 = vadd.f32 %v1648, %v1740
        %v1742 = vpop.f32.mrf.mxu0
        %v1743 = vpop.f32.mrf.mxu0
        %v1744 = vadd.f32 %v1648, %v1743
        %v1745 = vpop.f32.mrf.mxu0
        %1746 = vmatprep.mubr.bf16.mxu0 0
        %1747 = vmatmul.mubr.bf16.gmra.mxu0 %v1619
        %v1748 = vpop.f32.mrf.mxu0
        %v1749 = vadd.f32 %v1648, %v1748
        %v1750 = vpop.f32.mrf.mxu0
        %v1751 = vpop.f32.mrf.mxu0
        %v1752 = vadd.f32 %v1648, %v1751
        %v1753 = vpop.f32.mrf.mxu0
        %1754 = vmatprep.mubr.bf16.mxu0 0
        %1755 = vmatmul.mubr.bf16.gmra.mxu0 %v1620
        %v1756 = vpop.f32.mrf.mxu0
        %v1757 = vadd.f32 %v1648, %v1756
        %v1758 = vpop.f32.mrf.mxu0
        %v1759 = vpop.f32.mrf.mxu0
        %v1760 = vadd.f32 %v1648, %v1759
        %v1761 = vpop.f32.mrf.mxu0
        %1762 = vmatprep.mubr.bf16.mxu0 0
        %1763 = vmatmul.mubr.bf16.gmra.mxu0 %v1621
        %v1764 = vpop.f32.mrf.mxu0
        %v1765 = vadd.f32 %v1648, %v1764
        %v1766 = vpop.f32.mrf.mxu0
        %v1767 = vpop.f32.mrf.mxu0
        %v1768 = vadd.f32 %v1648, %v1767
        %v1769 = vpop.f32.mrf.mxu0
        %1770 = vmatprep.mubr.bf16.mxu0 0
        %1771 = vmatmul.mubr.bf16.gmra.mxu0 %v1622
        %v1772 = vpop.f32.mrf.mxu0
        %v1773 = vadd.f32 %v1648, %v1772
        %v1774 = vpop.f32.mrf.mxu0
        %v1775 = vpop.f32.mrf.mxu0
        %v1776 = vadd.f32 %v1648, %v1775
        %v1777 = vpop.f32.mrf.mxu0
        %1778 = vmatprep.mubr.bf16.mxu0 0
        %1779 = vmatmul.mubr.bf16.gmra.mxu0 %v1623
        %v1780 = vpop.f32.mrf.mxu0
        %v1781 = vadd.f32 %v1648, %v1780
        %v1782 = vpop.f32.mrf.mxu0
        %v1783 = vpop.f32.mrf.mxu0
        %v1784 = vadd.f32 %v1648, %v1783
        %v1785 = vpop.f32.mrf.mxu0
        %1786 = vmatprep.mubr.bf16.mxu0 0
        %1787 = vmatmul.mubr.bf16.gmra.mxu0 %v1624
        %v1788 = vpop.f32.mrf.mxu0
        %v1789 = vadd.f32 %v1648, %v1788
        %v1790 = vpop.f32.mrf.mxu0
        %v1791 = vpop.f32.mrf.mxu0
        %v1792 = vadd.f32 %v1648, %v1791
        %v1793 = vpop.f32.mrf.mxu0
        %1794 = vdwg.mxu0
        %v1795 = vmax.f32 %v1733, 0.0
        %v1796 = vmax.f32 %v1736, 0.0
        %v1797 = vmax.f32 %v1741, 0.0
        %v1798 = vmax.f32 %v1744, 0.0
        %v1799 = vmax.f32 %v1749, 0.0
        %v1800 = vmax.f32 %v1752, 0.0
        %v1801 = vmax.f32 %v1757, 0.0
        %v1802 = vmax.f32 %v1760, 0.0
        %v1803 = vmax.f32 %v1765, 0.0
        %v1804 = vmax.f32 %v1768, 0.0
        %v1805 = vmax.f32 %v1773, 0.0
        %v1806 = vmax.f32 %v1776, 0.0
        %v1807 = vmax.f32 %v1781, 0.0
        %v1808 = vmax.f32 %v1784, 0.0
        %v1809 = vmax.f32 %v1789, 0.0
        %v1810 = vmax.f32 %v1792, 0.0
        %v1811 = vpack.c.bf16 %v1796, %v1795
        %v1812 = vpack.c.bf16 %v1798, %v1797
        %v1813 = vpack.c.bf16 %v1800, %v1799
        %v1814 = vpack.c.bf16 %v1802, %v1801
        %v1815 = vpack.c.bf16 %v1804, %v1803
        %v1816 = vpack.c.bf16 %v1806, %v1805
        %v1817 = vpack.c.bf16 %v1808, %v1807
        %v1818 = vpack.c.bf16 %v1810, %v1809
        %s1819 = scalar_lea.vmem [#allocation5], 512
        %v1820 = vld [vmem:[%s1819] sm:$0xf]
        %v1821 = vld [vmem:[%s1819 + $0x4] sm:$0xf]
        %v1822 = vld [vmem:[%s1819 + $0x8] sm:$0xf]
        %v1823 = vld [vmem:[%s1819 + $0xc] sm:$0xf]
        %v1824 = vld [vmem:[%s1819 + $0x10] sm:$0xf]
        %v1825 = vld [vmem:[%s1819 + $0x14] sm:$0xf]
        %v1826 = vld [vmem:[%s1819 + $0x18] sm:$0xf]
        %v1827 = vld [vmem:[%s1819 + $0x1c] sm:$0xf]
        %v1828 = vld [vmem:[%s1819 + $0x20] sm:$0xf]
        %v1829 = vld [vmem:[%s1819 + $0x24] sm:$0xf]
        %v1830 = vld [vmem:[%s1819 + $0x28] sm:$0xf]
        %v1831 = vld [vmem:[%s1819 + $0x2c] sm:$0xf]
        %v1832 = vld [vmem:[%s1819 + $0x30] sm:$0xf]
        %v1833 = vld [vmem:[%s1819 + $0x34] sm:$0xf]
        %v1834 = vld [vmem:[%s1819 + $0x38] sm:$0xf]
        %v1835 = vld [vmem:[%s1819 + $0x3c] sm:$0xf]
        %s1836 = scalar_lea.vmem [#allocation7], 8
        %v1837 = vld [vmem:[%s1836] sm:$0x1]
        %v1839 = vlaneseq
        %v1840 = vshrl.u32 %v1839, 7
        %v1841 = vsub.s32 0, %v1840
        %v1842 = vrot.slane %v1837, %v1841
        %v1860 = vunpack.c.l.b16 %v1820
        %v1861 = vunpack.c.l.b16 %v1821
        %v1862 = vunpack.c.l.b16 %v1822
        %v1863 = vunpack.c.l.b16 %v1823
        %v1864 = vunpack.c.l.b16 %v1824
        %v1865 = vunpack.c.l.b16 %v1825
        %v1866 = vunpack.c.l.b16 %v1826
        %v1867 = vunpack.c.l.b16 %v1827
        %v1868 = vunpack.c.l.b16 %v1828
        %v1869 = vunpack.c.l.b16 %v1829
        %v1870 = vunpack.c.l.b16 %v1830
        %v1871 = vunpack.c.l.b16 %v1831
        %v1872 = vunpack.c.l.b16 %v1832
        %v1873 = vunpack.c.l.b16 %v1833
        %v1874 = vunpack.c.l.b16 %v1834
        %v1875 = vunpack.c.l.b16 %v1835
        %v1876 = vpack.c.b16 %v1861, %v1860
        %v1877 = vpack.c.b16 %v1863, %v1862
        %v1878 = vpack.c.b16 %v1865, %v1864
        %v1879 = vpack.c.b16 %v1867, %v1866
        %v1880 = vpack.c.b16 %v1869, %v1868
        %v1881 = vpack.c.b16 %v1871, %v1870
        %v1882 = vpack.c.b16 %v1873, %v1872
        %v1883 = vpack.c.b16 %v1875, %v1874
        %1892 = vmatprep.subr.bf16.mxu0 0
        %1893 = vmatpush1.bf16.msra.mxu0 %v1883
        %1894 = vmatprep.subr.bf16.mxu0 0
        %1895 = vmatpush1.bf16.msra.mxu0 %v1882
        %1896 = vmatprep.subr.bf16.mxu0 0
        %1897 = vmatpush1.bf16.msra.mxu0 %v1881
        %1898 = vmatprep.subr.bf16.mxu0 0
        %1899 = vmatpush1.bf16.msra.mxu0 %v1880
        %1900 = vmatprep.subr.bf16.mxu0 0
        %1901 = vmatpush1.bf16.msra.mxu0 %v1879
        %1902 = vmatprep.subr.bf16.mxu0 0
        %1903 = vmatpush1.bf16.msra.mxu0 %v1878
        %1904 = vmatprep.subr.bf16.mxu0 0
        %1905 = vmatpush1.bf16.msra.mxu0 %v1877
        %1906 = vmatprep.subr.bf16.mxu0 0
        %1907 = vmatpush1.bf16.msra.mxu0 %v1876
        %1908 = vmatprep.subr.bf16.mxu0 0
        %1909 = vmatpush2.bf16.msra.mxu0 0
        %1910 = vmatprep.subr.bf16.mxu0 0
        %1911 = vmatpush2.bf16.msra.mxu0 0
        %1912 = vmatprep.subr.bf16.mxu0 0
        %1913 = vmatpush2.bf16.msra.mxu0 0
        %1914 = vmatprep.subr.bf16.mxu0 0
        %1915 = vmatpush2.bf16.msra.mxu0 0
        %1916 = vmatprep.subr.bf16.mxu0 0
        %1917 = vmatpush2.bf16.msra.mxu0 0
        %1918 = vmatprep.subr.bf16.mxu0 0
        %1919 = vmatpush2.bf16.msra.mxu0 0
        %1920 = vmatprep.subr.bf16.mxu0 0
        %1921 = vmatpush2.bf16.msra.mxu0 0
        %1922 = vmatprep.subr.bf16.mxu0 0
        %1923 = vmatpush2.bf16.msra.mxu0 0
        %1924 = vmatprep.mubr.bf16.mxu0 0
        %1925 = vmatmul.mubr.bf16.gmra.mxu0 %v1811
        %v1926 = vpop.f32.mrf.mxu0
        %v1927 = vadd.f32 %v1842, %v1926
        %v1928 = vpop.f32.mrf.mxu0
        %v1929 = vpop.f32.mrf.mxu0
        %v1930 = vadd.f32 %v1842, %v1929
        %v1931 = vpop.f32.mrf.mxu0
        %1932 = vmatprep.mubr.bf16.mxu0 0
        %1933 = vmatmul.mubr.bf16.gmra.mxu0 %v1812
        %v1934 = vpop.f32.mrf.mxu0
        %v1935 = vadd.f32 %v1842, %v1934
        %v1936 = vpop.f32.mrf.mxu0
        %v1937 = vpop.f32.mrf.mxu0
        %v1938 = vadd.f32 %v1842, %v1937
        %v1939 = vpop.f32.mrf.mxu0
        %1940 = vmatprep.mubr.bf16.mxu0 0
        %1941 = vmatmul.mubr.bf16.gmra.mxu0 %v1813
        %v1942 = vpop.f32.mrf.mxu0
        %v1943 = vadd.f32 %v1842, %v1942
        %v1944 = vpop.f32.mrf.mxu0
        %v1945 = vpop.f32.mrf.mxu0
        %v1946 = vadd.f32 %v1842, %v1945
        %v1947 = vpop.f32.mrf.mxu0
        %1948 = vmatprep.mubr.bf16.mxu0 0
        %1949 = vmatmul.mubr.bf16.gmra.mxu0 %v1814
        %v1950 = vpop.f32.mrf.mxu0
        %v1951 = vadd.f32 %v1842, %v1950
        %v1952 = vpop.f32.mrf.mxu0
        %v1953 = vpop.f32.mrf.mxu0
        %v1954 = vadd.f32 %v1842, %v1953
        %v1955 = vpop.f32.mrf.mxu0
        %1956 = vmatprep.mubr.bf16.mxu0 0
        %1957 = vmatmul.mubr.bf16.gmra.mxu0 %v1815
        %v1958 = vpop.f32.mrf.mxu0
        %v1959 = vadd.f32 %v1842, %v1958
        %v1960 = vpop.f32.mrf.mxu0
        %v1961 = vpop.f32.mrf.mxu0
        %v1962 = vadd.f32 %v1842, %v1961
        %v1963 = vpop.f32.mrf.mxu0
        %1964 = vmatprep.mubr.bf16.mxu0 0
        %1965 = vmatmul.mubr.bf16.gmra.mxu0 %v1816
        %v1966 = vpop.f32.mrf.mxu0
        %v1967 = vadd.f32 %v1842, %v1966
        %v1968 = vpop.f32.mrf.mxu0
        %v1969 = vpop.f32.mrf.mxu0
        %v1970 = vadd.f32 %v1842, %v1969
        %v1971 = vpop.f32.mrf.mxu0
        %1972 = vmatprep.mubr.bf16.mxu0 0
        %1973 = vmatmul.mubr.bf16.gmra.mxu0 %v1817
        %v1974 = vpop.f32.mrf.mxu0
        %v1975 = vadd.f32 %v1842, %v1974
        %v1976 = vpop.f32.mrf.mxu0
        %v1977 = vpop.f32.mrf.mxu0
        %v1978 = vadd.f32 %v1842, %v1977
        %v1979 = vpop.f32.mrf.mxu0
        %1980 = vmatprep.mubr.bf16.mxu0 0
        %1981 = vmatmul.mubr.bf16.gmra.mxu0 %v1818
        %v1982 = vpop.f32.mrf.mxu0
        %v1983 = vadd.f32 %v1842, %v1982
        %v1984 = vpop.f32.mrf.mxu0
        %v1985 = vpop.f32.mrf.mxu0
        %v1986 = vadd.f32 %v1842, %v1985
        %v1987 = vpop.f32.mrf.mxu0
        %1988 = vdwg.mxu0
        %v1989 = vmax.f32 %v1927, 0.0
        %v1990 = vmax.f32 %v1930, 0.0
        %v1991 = vmax.f32 %v1935, 0.0
        %v1992 = vmax.f32 %v1938, 0.0
        %v1993 = vmax.f32 %v1943, 0.0
        %v1994 = vmax.f32 %v1946, 0.0
        %v1995 = vmax.f32 %v1951, 0.0
        %v1996 = vmax.f32 %v1954, 0.0
        %v1997 = vmax.f32 %v1959, 0.0
        %v1998 = vmax.f32 %v1962, 0.0
        %v1999 = vmax.f32 %v1967, 0.0
        %v2000 = vmax.f32 %v1970, 0.0
        %v2001 = vmax.f32 %v1975, 0.0
        %v2002 = vmax.f32 %v1978, 0.0
        %v2003 = vmax.f32 %v1983, 0.0
        %v2004 = vmax.f32 %v1986, 0.0
        %v2005 = vpack.c.bf16 %v1990, %v1989
        %v2006 = vpack.c.bf16 %v1992, %v1991
        %v2007 = vpack.c.bf16 %v1994, %v1993
        %v2008 = vpack.c.bf16 %v1996, %v1995
        %v2009 = vpack.c.bf16 %v1998, %v1997
        %v2010 = vpack.c.bf16 %v2000, %v1999
        %v2011 = vpack.c.bf16 %v2002, %v2001
        %v2012 = vpack.c.bf16 %v2004, %v2003
        %s2013 = scalar_lea.vmem [#allocation5], 576
        %v2014 = vld [vmem:[%s2013] sm:$0xf]
        %v2015 = vld [vmem:[%s2013 + $0x4] sm:$0xf]
        %v2016 = vld [vmem:[%s2013 + $0x8] sm:$0xf]
        %v2017 = vld [vmem:[%s2013 + $0xc] sm:$0xf]
        %v2018 = vld [vmem:[%s2013 + $0x10] sm:$0xf]
        %v2019 = vld [vmem:[%s2013 + $0x14] sm:$0xf]
        %v2020 = vld [vmem:[%s2013 + $0x18] sm:$0xf]
        %v2021 = vld [vmem:[%s2013 + $0x1c] sm:$0xf]
        %v2022 = vld [vmem:[%s2013 + $0x20] sm:$0xf]
        %v2023 = vld [vmem:[%s2013 + $0x24] sm:$0xf]
        %v2024 = vld [vmem:[%s2013 + $0x28] sm:$0xf]
        %v2025 = vld [vmem:[%s2013 + $0x2c] sm:$0xf]
        %v2026 = vld [vmem:[%s2013 + $0x30] sm:$0xf]
        %v2027 = vld [vmem:[%s2013 + $0x34] sm:$0xf]
        %v2028 = vld [vmem:[%s2013 + $0x38] sm:$0xf]
        %v2029 = vld [vmem:[%s2013 + $0x3c] sm:$0xf]
        %s2030 = scalar_lea.vmem [#allocation7], 9
        %v2031 = vld [vmem:[%s2030] sm:$0x1]
        %v2033 = vlaneseq
        %v2034 = vshrl.u32 %v2033, 7
        %v2035 = vsub.s32 0, %v2034
        %v2036 = vrot.slane %v2031, %v2035
        %v2054 = vunpack.c.l.b16 %v2014
        %v2055 = vunpack.c.l.b16 %v2015
        %v2056 = vunpack.c.l.b16 %v2016
        %v2057 = vunpack.c.l.b16 %v2017
        %v2058 = vunpack.c.l.b16 %v2018
        %v2059 = vunpack.c.l.b16 %v2019
        %v2060 = vunpack.c.l.b16 %v2020
        %v2061 = vunpack.c.l.b16 %v2021
        %v2062 = vunpack.c.l.b16 %v2022
        %v2063 = vunpack.c.l.b16 %v2023
        %v2064 = vunpack.c.l.b16 %v2024
        %v2065 = vunpack.c.l.b16 %v2025
        %v2066 = vunpack.c.l.b16 %v2026
        %v2067 = vunpack.c.l.b16 %v2027
        %v2068 = vunpack.c.l.b16 %v2028
        %v2069 = vunpack.c.l.b16 %v2029
        %v2070 = vpack.c.b16 %v2055, %v2054
        %v2071 = vpack.c.b16 %v2057, %v2056
        %v2072 = vpack.c.b16 %v2059, %v2058
        %v2073 = vpack.c.b16 %v2061, %v2060
        %v2074 = vpack.c.b16 %v2063, %v2062
        %v2075 = vpack.c.b16 %v2065, %v2064
        %v2076 = vpack.c.b16 %v2067, %v2066
        %v2077 = vpack.c.b16 %v2069, %v2068
        %2086 = vmatprep.subr.bf16.mxu0 0
        %2087 = vmatpush1.bf16.msra.mxu0 %v2077
        %2088 = vmatprep.subr.bf16.mxu0 0
        %2089 = vmatpush1.bf16.msra.mxu0 %v2076
        %2090 = vmatprep.subr.bf16.mxu0 0
        %2091 = vmatpush1.bf16.msra.mxu0 %v2075
        %2092 = vmatprep.subr.bf16.mxu0 0
        %2093 = vmatpush1.bf16.msra.mxu0 %v2074
        %2094 = vmatprep.subr.bf16.mxu0 0
        %2095 = vmatpush1.bf16.msra.mxu0 %v2073
        %2096 = vmatprep.subr.bf16.mxu0 0
        %2097 = vmatpush1.bf16.msra.mxu0 %v2072
        %2098 = vmatprep.subr.bf16.mxu0 0
        %2099 = vmatpush1.bf16.msra.mxu0 %v2071
        %2100 = vmatprep.subr.bf16.mxu0 0
        %2101 = vmatpush1.bf16.msra.mxu0 %v2070
        %2102 = vmatprep.subr.bf16.mxu0 0
        %2103 = vmatpush2.bf16.msra.mxu0 0
        %2104 = vmatprep.subr.bf16.mxu0 0
        %2105 = vmatpush2.bf16.msra.mxu0 0
        %2106 = vmatprep.subr.bf16.mxu0 0
        %2107 = vmatpush2.bf16.msra.mxu0 0
        %2108 = vmatprep.subr.bf16.mxu0 0
        %2109 = vmatpush2.bf16.msra.mxu0 0
        %2110 = vmatprep.subr.bf16.mxu0 0
        %2111 = vmatpush2.bf16.msra.mxu0 0
        %2112 = vmatprep.subr.bf16.mxu0 0
        %2113 = vmatpush2.bf16.msra.mxu0 0
        %2114 = vmatprep.subr.bf16.mxu0 0
        %2115 = vmatpush2.bf16.msra.mxu0 0
        %2116 = vmatprep.subr.bf16.mxu0 0
        %2117 = vmatpush2.bf16.msra.mxu0 0
        %2118 = vmatprep.mubr.bf16.mxu0 0
        %2119 = vmatmul.mubr.bf16.gmra.mxu0 %v2005
        %v2120 = vpop.f32.mrf.mxu0
        %v2121 = vadd.f32 %v2036, %v2120
        %v2122 = vpop.f32.mrf.mxu0
        %v2123 = vpop.f32.mrf.mxu0
        %v2124 = vadd.f32 %v2036, %v2123
        %v2125 = vpop.f32.mrf.mxu0
        %2126 = vmatprep.mubr.bf16.mxu0 0
        %2127 = vmatmul.mubr.bf16.gmra.mxu0 %v2006
        %v2128 = vpop.f32.mrf.mxu0
        %v2129 = vadd.f32 %v2036, %v2128
        %v2130 = vpop.f32.mrf.mxu0
        %v2131 = vpop.f32.mrf.mxu0
        %v2132 = vadd.f32 %v2036, %v2131
        %v2133 = vpop.f32.mrf.mxu0
        %2134 = vmatprep.mubr.bf16.mxu0 0
        %2135 = vmatmul.mubr.bf16.gmra.mxu0 %v2007
        %v2136 = vpop.f32.mrf.mxu0
        %v2137 = vadd.f32 %v2036, %v2136
        %v2138 = vpop.f32.mrf.mxu0
        %v2139 = vpop.f32.mrf.mxu0
        %v2140 = vadd.f32 %v2036, %v2139
        %v2141 = vpop.f32.mrf.mxu0
        %2142 = vmatprep.mubr.bf16.mxu0 0
        %2143 = vmatmul.mubr.bf16.gmra.mxu0 %v2008
        %v2144 = vpop.f32.mrf.mxu0
        %v2145 = vadd.f32 %v2036, %v2144
        %v2146 = vpop.f32.mrf.mxu0
        %v2147 = vpop.f32.mrf.mxu0
        %v2148 = vadd.f32 %v2036, %v2147
        %v2149 = vpop.f32.mrf.mxu0
        %2150 = vmatprep.mubr.bf16.mxu0 0
        %2151 = vmatmul.mubr.bf16.gmra.mxu0 %v2009
        %v2152 = vpop.f32.mrf.mxu0
        %v2153 = vadd.f32 %v2036, %v2152
        %v2154 = vpop.f32.mrf.mxu0
        %v2155 = vpop.f32.mrf.mxu0
        %v2156 = vadd.f32 %v2036, %v2155
        %v2157 = vpop.f32.mrf.mxu0
        %2158 = vmatprep.mubr.bf16.mxu0 0
        %2159 = vmatmul.mubr.bf16.gmra.mxu0 %v2010
        %v2160 = vpop.f32.mrf.mxu0
        %v2161 = vadd.f32 %v2036, %v2160
        %v2162 = vpop.f32.mrf.mxu0
        %v2163 = vpop.f32.mrf.mxu0
        %v2164 = vadd.f32 %v2036, %v2163
        %v2165 = vpop.f32.mrf.mxu0
        %2166 = vmatprep.mubr.bf16.mxu0 0
        %2167 = vmatmul.mubr.bf16.gmra.mxu0 %v2011
        %v2168 = vpop.f32.mrf.mxu0
        %v2169 = vadd.f32 %v2036, %v2168
        %v2170 = vpop.f32.mrf.mxu0
        %v2171 = vpop.f32.mrf.mxu0
        %v2172 = vadd.f32 %v2036, %v2171
        %v2173 = vpop.f32.mrf.mxu0
        %2174 = vmatprep.mubr.bf16.mxu0 0
        %2175 = vmatmul.mubr.bf16.gmra.mxu0 %v2012
        %v2176 = vpop.f32.mrf.mxu0
        %v2177 = vadd.f32 %v2036, %v2176
        %v2178 = vpop.f32.mrf.mxu0
        %v2179 = vpop.f32.mrf.mxu0
        %v2180 = vadd.f32 %v2036, %v2179
        %v2181 = vpop.f32.mrf.mxu0
        %2182 = vdwg.mxu0
        %v2183 = vmax.f32 %v2121, 0.0
        %v2184 = vmax.f32 %v2124, 0.0
        %v2185 = vmax.f32 %v2129, 0.0
        %v2186 = vmax.f32 %v2132, 0.0
        %v2187 = vmax.f32 %v2137, 0.0
        %v2188 = vmax.f32 %v2140, 0.0
        %v2189 = vmax.f32 %v2145, 0.0
        %v2190 = vmax.f32 %v2148, 0.0
        %v2191 = vmax.f32 %v2153, 0.0
        %v2192 = vmax.f32 %v2156, 0.0
        %v2193 = vmax.f32 %v2161, 0.0
        %v2194 = vmax.f32 %v2164, 0.0
        %v2195 = vmax.f32 %v2169, 0.0
        %v2196 = vmax.f32 %v2172, 0.0
        %v2197 = vmax.f32 %v2177, 0.0
        %v2198 = vmax.f32 %v2180, 0.0
        %v2199 = vpack.c.bf16 %v2184, %v2183
        %v2200 = vpack.c.bf16 %v2186, %v2185
        %v2201 = vpack.c.bf16 %v2188, %v2187
        %v2202 = vpack.c.bf16 %v2190, %v2189
        %v2203 = vpack.c.bf16 %v2192, %v2191
        %v2204 = vpack.c.bf16 %v2194, %v2193
        %v2205 = vpack.c.bf16 %v2196, %v2195
        %v2206 = vpack.c.bf16 %v2198, %v2197
        %s2207 = scalar_lea.vmem [#allocation5], 640
        %v2208 = vld [vmem:[%s2207] sm:$0xf]
        %v2209 = vld [vmem:[%s2207 + $0x4] sm:$0xf]
        %v2210 = vld [vmem:[%s2207 + $0x8] sm:$0xf]
        %v2211 = vld [vmem:[%s2207 + $0xc] sm:$0xf]
        %v2212 = vld [vmem:[%s2207 + $0x10] sm:$0xf]
        %v2213 = vld [vmem:[%s2207 + $0x14] sm:$0xf]
        %v2214 = vld [vmem:[%s2207 + $0x18] sm:$0xf]
        %v2215 = vld [vmem:[%s2207 + $0x1c] sm:$0xf]
        %v2216 = vld [vmem:[%s2207 + $0x20] sm:$0xf]
        %v2217 = vld [vmem:[%s2207 + $0x24] sm:$0xf]
        %v2218 = vld [vmem:[%s2207 + $0x28] sm:$0xf]
        %v2219 = vld [vmem:[%s2207 + $0x2c] sm:$0xf]
        %v2220 = vld [vmem:[%s2207 + $0x30] sm:$0xf]
        %v2221 = vld [vmem:[%s2207 + $0x34] sm:$0xf]
        %v2222 = vld [vmem:[%s2207 + $0x38] sm:$0xf]
        %v2223 = vld [vmem:[%s2207 + $0x3c] sm:$0xf]
        %s2224 = scalar_lea.vmem [#allocation7], 10
        %v2225 = vld [vmem:[%s2224] sm:$0x1]
        %v2227 = vlaneseq
        %v2228 = vshrl.u32 %v2227, 7
        %v2229 = vsub.s32 0, %v2228
        %v2230 = vrot.slane %v2225, %v2229
        %v2248 = vunpack.c.l.b16 %v2208
        %v2249 = vunpack.c.l.b16 %v2209
        %v2250 = vunpack.c.l.b16 %v2210
        %v2251 = vunpack.c.l.b16 %v2211
        %v2252 = vunpack.c.l.b16 %v2212
        %v2253 = vunpack.c.l.b16 %v2213
        %v2254 = vunpack.c.l.b16 %v2214
        %v2255 = vunpack.c.l.b16 %v2215
        %v2256 = vunpack.c.l.b16 %v2216
        %v2257 = vunpack.c.l.b16 %v2217
        %v2258 = vunpack.c.l.b16 %v2218
        %v2259 = vunpack.c.l.b16 %v2219
        %v2260 = vunpack.c.l.b16 %v2220
        %v2261 = vunpack.c.l.b16 %v2221
        %v2262 = vunpack.c.l.b16 %v2222
        %v2263 = vunpack.c.l.b16 %v2223
        %v2264 = vpack.c.b16 %v2249, %v2248
        %v2265 = vpack.c.b16 %v2251, %v2250
        %v2266 = vpack.c.b16 %v2253, %v2252
        %v2267 = vpack.c.b16 %v2255, %v2254
        %v2268 = vpack.c.b16 %v2257, %v2256
        %v2269 = vpack.c.b16 %v2259, %v2258
        %v2270 = vpack.c.b16 %v2261, %v2260
        %v2271 = vpack.c.b16 %v2263, %v2262
        %2280 = vmatprep.subr.bf16.mxu0 0
        %2281 = vmatpush1.bf16.msra.mxu0 %v2271
        %2282 = vmatprep.subr.bf16.mxu0 0
        %2283 = vmatpush1.bf16.msra.mxu0 %v2270
        %2284 = vmatprep.subr.bf16.mxu0 0
        %2285 = vmatpush1.bf16.msra.mxu0 %v2269
        %2286 = vmatprep.subr.bf16.mxu0 0
        %2287 = vmatpush1.bf16.msra.mxu0 %v2268
        %2288 = vmatprep.subr.bf16.mxu0 0
        %2289 = vmatpush1.bf16.msra.mxu0 %v2267
        %2290 = vmatprep.subr.bf16.mxu0 0
        %2291 = vmatpush1.bf16.msra.mxu0 %v2266
        %2292 = vmatprep.subr.bf16.mxu0 0
        %2293 = vmatpush1.bf16.msra.mxu0 %v2265
        %2294 = vmatprep.subr.bf16.mxu0 0
        %2295 = vmatpush1.bf16.msra.mxu0 %v2264
        %2296 = vmatprep.subr.bf16.mxu0 0
        %2297 = vmatpush2.bf16.msra.mxu0 0
        %2298 = vmatprep.subr.bf16.mxu0 0
        %2299 = vmatpush2.bf16.msra.mxu0 0
        %2300 = vmatprep.subr.bf16.mxu0 0
        %2301 = vmatpush2.bf16.msra.mxu0 0
        %2302 = vmatprep.subr.bf16.mxu0 0
        %2303 = vmatpush2.bf16.msra.mxu0 0
        %2304 = vmatprep.subr.bf16.mxu0 0
        %2305 = vmatpush2.bf16.msra.mxu0 0
        %2306 = vmatprep.subr.bf16.mxu0 0
        %2307 = vmatpush2.bf16.msra.mxu0 0
        %2308 = vmatprep.subr.bf16.mxu0 0
        %2309 = vmatpush2.bf16.msra.mxu0 0
        %2310 = vmatprep.subr.bf16.mxu0 0
        %2311 = vmatpush2.bf16.msra.mxu0 0
        %2312 = vmatprep.mubr.bf16.mxu0 0
        %2313 = vmatmul.mubr.bf16.gmra.mxu0 %v2199
        %v2314 = vpop.f32.mrf.mxu0
        %v2315 = vadd.f32 %v2230, %v2314
        %v2316 = vpop.f32.mrf.mxu0
        %v2317 = vpop.f32.mrf.mxu0
        %v2318 = vadd.f32 %v2230, %v2317
        %v2319 = vpop.f32.mrf.mxu0
        %2320 = vmatprep.mubr.bf16.mxu0 0
        %2321 = vmatmul.mubr.bf16.gmra.mxu0 %v2200
        %v2322 = vpop.f32.mrf.mxu0
        %v2323 = vadd.f32 %v2230, %v2322
        %v2324 = vpop.f32.mrf.mxu0
        %v2325 = vpop.f32.mrf.mxu0
        %v2326 = vadd.f32 %v2230, %v2325
        %v2327 = vpop.f32.mrf.mxu0
        %2328 = vmatprep.mubr.bf16.mxu0 0
        %2329 = vmatmul.mubr.bf16.gmra.mxu0 %v2201
        %v2330 = vpop.f32.mrf.mxu0
        %v2331 = vadd.f32 %v2230, %v2330
        %v2332 = vpop.f32.mrf.mxu0
        %v2333 = vpop.f32.mrf.mxu0
        %v2334 = vadd.f32 %v2230, %v2333
        %v2335 = vpop.f32.mrf.mxu0
        %2336 = vmatprep.mubr.bf16.mxu0 0
        %2337 = vmatmul.mubr.bf16.gmra.mxu0 %v2202
        %v2338 = vpop.f32.mrf.mxu0
        %v2339 = vadd.f32 %v2230, %v2338
        %v2340 = vpop.f32.mrf.mxu0
        %v2341 = vpop.f32.mrf.mxu0
        %v2342 = vadd.f32 %v2230, %v2341
        %v2343 = vpop.f32.mrf.mxu0
        %2344 = vmatprep.mubr.bf16.mxu0 0
        %2345 = vmatmul.mubr.bf16.gmra.mxu0 %v2203
        %v2346 = vpop.f32.mrf.mxu0
        %v2347 = vadd.f32 %v2230, %v2346
        %v2348 = vpop.f32.mrf.mxu0
        %v2349 = vpop.f32.mrf.mxu0
        %v2350 = vadd.f32 %v2230, %v2349
        %v2351 = vpop.f32.mrf.mxu0
        %2352 = vmatprep.mubr.bf16.mxu0 0
        %2353 = vmatmul.mubr.bf16.gmra.mxu0 %v2204
        %v2354 = vpop.f32.mrf.mxu0
        %v2355 = vadd.f32 %v2230, %v2354
        %v2356 = vpop.f32.mrf.mxu0
        %v2357 = vpop.f32.mrf.mxu0
        %v2358 = vadd.f32 %v2230, %v2357
        %v2359 = vpop.f32.mrf.mxu0
        %2360 = vmatprep.mubr.bf16.mxu0 0
        %2361 = vmatmul.mubr.bf16.gmra.mxu0 %v2205
        %v2362 = vpop.f32.mrf.mxu0
        %v2363 = vadd.f32 %v2230, %v2362
        %v2364 = vpop.f32.mrf.mxu0
        %v2365 = vpop.f32.mrf.mxu0
        %v2366 = vadd.f32 %v2230, %v2365
        %v2367 = vpop.f32.mrf.mxu0
        %2368 = vmatprep.mubr.bf16.mxu0 0
        %2369 = vmatmul.mubr.bf16.gmra.mxu0 %v2206
        %v2370 = vpop.f32.mrf.mxu0
        %v2371 = vadd.f32 %v2230, %v2370
        %v2372 = vpop.f32.mrf.mxu0
        %v2373 = vpop.f32.mrf.mxu0
        %v2374 = vadd.f32 %v2230, %v2373
        %v2375 = vpop.f32.mrf.mxu0
        %2376 = vdwg.mxu0
        %v2377 = vmax.f32 %v2315, 0.0
        %v2378 = vmax.f32 %v2318, 0.0
        %v2379 = vmax.f32 %v2323, 0.0
        %v2380 = vmax.f32 %v2326, 0.0
        %v2381 = vmax.f32 %v2331, 0.0
        %v2382 = vmax.f32 %v2334, 0.0
        %v2383 = vmax.f32 %v2339, 0.0
        %v2384 = vmax.f32 %v2342, 0.0
        %v2385 = vmax.f32 %v2347, 0.0
        %v2386 = vmax.f32 %v2350, 0.0
        %v2387 = vmax.f32 %v2355, 0.0
        %v2388 = vmax.f32 %v2358, 0.0
        %v2389 = vmax.f32 %v2363, 0.0
        %v2390 = vmax.f32 %v2366, 0.0
        %v2391 = vmax.f32 %v2371, 0.0
        %v2392 = vmax.f32 %v2374, 0.0
        %v2393 = vpack.c.bf16 %v2378, %v2377
        %v2394 = vpack.c.bf16 %v2380, %v2379
        %v2395 = vpack.c.bf16 %v2382, %v2381
        %v2396 = vpack.c.bf16 %v2384, %v2383
        %v2397 = vpack.c.bf16 %v2386, %v2385
        %v2398 = vpack.c.bf16 %v2388, %v2387
        %v2399 = vpack.c.bf16 %v2390, %v2389
        %v2400 = vpack.c.bf16 %v2392, %v2391
        %s2401 = scalar_lea.vmem [#allocation5], 704
        %v2402 = vld [vmem:[%s2401] sm:$0xf]
        %v2403 = vld [vmem:[%s2401 + $0x4] sm:$0xf]
        %v2404 = vld [vmem:[%s2401 + $0x8] sm:$0xf]
        %v2405 = vld [vmem:[%s2401 + $0xc] sm:$0xf]
        %v2406 = vld [vmem:[%s2401 + $0x10] sm:$0xf]
        %v2407 = vld [vmem:[%s2401 + $0x14] sm:$0xf]
        %v2408 = vld [vmem:[%s2401 + $0x18] sm:$0xf]
        %v2409 = vld [vmem:[%s2401 + $0x1c] sm:$0xf]
        %v2410 = vld [vmem:[%s2401 + $0x20] sm:$0xf]
        %v2411 = vld [vmem:[%s2401 + $0x24] sm:$0xf]
        %v2412 = vld [vmem:[%s2401 + $0x28] sm:$0xf]
        %v2413 = vld [vmem:[%s2401 + $0x2c] sm:$0xf]
        %v2414 = vld [vmem:[%s2401 + $0x30] sm:$0xf]
        %v2415 = vld [vmem:[%s2401 + $0x34] sm:$0xf]
        %v2416 = vld [vmem:[%s2401 + $0x38] sm:$0xf]
        %v2417 = vld [vmem:[%s2401 + $0x3c] sm:$0xf]
        %s2418 = scalar_lea.vmem [#allocation7], 11
        %v2419 = vld [vmem:[%s2418] sm:$0x1]
        %v2421 = vlaneseq
        %v2422 = vshrl.u32 %v2421, 7
        %v2423 = vsub.s32 0, %v2422
        %v2424 = vrot.slane %v2419, %v2423
        %v2442 = vunpack.c.l.b16 %v2402
        %v2443 = vunpack.c.l.b16 %v2403
        %v2444 = vunpack.c.l.b16 %v2404
        %v2445 = vunpack.c.l.b16 %v2405
        %v2446 = vunpack.c.l.b16 %v2406
        %v2447 = vunpack.c.l.b16 %v2407
        %v2448 = vunpack.c.l.b16 %v2408
        %v2449 = vunpack.c.l.b16 %v2409
        %v2450 = vunpack.c.l.b16 %v2410
        %v2451 = vunpack.c.l.b16 %v2411
        %v2452 = vunpack.c.l.b16 %v2412
        %v2453 = vunpack.c.l.b16 %v2413
        %v2454 = vunpack.c.l.b16 %v2414
        %v2455 = vunpack.c.l.b16 %v2415
        %v2456 = vunpack.c.l.b16 %v2416
        %v2457 = vunpack.c.l.b16 %v2417
        %v2458 = vpack.c.b16 %v2443, %v2442
        %v2459 = vpack.c.b16 %v2445, %v2444
        %v2460 = vpack.c.b16 %v2447, %v2446
        %v2461 = vpack.c.b16 %v2449, %v2448
        %v2462 = vpack.c.b16 %v2451, %v2450
        %v2463 = vpack.c.b16 %v2453, %v2452
        %v2464 = vpack.c.b16 %v2455, %v2454
        %v2465 = vpack.c.b16 %v2457, %v2456
        %2474 = vmatprep.subr.bf16.mxu0 0
        %2475 = vmatpush1.bf16.msra.mxu0 %v2465
        %2476 = vmatprep.subr.bf16.mxu0 0
        %2477 = vmatpush1.bf16.msra.mxu0 %v2464
        %2478 = vmatprep.subr.bf16.mxu0 0
        %2479 = vmatpush1.bf16.msra.mxu0 %v2463
        %2480 = vmatprep.subr.bf16.mxu0 0
        %2481 = vmatpush1.bf16.msra.mxu0 %v2462
        %2482 = vmatprep.subr.bf16.mxu0 0
        %2483 = vmatpush1.bf16.msra.mxu0 %v2461
        %2484 = vmatprep.subr.bf16.mxu0 0
        %2485 = vmatpush1.bf16.msra.mxu0 %v2460
        %2486 = vmatprep.subr.bf16.mxu0 0
        %2487 = vmatpush1.bf16.msra.mxu0 %v2459
        %2488 = vmatprep.subr.bf16.mxu0 0
        %2489 = vmatpush1.bf16.msra.mxu0 %v2458
        %2490 = vmatprep.subr.bf16.mxu0 0
        %2491 = vmatpush2.bf16.msra.mxu0 0
        %2492 = vmatprep.subr.bf16.mxu0 0
        %2493 = vmatpush2.bf16.msra.mxu0 0
        %2494 = vmatprep.subr.bf16.mxu0 0
        %2495 = vmatpush2.bf16.msra.mxu0 0
        %2496 = vmatprep.subr.bf16.mxu0 0
        %2497 = vmatpush2.bf16.msra.mxu0 0
        %2498 = vmatprep.subr.bf16.mxu0 0
        %2499 = vmatpush2.bf16.msra.mxu0 0
        %2500 = vmatprep.subr.bf16.mxu0 0
        %2501 = vmatpush2.bf16.msra.mxu0 0
        %2502 = vmatprep.subr.bf16.mxu0 0
        %2503 = vmatpush2.bf16.msra.mxu0 0
        %2504 = vmatprep.subr.bf16.mxu0 0
        %2505 = vmatpush2.bf16.msra.mxu0 0
        %2506 = vmatprep.mubr.bf16.mxu0 0
        %2507 = vmatmul.mubr.bf16.gmra.mxu0 %v2393
        %v2508 = vpop.f32.mrf.mxu0
        %v2509 = vadd.f32 %v2424, %v2508
        %v2510 = vpop.f32.mrf.mxu0
        %v2511 = vpop.f32.mrf.mxu0
        %v2512 = vadd.f32 %v2424, %v2511
        %v2513 = vpop.f32.mrf.mxu0
        %2514 = vmatprep.mubr.bf16.mxu0 0
        %2515 = vmatmul.mubr.bf16.gmra.mxu0 %v2394
        %v2516 = vpop.f32.mrf.mxu0
        %v2517 = vadd.f32 %v2424, %v2516
        %v2518 = vpop.f32.mrf.mxu0
        %v2519 = vpop.f32.mrf.mxu0
        %v2520 = vadd.f32 %v2424, %v2519
        %v2521 = vpop.f32.mrf.mxu0
        %2522 = vmatprep.mubr.bf16.mxu0 0
        %2523 = vmatmul.mubr.bf16.gmra.mxu0 %v2395
        %v2524 = vpop.f32.mrf.mxu0
        %v2525 = vadd.f32 %v2424, %v2524
        %v2526 = vpop.f32.mrf.mxu0
        %v2527 = vpop.f32.mrf.mxu0
        %v2528 = vadd.f32 %v2424, %v2527
        %v2529 = vpop.f32.mrf.mxu0
        %2530 = vmatprep.mubr.bf16.mxu0 0
        %2531 = vmatmul.mubr.bf16.gmra.mxu0 %v2396
        %v2532 = vpop.f32.mrf.mxu0
        %v2533 = vadd.f32 %v2424, %v2532
        %v2534 = vpop.f32.mrf.mxu0
        %v2535 = vpop.f32.mrf.mxu0
        %v2536 = vadd.f32 %v2424, %v2535
        %v2537 = vpop.f32.mrf.mxu0
        %2538 = vmatprep.mubr.bf16.mxu0 0
        %2539 = vmatmul.mubr.bf16.gmra.mxu0 %v2397
        %v2540 = vpop.f32.mrf.mxu0
        %v2541 = vadd.f32 %v2424, %v2540
        %v2542 = vpop.f32.mrf.mxu0
        %v2543 = vpop.f32.mrf.mxu0
        %v2544 = vadd.f32 %v2424, %v2543
        %v2545 = vpop.f32.mrf.mxu0
        %2546 = vmatprep.mubr.bf16.mxu0 0
        %2547 = vmatmul.mubr.bf16.gmra.mxu0 %v2398
        %v2548 = vpop.f32.mrf.mxu0
        %v2549 = vadd.f32 %v2424, %v2548
        %v2550 = vpop.f32.mrf.mxu0
        %v2551 = vpop.f32.mrf.mxu0
        %v2552 = vadd.f32 %v2424, %v2551
        %v2553 = vpop.f32.mrf.mxu0
        %2554 = vmatprep.mubr.bf16.mxu0 0
        %2555 = vmatmul.mubr.bf16.gmra.mxu0 %v2399
        %v2556 = vpop.f32.mrf.mxu0
        %v2557 = vadd.f32 %v2424, %v2556
        %v2558 = vpop.f32.mrf.mxu0
        %v2559 = vpop.f32.mrf.mxu0
        %v2560 = vadd.f32 %v2424, %v2559
        %v2561 = vpop.f32.mrf.mxu0
        %2562 = vmatprep.mubr.bf16.mxu0 0
        %2563 = vmatmul.mubr.bf16.gmra.mxu0 %v2400
        %v2564 = vpop.f32.mrf.mxu0
        %v2565 = vadd.f32 %v2424, %v2564
        %v2566 = vpop.f32.mrf.mxu0
        %v2567 = vpop.f32.mrf.mxu0
        %v2568 = vadd.f32 %v2424, %v2567
        %v2569 = vpop.f32.mrf.mxu0
        %2570 = vdwg.mxu0
        %v2571 = vxor.u32 %v2509, 2147483648
        %v2572 = vxor.u32 %v2512, 2147483648
        %v2573 = vxor.u32 %v2517, 2147483648
        %v2574 = vxor.u32 %v2520, 2147483648
        %v2575 = vxor.u32 %v2525, 2147483648
        %v2576 = vxor.u32 %v2528, 2147483648
        %v2577 = vxor.u32 %v2533, 2147483648
        %v2578 = vxor.u32 %v2536, 2147483648
        %v2579 = vxor.u32 %v2541, 2147483648
        %v2580 = vxor.u32 %v2544, 2147483648
        %v2581 = vxor.u32 %v2549, 2147483648
        %v2582 = vxor.u32 %v2552, 2147483648
        %v2583 = vxor.u32 %v2557, 2147483648
        %v2584 = vxor.u32 %v2560, 2147483648
        %v2585 = vxor.u32 %v2565, 2147483648
        %v2586 = vxor.u32 %v2568, 2147483648
        %v2587 = vmul.f32 %v2571, 1.442695
        %v2588 = vpow.pop %v2587
        %v2589 = vmul.f32 %v2572, 1.442695
        %v2590 = vpow.pop %v2589
        %v2591 = vmul.f32 %v2573, 1.442695
        %v2592 = vpow.pop %v2591
        %v2593 = vmul.f32 %v2574, 1.442695
        %v2594 = vpow.pop %v2593
        %v2595 = vmul.f32 %v2575, 1.442695
        %v2596 = vpow.pop %v2595
        %v2597 = vmul.f32 %v2576, 1.442695
        %v2598 = vpow.pop %v2597
        %v2599 = vmul.f32 %v2577, 1.442695
        %v2600 = vpow.pop %v2599
        %v2601 = vmul.f32 %v2578, 1.442695
        %v2602 = vpow.pop %v2601
        %v2603 = vmul.f32 %v2579, 1.442695
        %v2604 = vpow.pop %v2603
        %v2605 = vmul.f32 %v2580, 1.442695
        %v2606 = vpow.pop %v2605
        %v2607 = vmul.f32 %v2581, 1.442695
        %v2608 = vpow.pop %v2607
        %v2609 = vmul.f32 %v2582, 1.442695
        %v2610 = vpow.pop %v2609
        %v2611 = vmul.f32 %v2583, 1.442695
        %v2612 = vpow.pop %v2611
        %v2613 = vmul.f32 %v2584, 1.442695
        %v2614 = vpow.pop %v2613
        %v2615 = vmul.f32 %v2585, 1.442695
        %v2616 = vpow.pop %v2615
        %v2617 = vmul.f32 %v2586, 1.442695
        %v2618 = vpow.pop %v2617
        %v2619 = vadd.f32 %v2588, 1.0
        %v2620 = vadd.f32 %v2590, 1.0
        %v2621 = vadd.f32 %v2592, 1.0
        %v2622 = vadd.f32 %v2594, 1.0
        %v2623 = vadd.f32 %v2596, 1.0
        %v2624 = vadd.f32 %v2598, 1.0
        %v2625 = vadd.f32 %v2600, 1.0
        %v2626 = vadd.f32 %v2602, 1.0
        %v2627 = vadd.f32 %v2604, 1.0
        %v2628 = vadd.f32 %v2606, 1.0
        %v2629 = vadd.f32 %v2608, 1.0
        %v2630 = vadd.f32 %v2610, 1.0
        %v2631 = vadd.f32 %v2612, 1.0
        %v2632 = vadd.f32 %v2614, 1.0
        %v2633 = vadd.f32 %v2616, 1.0
        %v2634 = vadd.f32 %v2618, 1.0
        %v2635 = vrcp.pop %v2619
        %v2636 = vmul.f32 1.0, %v2635
        %v2637 = vrcp.pop %v2620
        %v2638 = vmul.f32 1.0, %v2637
        %v2639 = vrcp.pop %v2621
        %v2640 = vmul.f32 1.0, %v2639
        %v2641 = vrcp.pop %v2622
        %v2642 = vmul.f32 1.0, %v2641
        %v2643 = vrcp.pop %v2623
        %v2644 = vmul.f32 1.0, %v2643
        %v2645 = vrcp.pop %v2624
        %v2646 = vmul.f32 1.0, %v2645
        %v2647 = vrcp.pop %v2625
        %v2648 = vmul.f32 1.0, %v2647
        %v2649 = vrcp.pop %v2626
        %v2650 = vmul.f32 1.0, %v2649
        %v2651 = vrcp.pop %v2627
        %v2652 = vmul.f32 1.0, %v2651
        %v2653 = vrcp.pop %v2628
        %v2654 = vmul.f32 1.0, %v2653
        %v2655 = vrcp.pop %v2629
        %v2656 = vmul.f32 1.0, %v2655
        %v2657 = vrcp.pop %v2630
        %v2658 = vmul.f32 1.0, %v2657
        %v2659 = vrcp.pop %v2631
        %v2660 = vmul.f32 1.0, %v2659
        %v2661 = vrcp.pop %v2632
        %v2662 = vmul.f32 1.0, %v2661
        %v2663 = vrcp.pop %v2633
        %v2664 = vmul.f32 1.0, %v2663
        %v2665 = vrcp.pop %v2634
        %v2666 = vmul.f32 1.0, %v2665
        %2667 = vst [vmem:[%s217] sm:$0xff] %v2636
        %2668 = vst [vmem:[%s217 + $0x8] sm:$0xff] %v2638
        %2669 = vst [vmem:[%s217 + $0x10] sm:$0xff] %v2640
        %2670 = vst [vmem:[%s217 + $0x18] sm:$0xff] %v2642
        %2671 = vst [vmem:[%s217 + $0x20] sm:$0xff] %v2644
        %2672 = vst [vmem:[%s217 + $0x28] sm:$0xff] %v2646
        %2673 = vst [vmem:[%s217 + $0x30] sm:$0xff] %v2648
        %2674 = vst [vmem:[%s217 + $0x38] sm:$0xff] %v2650
        %2675 = vst [vmem:[%s217 + $0x40] sm:$0xff] %v2652
        %2676 = vst [vmem:[%s217 + $0x48] sm:$0xff] %v2654
        %2677 = vst [vmem:[%s217 + $0x50] sm:$0xff] %v2656
        %2678 = vst [vmem:[%s217 + $0x58] sm:$0xff] %v2658
        %2679 = vst [vmem:[%s217 + $0x60] sm:$0xff] %v2660
        %2680 = vst [vmem:[%s217 + $0x68] sm:$0xff] %v2662
        %2681 = vst [vmem:[%s217 + $0x70] sm:$0xff] %v2664
        %2682 = vst [vmem:[%s217 + $0x78] sm:$0xff] %v2666
        %s2683 = sand.u32 %s97, 1
        %s2684 = scalar_lea.sflag [#allocation4], %s2683
        %s2685 = sand.u32 %s97, 1
        %s2686 = smul.addr %s2685, 128
        %s2687 = scalar_lea.vmem [#allocation8], %s2686
        // Predicated region
        $region45: #{tpu_custom_call.1} parent=31 // pred_check
          %p2688 = pneg %p107
        $region46: #{tpu_custom_call.1} parent=31 // pred_check_branch
          %2690 = sbr.rel (%p2688) target = $region48
        $region47: #{tpu_custom_call.1} parent=31 // pred_region
          %s2691 = smul.u32 16, %s21
          %s2693 = ssub.s32 2048, 2048
          %2694 = vsyncadd %s2684, %s2693
          %s2695 = smul.addr %s2691, 128
          %s2696 = scalar_lea.hbm %s3, %s2695
          %s2697 = sshll.u32 %s2687, 4
          %s2698 = int_to_ptr.vmem [resolvable:$true] %s2697
          %2703 = dma.vmem_to_hbm [thread:$0]  %s2698, 2048, %s2696, %s2684, 128, 128, 8
        $region48: #{tpu_custom_call.1} parent=31 // pred_fallthru
          _
      $region32: #{tpu_custom_call.1} parent=5 // pred_fallthru
        _
      %p2704 = scmp.le.s32.totalorder 2, %s16
      // Predicated region
      $region49: #{tpu_custom_call.1} parent=5 // pred_check
        %p2705 = pneg %p2704
      $region50: #{tpu_custom_call.1} parent=5 // pred_check_branch
        %2707 = sbr.rel (%p2705) target = $region52
      $region51: #{tpu_custom_call.1} parent=5 // pred_region
        %s2708 = ssub.s32 %s16, 2
        // Predicated region
        $region53: #{tpu_custom_call.1} parent=51 // pred_check
          %p2709 = pneg %p113
        $region54: #{tpu_custom_call.1} parent=51 // pred_check_branch
          %2711 = sbr.rel (%p2709) target = $region56
        $region55: #{tpu_custom_call.1} parent=51 // pred_region
          %s2712 = sand.u32 %s98, 1
          %s2713 = scalar_lea.sflag [#allocation4], %s2712
          %s2714 = sand.u32 %s98, 1
          %s2715 = smul.addr %s2714, 128
          %s2716 = scalar_lea.vmem [#allocation8], %s2715
          %2717 = dma.done %s2713, 2048
        $region56: #{tpu_custom_call.1} parent=51 // pred_fallthru
          _
      $region52: #{tpu_custom_call.1} parent=5 // pred_fallthru
        _
    $region6: #{tpu_custom_call.1} parent=1 // loop_footer
      %s20 = sadd.s32 1, %s16
    $region7: #{tpu_custom_call.1} parent=1 // loop_footer_branch
      %15 = sbr.rel target = $region3
    $region8: #{tpu_custom_call.1} parent=1 // loop_exit
      _
    %2718 = vsyncpa [#allocation3], 1
    %s2719 = scalar_lea.sflag [#allocation3], 1
    %2720 = vsyncpa %s2719, 1
    %2721 = vsyncpa [#allocation6], 1
    %2722 = vsyncpa [#allocation4], 1
    %s2723 = scalar_lea.sflag [#allocation4], 1
    %2724 = vsyncpa %s2723, 1

</llo_original>
